<compile_context>
chip_gen: v6e
topology: v6e:2x2x1
jax: 0.10.0
libtpu: 0.0.40
codegen_flags: <defaults>
</compile_context>

<pallas_src>
import functools

import numpy as np
import jax
import jax.numpy as jnp
from jax.experimental import pallas as pl
from jax.experimental.pallas import tpu as pltpu

_SELU_SCALE = 1.0507009873554805
_SELU_ALPHA = 1.6732632423543772
_BN_EPS = 1e-5

# MXU operand dtype (native on v5e/v6e/v7x MXUs); accumulation / activations /
# softmax stay f32 (v5e VPU/EUP have no bf16).
_MM_DTYPE = jnp.bfloat16
_BIAS_PACK_WIDTH = 1024


def _bias_layout(num_class):
    """Static (row, width) slot for every bias in the packed bias operand."""
    spec = [("trunk", 256), ("heads", 768),
            ("clin1", 32), ("clin2", 64), ("clin3", 128),
            ("gat1", 64), ("gat2", 48),
            ("fus0", 192), ("fus1", 192), ("fus2", 192),
            ("fc1", 1024), ("fc2", 128), ("fc3", num_class)]
    return {name: (row, width) for row, (name, width) in enumerate(spec)}


def _act(y, kind):
    """Activations, always f32 (VPU/EUP)."""
    if kind == "none":
        return y
    if kind == "relu":
        return jnp.maximum(y, 0.0)
    if kind == "elu05":                                   # nn.ELU(alpha=0.5)
        return jnp.where(y > 0, y, 0.5 * (jnp.exp(jnp.minimum(y, 0.0)) - 1.0))
    if kind == "silu":                                    # nn.SiLU()
        return y * pl.reciprocal(1.0 + jnp.exp(-y), approx=True)
    if kind == "leaky_relu":                              # nn.LeakyReLU(), slope 0.01
        return jnp.where(y > 0, y, 0.01 * y)
    if kind == "selu":                                    # nn.SELU()
        return _SELU_SCALE * jnp.where(
            y > 0, y, _SELU_ALPHA * (jnp.exp(jnp.minimum(y, 0.0)) - 1.0))
    raise ValueError(f"unknown act {kind}")


def _leaky02(v):                                          # LeakyReLU(0.2) of GATConv
    return jnp.where(v > 0, v, 0.2 * v)


def _gat(nodes, w_aug_ref, bias_row, dout, batch):
    """Single-head GATConv over a fully connected graph (incl. self loops).

    TODO(synk): GATNet definition unavailable; PyG-style GATConv assumed:
      e_ij = LeakyReLU_0.2(<h_i, a_dst> + <h_j, a_src>), softmax over j,
      out_i = sum_j alpha_ij h_j + bias.

    w_aug_ref holds [W | W@a_src | W@a_dst], so node projection and both score
    projections come out of ONE stacked MXU matmul; no cross-lane reductions.
    """
    n = len(nodes)
    x = jnp.concatenate(nodes, axis=0).astype(_MM_DTYPE)            # (N*B, Din), 1 cast
    h_aug = jnp.dot(x, w_aug_ref[...], preferred_element_type=jnp.float32)  # (N*B, D+2)

    h = [h_aug[j * batch:(j + 1) * batch, 0:dout] for j in range(n)]            # (B, D)
    s_src = [h_aug[j * batch:(j + 1) * batch, dout:dout + 1] for j in range(n)]  # (B, 1)
    s_dst = [h_aug[j * batch:(j + 1) * batch, dout + 1:dout + 2] for j in range(n)]

    src_row = jnp.concatenate(s_src, axis=-1)                        # (B, N)
    # LeakyReLU is monotonic increasing, so max_j e_ij = lrelu(s_dst_i + max_j s_src_j).
    s_max = s_src[0]
    for v in s_src[1:]:
        s_max = jnp.maximum(s_max, v)

    outs = []
    for i in range(n):
        m_i = _leaky02(s_dst[i] + s_max)                             # (B, 1)
        p_i = jnp.exp(_leaky02(s_dst[i] + src_row) - m_i)            # (B, N): ONE exp
        num = p_i[:, 0:1] * h[0]
        den = p_i[:, 0:1]
        for j in range(1, n):
            num = num + p_i[:, j:j + 1] * h[j]
            den = den + p_i[:, j:j + 1]
        outs.append(num * pl.reciprocal(den, approx=True) + bias_row)  # (B, Dout)
    return outs                      # per-node outputs, row-major flatten order


# -----------------------------------------------------------------------------
# Single fused kernel: encoders -> DeepSurv -> 2x GAT -> Fusion -> fc + softmax
# -----------------------------------------------------------------------------
def _fused_forward_kernel(
        xcat_ref, text_ref,
        trunk_w_ref, heads_w_ref,
        clin_w1_ref, clin_w2_ref, clin_w3_ref,
        gat1_w_ref, gat2_w_ref,
        fus_w0_ref, fus_w1_ref, fus_w2_ref,
        fc_w1_ref, fc_w2_ref, fc_w3_ref,
        bias_ref, o_ref, *, bias_slots, batch):

    def bias(name):
        row, width = bias_slots[name]
        return bias_ref[row:row + 1, 0:width]           # (1, width), broadcasts over B

    def mm(x, w_ref):                                   # bf16 MXU matmul, f32 accumulate
        return jnp.dot(x.astype(_MM_DTYPE), w_ref[...],
                       preferred_element_type=jnp.float32)

    def linear(x, w_ref, bname, act="none"):
        return _act(mm(x, w_ref) + bias(bname), act)

    # -------- both encoders fused via block-diagonal weights (2 MXU pushes) ----
    # TODO(synk): Encoder_Small definition unavailable; synthetic trunk + 3 heads.
    h = _act(mm(xcat_ref[...], trunk_w_ref) + bias("trunk"), "relu")    # (B, 256)
    heads = mm(h, heads_w_ref) + bias("heads")                          # (B, 768)
    t0, t0_g, t0_l = heads[:, 0:128], heads[:, 128:256], heads[:, 256:384]
    t1, t1_g, t1_l = heads[:, 384:512], heads[:, 512:640], heads[:, 640:768]

    # -------- DeepSurv(6): BN folded into weights; dropout = identity ----------
    e = linear(text_ref[...], clin_w1_ref, "clin1", "elu05")
    e = linear(e, clin_w2_ref, "clin2", "silu")
    text_embed = linear(e, clin_w3_ref, "clin3", "leaky_relu")          # (B, 128)

    # -------- GATs (node order matches create_fully_connected_graph1/2) --------
    g1 = _gat([t0, t1, text_embed], gat1_w_ref, bias("gat1"), 64, batch)    # 3x(B,64)
    g2 = _gat([t0_l, t0_g, t1_l, t1_g], gat2_w_ref, bias("gat2"), 48, batch)  # 4x(B,48)

    flat1 = jnp.concatenate(g1, axis=-1)                                # (B, 192)
    flat2 = jnp.concatenate(g2, axis=-1)                                # (B, 192)

    # -------- Fusion (TODO(synk): definition unavailable): sum + 3x(Linear+ReLU)
    h = linear(flat1 + flat2, fus_w0_ref, "fus0", "relu")
    h = linear(h, fus_w1_ref, "fus1", "relu")
    h = linear(h, fus_w2_ref, "fus2", "relu")

    # -------- fc: 192->1024 SELU -> 1024->128 SELU -> 128->num_class -> softmax
    h = linear(h, fc_w1_ref, "fc1", "selu")
    h = linear(h, fc_w2_ref, "fc2", "selu")
    logits = mm(h, fc_w3_ref) + bias("fc3")

    m = jnp.max(logits, axis=-1, keepdims=True)
    ex = jnp.exp(logits - m)
    # Exact divide on purpose: final op, keeps the output exactly normalized.
    o_ref[...] = ex / jnp.sum(ex, axis=-1, keepdims=True)


def build_model_forward(params, input1, input2, text):
    B = input1.shape[0]
    x1 = input1.reshape(B, -1).astype(jnp.float32)      # NCHW -> (B, C*H*W), == torch .view
    x2 = input2.reshape(B, -1).astype(jnp.float32)
    xcat = jnp.concatenate([x1, x2], axis=-1)           # both 128-multiples wide
    text = text.astype(jnp.float32)

    num_class = params["fc_w3"].shape[1]
    kernel = functools.partial(_fused_forward_kernel,
                               bias_slots=_bias_layout(num_class), batch=B)
    vmem = pl.BlockSpec(memory_space=pltpu.MemorySpace.VMEM)
    operands = (xcat, text,
                params["trunk_w"], params["heads_w"],
                params["clin_w1"], params["clin_w2"], params["clin_w3"],
                params["gat1_w"], params["gat2_w"],
                params["fus_w0"], params["fus_w1"], params["fus_w2"],
                params["fc_w1"], params["fc_w2"], params["fc_w3"],
                params["bias_pack"])
    return pl.pallas_call(
        kernel,
        out_shape=jax.ShapeDtypeStruct((B, num_class), jnp.float32),
        in_specs=[vmem] * len(operands),
        out_specs=vmem,
    )(*operands)


# -----------------------------------------------------------------------------
# Deterministic parameter init (synthetic; shapes follow the module __init__)
# -----------------------------------------------------------------------------
def init_params(key, img_feat_dim, clin_dim=6, num_class=2):
    keys = iter(jax.random.split(key, 64))

    def lin(din, dout):
        kw, kb = jax.random.split(next(keys))
        bound = float(np.sqrt(6.0 / din))               # kaiming-style uniform (synthetic)
        w = jax.random.uniform(kw, (din, dout), jnp.float32, -bound, bound)
        b = jax.random.uniform(kb, (dout,), jnp.float32, -0.1, 0.1)
        return w, b

    def bn_fold(w, b):
        # eval-mode BatchNorm1d with fresh running stats folded into the Linear.
        # TODO(synk): for a real checkpoint: scale = gamma/sqrt(var+eps),
        # shift = beta - mean*scale; w' = w*scale, b' = b*scale + shift.
        scale = 1.0 / float(np.sqrt(1.0 + _BN_EPS))
        return w * scale, b * scale

    def enc():
        # TODO(synk): Encoder_Small definition unavailable; synthetic encoder:
        # Linear+ReLU trunk and three 128-d heads (t, t_global, t_local).
        tw, tb = lin(img_feat_dim, 128)
        hws, hbs = zip(*[lin(128, 128) for _ in range(3)])
        return tw, tb, jnp.concatenate(hws, axis=1), jnp.concatenate(hbs)

    t1w, t1b, h1w, h1b = enc()
    t2w, t2b, h2w, h2b = enc()
    # Block-diagonal fusion of the two encoders (small feature dim only).
    trunk_w = jnp.zeros((2 * img_feat_dim, 256), jnp.float32)
    trunk_w = trunk_w.at[:img_feat_dim, :128].set(t1w).at[img_feat_dim:, 128:].set(t2w)
    trunk_b = jnp.concatenate([t1b, t2b])
    heads_w = jnp.zeros((256, 768), jnp.float32)
    heads_w = heads_w.at[:128, :384].set(h1w).at[128:, 384:].set(h2w)
    heads_b = jnp.concatenate([h1b, h2b])

    def gat(din, dout):
        kw, ka, kd = jax.random.split(next(keys), 3)
        bound = float(np.sqrt(6.0 / din))
        w = jax.random.uniform(kw, (din, dout), jnp.float32, -bound, bound)
        a_src = jax.random.uniform(ka, (dout, 1), jnp.float32, -0.3, 0.3)
        a_dst = jax.random.uniform(kd, (dout, 1), jnp.float32, -0.3, 0.3)
        # Fold score projections into the weight: W_aug = [W | W@a_src | W@a_dst].
        w_aug = jnp.concatenate([w, w @ a_src, w @ a_dst], axis=1)   # (din, dout+2)
        return w_aug, jnp.zeros((dout,), jnp.float32)

    gat1_w, gat1_b = gat(128, 64)
    gat2_w, gat2_b = gat(128, 48)

    c1w, c1b = bn_fold(*lin(clin_dim, 32))
    c2w, c2b = bn_fold(*lin(32, 64))
    c3w, c3b = bn_fold(*lin(64, 128))

    f0w, f0b = lin(192, 192)
    f1w, f1b = lin(192, 192)
    f2w, f2b = lin(192, 192)

    fc1w, fc1b = lin(192, 1024)
    fc2w, fc2b = lin(1024, 128)
    fc3w, fc3b = lin(128, num_class)

    # Pack every bias into one operand (one DMA instead of ~14).
    layout = _bias_layout(num_class)
    pack = np.zeros((len(layout), _BIAS_PACK_WIDTH), np.float32)
    for name, vec in [("trunk", trunk_b), ("heads", heads_b),
                      ("clin1", c1b), ("clin2", c2b), ("clin3", c3b),
                      ("gat1", gat1_b), ("gat2", gat2_b),
                      ("fus0", f0b), ("fus1", f1b), ("fus2", f2b),
                      ("fc1", fc1b), ("fc2", fc2b), ("fc3", fc3b)]:
        row, width = layout[name]
        pack[row, :width] = np.asarray(vec)

    bf = lambda a: a.astype(_MM_DTYPE)
    return {
        "trunk_w": bf(trunk_w), "heads_w": bf(heads_w),
        "clin_w1": bf(c1w), "clin_w2": bf(c2w), "clin_w3": bf(c3w),
        "gat1_w": bf(gat1_w), "gat2_w": bf(gat2_w),
        "fus_w0": bf(f0w), "fus_w1": bf(f1w), "fus_w2": bf(f2w),
        "fc_w1": bf(fc1w), "fc_w2": bf(fc2w), "fc_w3": bf(fc3w),
        "bias_pack": jnp.asarray(pack),
    }


if __name__ == "__main__":
    key = jax.random.PRNGKey(0)
    pkey, k1, k2, k3 = jax.random.split(key, 4)

    B, C, H, W = 2, 1, 16, 16
    input1 = jax.random.normal(k1, (B, C, H, W), jnp.float32)
    input2 = jax.random.normal(k2, (B, C, H, W), jnp.float32)
    text = jax.random.normal(k3, (B, 6), jnp.float32)

    params = init_params(pkey, img_feat_dim=C * H * W, clin_dim=6, num_class=2)

    fwd = jax.jit(build_model_forward)
    out = jax.block_until_ready(fwd(params, input1, input2, text))

    assert out.shape == (B, 2), out.shape
    assert bool(jnp.all(jnp.isfinite(out)))
    assert bool(jnp.allclose(jnp.sum(out, axis=-1), 1.0, atol=1e-5))
    print("KERNEL_OK")
</pallas_src>

<mosaic_0001>
module attributes {stable_mosaic.version = 11 : i64} {
  func.func @_fused_forward_kernel(%arg0: memref<2x512xf32, #tpu.memory_space<vmem>>, %arg1: memref<2x6xf32, #tpu.memory_space<vmem>>, %arg2: memref<512x256xbf16, #tpu.memory_space<vmem>>, %arg3: memref<256x768xbf16, #tpu.memory_space<vmem>>, %arg4: memref<6x32xbf16, #tpu.memory_space<vmem>>, %arg5: memref<32x64xbf16, #tpu.memory_space<vmem>>, %arg6: memref<64x128xbf16, #tpu.memory_space<vmem>>, %arg7: memref<128x66xbf16, #tpu.memory_space<vmem>>, %arg8: memref<128x50xbf16, #tpu.memory_space<vmem>>, %arg9: memref<192x192xbf16, #tpu.memory_space<vmem>>, %arg10: memref<192x192xbf16, #tpu.memory_space<vmem>>, %arg11: memref<192x192xbf16, #tpu.memory_space<vmem>>, %arg12: memref<192x1024xbf16, #tpu.memory_space<vmem>>, %arg13: memref<1024x128xbf16, #tpu.memory_space<vmem>>, %arg14: memref<128x2xbf16, #tpu.memory_space<vmem>>, %arg15: memref<13x1024xf32, #tpu.memory_space<vmem>>, %arg16: memref<2x2xf32, #tpu.memory_space<vmem>>) attributes {dimension_semantics = [], scalar_prefetch = 0 : i64, scratch_operands = 0 : i64, tpu.core_type = #tpu.core_type<tc>} {
    %c0 = arith.constant 0 : index
    %c0_0 = arith.constant 0 : index
    %0 = vector.load %arg0[%c0, %c0_0] : memref<2x512xf32, #tpu.memory_space<vmem>>, vector<2x512xf32>
    %1 = arith.truncf %0 : vector<2x512xf32> to vector<2x512xbf16>
    %c0_1 = arith.constant 0 : index
    %c0_2 = arith.constant 0 : index
    %2 = vector.load %arg2[%c0_1, %c0_2] : memref<512x256xbf16, #tpu.memory_space<vmem>>, vector<512x256xbf16>
    %cst = arith.constant dense<0.000000e+00> : vector<2x256xf32>
    %3 = tpu.matmul %1, %2, %cst {dimension_numbers = #tpu.dot_dimension_numbers<[1], [0], [0], [1], [0, 0, 1, 1], [], []>} : vector<2x512xbf16>, vector<512x256xbf16>, vector<2x256xf32> -> vector<2x256xf32>
    %c0_3 = arith.constant 0 : index
    %c0_4 = arith.constant 0 : index
    %4 = vector.load %arg15[%c0_3, %c0_4] : memref<13x1024xf32, #tpu.memory_space<vmem>>, vector<1x256xf32>
    %5 = vector.broadcast %4 : vector<1x256xf32> to vector<2x256xf32>
    %6 = arith.addf %3, %5 : vector<2x256xf32>
    %cst_5 = arith.constant 0.000000e+00 : f32
    %7 = vector.broadcast %cst_5 : f32 to vector<2x256xf32>
    %8 = arith.maximumf %6, %7 : vector<2x256xf32>
    %9 = arith.truncf %8 : vector<2x256xf32> to vector<2x256xbf16>
    %c0_6 = arith.constant 0 : index
    %c0_7 = arith.constant 0 : index
    %10 = vector.load %arg3[%c0_6, %c0_7] : memref<256x768xbf16, #tpu.memory_space<vmem>>, vector<256x768xbf16>
    %cst_8 = arith.constant dense<0.000000e+00> : vector<2x768xf32>
    %11 = tpu.matmul %9, %10, %cst_8 {dimension_numbers = #tpu.dot_dimension_numbers<[1], [0], [0], [1], [0, 0, 1, 1], [], []>} : vector<2x256xbf16>, vector<256x768xbf16>, vector<2x768xf32> -> vector<2x768xf32>
    %c1 = arith.constant 1 : index
    %c0_9 = arith.constant 0 : index
    %12 = vector.load %arg15[%c1, %c0_9] : memref<13x1024xf32, #tpu.memory_space<vmem>>, vector<1x768xf32>
    %13 = vector.broadcast %12 : vector<1x768xf32> to vector<2x768xf32>
    %14 = arith.addf %11, %13 : vector<2x768xf32>
    %15 = vector.extract_strided_slice %14 {offsets = [0, 0], sizes = [2, 128], strides = [1, 1]} : vector<2x768xf32> to vector<2x128xf32>
    %16 = vector.extract_strided_slice %14 {offsets = [0, 128], sizes = [2, 128], strides = [1, 1]} : vector<2x768xf32> to vector<2x128xf32>
    %17 = vector.extract_strided_slice %14 {offsets = [0, 256], sizes = [2, 128], strides = [1, 1]} : vector<2x768xf32> to vector<2x128xf32>
    %18 = vector.extract_strided_slice %14 {offsets = [0, 384], sizes = [2, 128], strides = [1, 1]} : vector<2x768xf32> to vector<2x128xf32>
    %19 = vector.extract_strided_slice %14 {offsets = [0, 512], sizes = [2, 128], strides = [1, 1]} : vector<2x768xf32> to vector<2x128xf32>
    %20 = vector.extract_strided_slice %14 {offsets = [0, 640], sizes = [2, 128], strides = [1, 1]} : vector<2x768xf32> to vector<2x128xf32>
    %c0_10 = arith.constant 0 : index
    %c0_11 = arith.constant 0 : index
    %21 = vector.load %arg1[%c0_10, %c0_11] : memref<2x6xf32, #tpu.memory_space<vmem>>, vector<2x6xf32>
    %22 = arith.truncf %21 : vector<2x6xf32> to vector<2x6xbf16>
    %c0_12 = arith.constant 0 : index
    %c0_13 = arith.constant 0 : index
    %23 = vector.load %arg4[%c0_12, %c0_13] : memref<6x32xbf16, #tpu.memory_space<vmem>>, vector<6x32xbf16>
    %cst_14 = arith.constant dense<0.000000e+00> : vector<2x32xf32>
    %24 = tpu.matmul %22, %23, %cst_14 {dimension_numbers = #tpu.dot_dimension_numbers<[1], [0], [0], [1], [0, 0, 1, 1], [], []>} : vector<2x6xbf16>, vector<6x32xbf16>, vector<2x32xf32> -> vector<2x32xf32>
    %c2 = arith.constant 2 : index
    %c0_15 = arith.constant 0 : index
    %25 = vector.load %arg15[%c2, %c0_15] : memref<13x1024xf32, #tpu.memory_space<vmem>>, vector<1x32xf32>
    %26 = vector.broadcast %25 : vector<1x32xf32> to vector<2x32xf32>
    %27 = arith.addf %24, %26 : vector<2x32xf32>
    %cst_16 = arith.constant 0.000000e+00 : f32
    %28 = vector.broadcast %cst_16 : f32 to vector<2x32xf32>
    %29 = arith.cmpf ogt, %27, %28 : vector<2x32xf32>
    %cst_17 = arith.constant 0.000000e+00 : f32
    %30 = vector.broadcast %cst_17 : f32 to vector<2x32xf32>
    %31 = arith.minimumf %27, %30 : vector<2x32xf32>
    %32 = math.exp %31 : vector<2x32xf32>
    %cst_18 = arith.constant 1.000000e+00 : f32
    %33 = vector.broadcast %cst_18 : f32 to vector<2x32xf32>
    %34 = arith.subf %32, %33 : vector<2x32xf32>
    %cst_19 = arith.constant 5.000000e-01 : f32
    %35 = vector.broadcast %cst_19 : f32 to vector<2x32xf32>
    %36 = arith.mulf %35, %34 : vector<2x32xf32>
    %37 = arith.select %29, %27, %36 : vector<2x32xi1>, vector<2x32xf32>
    %38 = arith.truncf %37 : vector<2x32xf32> to vector<2x32xbf16>
    %c0_20 = arith.constant 0 : index
    %c0_21 = arith.constant 0 : index
    %39 = vector.load %arg5[%c0_20, %c0_21] : memref<32x64xbf16, #tpu.memory_space<vmem>>, vector<32x64xbf16>
    %cst_22 = arith.constant dense<0.000000e+00> : vector<2x64xf32>
    %40 = tpu.matmul %38, %39, %cst_22 {dimension_numbers = #tpu.dot_dimension_numbers<[1], [0], [0], [1], [0, 0, 1, 1], [], []>} : vector<2x32xbf16>, vector<32x64xbf16>, vector<2x64xf32> -> vector<2x64xf32>
    %c3 = arith.constant 3 : index
    %c0_23 = arith.constant 0 : index
    %41 = vector.load %arg15[%c3, %c0_23] : memref<13x1024xf32, #tpu.memory_space<vmem>>, vector<1x64xf32>
    %42 = vector.broadcast %41 : vector<1x64xf32> to vector<2x64xf32>
    %43 = arith.addf %40, %42 : vector<2x64xf32>
    %cst_24 = arith.constant 0.000000e+00 : f32
    %44 = vector.broadcast %cst_24 : f32 to vector<2x64xf32>
    %45 = arith.subf %44, %43 : vector<2x64xf32>
    %46 = math.exp %45 : vector<2x64xf32>
    %cst_25 = arith.constant 1.000000e+00 : f32
    %47 = vector.broadcast %cst_25 : f32 to vector<2x64xf32>
    %48 = arith.addf %47, %46 : vector<2x64xf32>
    %49 = tpu.reciprocal %48 {approx = true} : vector<2x64xf32> -> vector<2x64xf32>
    %50 = arith.mulf %43, %49 : vector<2x64xf32>
    %51 = arith.truncf %50 : vector<2x64xf32> to vector<2x64xbf16>
    %c0_26 = arith.constant 0 : index
    %c0_27 = arith.constant 0 : index
    %52 = vector.load %arg6[%c0_26, %c0_27] : memref<64x128xbf16, #tpu.memory_space<vmem>>, vector<64x128xbf16>
    %cst_28 = arith.constant dense<0.000000e+00> : vector<2x128xf32>
    %53 = tpu.matmul %51, %52, %cst_28 {dimension_numbers = #tpu.dot_dimension_numbers<[1], [0], [0], [1], [0, 0, 1, 1], [], []>} : vector<2x64xbf16>, vector<64x128xbf16>, vector<2x128xf32> -> vector<2x128xf32>
    %c4 = arith.constant 4 : index
    %c0_29 = arith.constant 0 : index
    %54 = vector.load %arg15[%c4, %c0_29] : memref<13x1024xf32, #tpu.memory_space<vmem>>, vector<1x128xf32>
    %55 = vector.broadcast %54 : vector<1x128xf32> to vector<2x128xf32>
    %56 = arith.addf %53, %55 : vector<2x128xf32>
    %cst_30 = arith.constant 0.000000e+00 : f32
    %57 = vector.broadcast %cst_30 : f32 to vector<2x128xf32>
    %58 = arith.cmpf ogt, %56, %57 : vector<2x128xf32>
    %cst_31 = arith.constant 0.00999999977 : f32
    %59 = vector.broadcast %cst_31 : f32 to vector<2x128xf32>
    %60 = arith.mulf %59, %56 : vector<2x128xf32>
    %61 = arith.select %58, %56, %60 : vector<2x128xi1>, vector<2x128xf32>
    %c5 = arith.constant 5 : index
    %c0_32 = arith.constant 0 : index
    %62 = vector.load %arg15[%c5, %c0_32] : memref<13x1024xf32, #tpu.memory_space<vmem>>, vector<1x64xf32>
    %63 = tpu.concatenate %15, %18, %61 in 0 : vector<2x128xf32>, vector<2x128xf32>, vector<2x128xf32> -> vector<6x128xf32>
    %64 = arith.truncf %63 : vector<6x128xf32> to vector<6x128xbf16>
    %c0_33 = arith.constant 0 : index
    %c0_34 = arith.constant 0 : index
    %65 = vector.load %arg7[%c0_33, %c0_34] : memref<128x66xbf16, #tpu.memory_space<vmem>>, vector<128x66xbf16>
    %cst_35 = arith.constant dense<0.000000e+00> : vector<6x66xf32>
    %66 = tpu.matmul %64, %65, %cst_35 {dimension_numbers = #tpu.dot_dimension_numbers<[1], [0], [0], [1], [0, 0, 1, 1], [], []>} : vector<6x128xbf16>, vector<128x66xbf16>, vector<6x66xf32> -> vector<6x66xf32>
    %67 = vector.extract_strided_slice %66 {offsets = [0, 0], sizes = [2, 64], strides = [1, 1]} : vector<6x66xf32> to vector<2x64xf32>
    %68 = vector.extract_strided_slice %66 {offsets = [2, 0], sizes = [2, 64], strides = [1, 1]} : vector<6x66xf32> to vector<2x64xf32>
    %69 = vector.extract_strided_slice %66 {offsets = [4, 0], sizes = [2, 64], strides = [1, 1]} : vector<6x66xf32> to vector<2x64xf32>
    %70 = vector.extract_strided_slice %66 {offsets = [0, 64], sizes = [2, 1], strides = [1, 1]} : vector<6x66xf32> to vector<2x1xf32>
    %71 = vector.extract_strided_slice %66 {offsets = [2, 64], sizes = [2, 1], strides = [1, 1]} : vector<6x66xf32> to vector<2x1xf32>
    %72 = vector.extract_strided_slice %66 {offsets = [4, 64], sizes = [2, 1], strides = [1, 1]} : vector<6x66xf32> to vector<2x1xf32>
    %73 = vector.extract_strided_slice %66 {offsets = [0, 65], sizes = [2, 1], strides = [1, 1]} : vector<6x66xf32> to vector<2x1xf32>
    %74 = vector.extract_strided_slice %66 {offsets = [2, 65], sizes = [2, 1], strides = [1, 1]} : vector<6x66xf32> to vector<2x1xf32>
    %75 = vector.extract_strided_slice %66 {offsets = [4, 65], sizes = [2, 1], strides = [1, 1]} : vector<6x66xf32> to vector<2x1xf32>
    %76 = tpu.concatenate %70, %71, %72 in 1 : vector<2x1xf32>, vector<2x1xf32>, vector<2x1xf32> -> vector<2x3xf32>
    %77 = arith.maximumf %70, %71 : vector<2x1xf32>
    %78 = arith.maximumf %77, %72 : vector<2x1xf32>
    %79 = arith.addf %73, %78 : vector<2x1xf32>
    %cst_36 = arith.constant 0.000000e+00 : f32
    %80 = vector.broadcast %cst_36 : f32 to vector<2x1xf32>
    %81 = arith.cmpf ogt, %79, %80 : vector<2x1xf32>
    %cst_37 = arith.constant 2.000000e-01 : f32
    %82 = vector.broadcast %cst_37 : f32 to vector<2x1xf32>
    %83 = arith.mulf %82, %79 : vector<2x1xf32>
    %84 = arith.select %81, %79, %83 : vector<2x1xi1>, vector<2x1xf32>
    %85 = vector.broadcast %73 : vector<2x1xf32> to vector<2x3xf32>
    %86 = arith.addf %85, %76 : vector<2x3xf32>
    %cst_38 = arith.constant 0.000000e+00 : f32
    %87 = vector.broadcast %cst_38 : f32 to vector<2x3xf32>
    %88 = arith.cmpf ogt, %86, %87 : vector<2x3xf32>
    %cst_39 = arith.constant 2.000000e-01 : f32
    %89 = vector.broadcast %cst_39 : f32 to vector<2x3xf32>
    %90 = arith.mulf %89, %86 : vector<2x3xf32>
    %91 = arith.select %88, %86, %90 : vector<2x3xi1>, vector<2x3xf32>
    %92 = vector.broadcast %84 : vector<2x1xf32> to vector<2x3xf32>
    %93 = arith.subf %91, %92 : vector<2x3xf32>
    %94 = math.exp %93 : vector<2x3xf32>
    %95 = vector.extract_strided_slice %94 {offsets = [0, 0], sizes = [2, 1], strides = [1, 1]} : vector<2x3xf32> to vector<2x1xf32>
    %96 = vector.broadcast %95 : vector<2x1xf32> to vector<2x64xf32>
    %97 = arith.mulf %96, %67 : vector<2x64xf32>
    %98 = vector.extract_strided_slice %94 {offsets = [0, 0], sizes = [2, 1], strides = [1, 1]} : vector<2x3xf32> to vector<2x1xf32>
    %99 = vector.extract_strided_slice %94 {offsets = [0, 1], sizes = [2, 1], strides = [1, 1]} : vector<2x3xf32> to vector<2x1xf32>
    %100 = vector.broadcast %99 : vector<2x1xf32> to vector<2x64xf32>
    %101 = arith.mulf %100, %68 : vector<2x64xf32>
    %102 = arith.addf %97, %101 : vector<2x64xf32>
    %103 = vector.extract_strided_slice %94 {offsets = [0, 1], sizes = [2, 1], strides = [1, 1]} : vector<2x3xf32> to vector<2x1xf32>
    %104 = arith.addf %98, %103 : vector<2x1xf32>
    %105 = vector.extract_strided_slice %94 {offsets = [0, 2], sizes = [2, 1], strides = [1, 1]} : vector<2x3xf32> to vector<2x1xf32>
    %106 = vector.broadcast %105 : vector<2x1xf32> to vector<2x64xf32>
    %107 = arith.mulf %106, %69 : vector<2x64xf32>
    %108 = arith.addf %102, %107 : vector<2x64xf32>
    %109 = vector.extract_strided_slice %94 {offsets = [0, 2], sizes = [2, 1], strides = [1, 1]} : vector<2x3xf32> to vector<2x1xf32>
    %110 = arith.addf %104, %109 : vector<2x1xf32>
    %111 = tpu.reciprocal %110 {approx = true} : vector<2x1xf32> -> vector<2x1xf32>
    %112 = vector.broadcast %111 : vector<2x1xf32> to vector<2x64xf32>
    %113 = arith.mulf %108, %112 : vector<2x64xf32>
    %114 = vector.broadcast %62 : vector<1x64xf32> to vector<2x64xf32>
    %115 = arith.addf %113, %114 : vector<2x64xf32>
    %116 = arith.addf %74, %78 : vector<2x1xf32>
    %cst_40 = arith.constant 0.000000e+00 : f32
    %117 = vector.broadcast %cst_40 : f32 to vector<2x1xf32>
    %118 = arith.cmpf ogt, %116, %117 : vector<2x1xf32>
    %cst_41 = arith.constant 2.000000e-01 : f32
    %119 = vector.broadcast %cst_41 : f32 to vector<2x1xf32>
    %120 = arith.mulf %119, %116 : vector<2x1xf32>
    %121 = arith.select %118, %116, %120 : vector<2x1xi1>, vector<2x1xf32>
    %122 = vector.broadcast %74 : vector<2x1xf32> to vector<2x3xf32>
    %123 = arith.addf %122, %76 : vector<2x3xf32>
    %cst_42 = arith.constant 0.000000e+00 : f32
    %124 = vector.broadcast %cst_42 : f32 to vector<2x3xf32>
    %125 = arith.cmpf ogt, %123, %124 : vector<2x3xf32>
    %cst_43 = arith.constant 2.000000e-01 : f32
    %126 = vector.broadcast %cst_43 : f32 to vector<2x3xf32>
    %127 = arith.mulf %126, %123 : vector<2x3xf32>
    %128 = arith.select %125, %123, %127 : vector<2x3xi1>, vector<2x3xf32>
    %129 = vector.broadcast %121 : vector<2x1xf32> to vector<2x3xf32>
    %130 = arith.subf %128, %129 : vector<2x3xf32>
    %131 = math.exp %130 : vector<2x3xf32>
    %132 = vector.extract_strided_slice %131 {offsets = [0, 0], sizes = [2, 1], strides = [1, 1]} : vector<2x3xf32> to vector<2x1xf32>
    %133 = vector.broadcast %132 : vector<2x1xf32> to vector<2x64xf32>
    %134 = arith.mulf %133, %67 : vector<2x64xf32>
    %135 = vector.extract_strided_slice %131 {offsets = [0, 0], sizes = [2, 1], strides = [1, 1]} : vector<2x3xf32> to vector<2x1xf32>
    %136 = vector.extract_strided_slice %131 {offsets = [0, 1], sizes = [2, 1], strides = [1, 1]} : vector<2x3xf32> to vector<2x1xf32>
    %137 = vector.broadcast %136 : vector<2x1xf32> to vector<2x64xf32>
    %138 = arith.mulf %137, %68 : vector<2x64xf32>
    %139 = arith.addf %134, %138 : vector<2x64xf32>
    %140 = vector.extract_strided_slice %131 {offsets = [0, 1], sizes = [2, 1], strides = [1, 1]} : vector<2x3xf32> to vector<2x1xf32>
    %141 = arith.addf %135, %140 : vector<2x1xf32>
    %142 = vector.extract_strided_slice %131 {offsets = [0, 2], sizes = [2, 1], strides = [1, 1]} : vector<2x3xf32> to vector<2x1xf32>
    %143 = vector.broadcast %142 : vector<2x1xf32> to vector<2x64xf32>
    %144 = arith.mulf %143, %69 : vector<2x64xf32>
    %145 = arith.addf %139, %144 : vector<2x64xf32>
    %146 = vector.extract_strided_slice %131 {offsets = [0, 2], sizes = [2, 1], strides = [1, 1]} : vector<2x3xf32> to vector<2x1xf32>
    %147 = arith.addf %141, %146 : vector<2x1xf32>
    %148 = tpu.reciprocal %147 {approx = true} : vector<2x1xf32> -> vector<2x1xf32>
    %149 = vector.broadcast %148 : vector<2x1xf32> to vector<2x64xf32>
    %150 = arith.mulf %145, %149 : vector<2x64xf32>
    %151 = vector.broadcast %62 : vector<1x64xf32> to vector<2x64xf32>
    %152 = arith.addf %150, %151 : vector<2x64xf32>
    %153 = arith.addf %75, %78 : vector<2x1xf32>
    %cst_44 = arith.constant 0.000000e+00 : f32
    %154 = vector.broadcast %cst_44 : f32 to vector<2x1xf32>
    %155 = arith.cmpf ogt, %153, %154 : vector<2x1xf32>
    %cst_45 = arith.constant 2.000000e-01 : f32
    %156 = vector.broadcast %cst_45 : f32 to vector<2x1xf32>
    %157 = arith.mulf %156, %153 : vector<2x1xf32>
    %158 = arith.select %155, %153, %157 : vector<2x1xi1>, vector<2x1xf32>
    %159 = vector.broadcast %75 : vector<2x1xf32> to vector<2x3xf32>
    %160 = arith.addf %159, %76 : vector<2x3xf32>
    %cst_46 = arith.constant 0.000000e+00 : f32
    %161 = vector.broadcast %cst_46 : f32 to vector<2x3xf32>
    %162 = arith.cmpf ogt, %160, %161 : vector<2x3xf32>
    %cst_47 = arith.constant 2.000000e-01 : f32
    %163 = vector.broadcast %cst_47 : f32 to vector<2x3xf32>
    %164 = arith.mulf %163, %160 : vector<2x3xf32>
    %165 = arith.select %162, %160, %164 : vector<2x3xi1>, vector<2x3xf32>
    %166 = vector.broadcast %158 : vector<2x1xf32> to vector<2x3xf32>
    %167 = arith.subf %165, %166 : vector<2x3xf32>
    %168 = math.exp %167 : vector<2x3xf32>
    %169 = vector.extract_strided_slice %168 {offsets = [0, 0], sizes = [2, 1], strides = [1, 1]} : vector<2x3xf32> to vector<2x1xf32>
    %170 = vector.broadcast %169 : vector<2x1xf32> to vector<2x64xf32>
    %171 = arith.mulf %170, %67 : vector<2x64xf32>
    %172 = vector.extract_strided_slice %168 {offsets = [0, 0], sizes = [2, 1], strides = [1, 1]} : vector<2x3xf32> to vector<2x1xf32>
    %173 = vector.extract_strided_slice %168 {offsets = [0, 1], sizes = [2, 1], strides = [1, 1]} : vector<2x3xf32> to vector<2x1xf32>
    %174 = vector.broadcast %173 : vector<2x1xf32> to vector<2x64xf32>
    %175 = arith.mulf %174, %68 : vector<2x64xf32>
    %176 = arith.addf %171, %175 : vector<2x64xf32>
    %177 = vector.extract_strided_slice %168 {offsets = [0, 1], sizes = [2, 1], strides = [1, 1]} : vector<2x3xf32> to vector<2x1xf32>
    %178 = arith.addf %172, %177 : vector<2x1xf32>
    %179 = vector.extract_strided_slice %168 {offsets = [0, 2], sizes = [2, 1], strides = [1, 1]} : vector<2x3xf32> to vector<2x1xf32>
    %180 = vector.broadcast %179 : vector<2x1xf32> to vector<2x64xf32>
    %181 = arith.mulf %180, %69 : vector<2x64xf32>
    %182 = arith.addf %176, %181 : vector<2x64xf32>
    %183 = vector.extract_strided_slice %168 {offsets = [0, 2], sizes = [2, 1], strides = [1, 1]} : vector<2x3xf32> to vector<2x1xf32>
    %184 = arith.addf %178, %183 : vector<2x1xf32>
    %185 = tpu.reciprocal %184 {approx = true} : vector<2x1xf32> -> vector<2x1xf32>
    %186 = vector.broadcast %185 : vector<2x1xf32> to vector<2x64xf32>
    %187 = arith.mulf %182, %186 : vector<2x64xf32>
    %188 = vector.broadcast %62 : vector<1x64xf32> to vector<2x64xf32>
    %189 = arith.addf %187, %188 : vector<2x64xf32>
    %c6 = arith.constant 6 : index
    %c0_48 = arith.constant 0 : index
    %190 = vector.load %arg15[%c6, %c0_48] : memref<13x1024xf32, #tpu.memory_space<vmem>>, vector<1x48xf32>
    %191 = tpu.concatenate %17, %16, %20, %19 in 0 : vector<2x128xf32>, vector<2x128xf32>, vector<2x128xf32>, vector<2x128xf32> -> vector<8x128xf32>
    %192 = arith.truncf %191 : vector<8x128xf32> to vector<8x128xbf16>
    %c0_49 = arith.constant 0 : index
    %c0_50 = arith.constant 0 : index
    %193 = vector.load %arg8[%c0_49, %c0_50] : memref<128x50xbf16, #tpu.memory_space<vmem>>, vector<128x50xbf16>
    %cst_51 = arith.constant dense<0.000000e+00> : vector<8x50xf32>
    %194 = tpu.matmul %192, %193, %cst_51 {dimension_numbers = #tpu.dot_dimension_numbers<[1], [0], [0], [1], [0, 0, 1, 1], [], []>} : vector<8x128xbf16>, vector<128x50xbf16>, vector<8x50xf32> -> vector<8x50xf32>
    %195 = vector.extract_strided_slice %194 {offsets = [0, 0], sizes = [2, 48], strides = [1, 1]} : vector<8x50xf32> to vector<2x48xf32>
    %196 = vector.extract_strided_slice %194 {offsets = [2, 0], sizes = [2, 48], strides = [1, 1]} : vector<8x50xf32> to vector<2x48xf32>
    %197 = vector.extract_strided_slice %194 {offsets = [4, 0], sizes = [2, 48], strides = [1, 1]} : vector<8x50xf32> to vector<2x48xf32>
    %198 = vector.extract_strided_slice %194 {offsets = [6, 0], sizes = [2, 48], strides = [1, 1]} : vector<8x50xf32> to vector<2x48xf32>
    %199 = vector.extract_strided_slice %194 {offsets = [0, 48], sizes = [2, 1], strides = [1, 1]} : vector<8x50xf32> to vector<2x1xf32>
    %200 = vector.extract_strided_slice %194 {offsets = [2, 48], sizes = [2, 1], strides = [1, 1]} : vector<8x50xf32> to vector<2x1xf32>
    %201 = vector.extract_strided_slice %194 {offsets = [4, 48], sizes = [2, 1], strides = [1, 1]} : vector<8x50xf32> to vector<2x1xf32>
    %202 = vector.extract_strided_slice %194 {offsets = [6, 48], sizes = [2, 1], strides = [1, 1]} : vector<8x50xf32> to vector<2x1xf32>
    %203 = vector.extract_strided_slice %194 {offsets = [0, 49], sizes = [2, 1], strides = [1, 1]} : vector<8x50xf32> to vector<2x1xf32>
    %204 = vector.extract_strided_slice %194 {offsets = [2, 49], sizes = [2, 1], strides = [1, 1]} : vector<8x50xf32> to vector<2x1xf32>
    %205 = vector.extract_strided_slice %194 {offsets = [4, 49], sizes = [2, 1], strides = [1, 1]} : vector<8x50xf32> to vector<2x1xf32>
    %206 = vector.extract_strided_slice %194 {offsets = [6, 49], sizes = [2, 1], strides = [1, 1]} : vector<8x50xf32> to vector<2x1xf32>
    %207 = tpu.concatenate %199, %200, %201, %202 in 1 : vector<2x1xf32>, vector<2x1xf32>, vector<2x1xf32>, vector<2x1xf32> -> vector<2x4xf32>
    %208 = arith.maximumf %199, %200 : vector<2x1xf32>
    %209 = arith.maximumf %208, %201 : vector<2x1xf32>
    %210 = arith.maximumf %209, %202 : vector<2x1xf32>
    %211 = arith.addf %203, %210 : vector<2x1xf32>
    %cst_52 = arith.constant 0.000000e+00 : f32
    %212 = vector.broadcast %cst_52 : f32 to vector<2x1xf32>
    %213 = arith.cmpf ogt, %211, %212 : vector<2x1xf32>
    %cst_53 = arith.constant 2.000000e-01 : f32
    %214 = vector.broadcast %cst_53 : f32 to vector<2x1xf32>
    %215 = arith.mulf %214, %211 : vector<2x1xf32>
    %216 = arith.select %213, %211, %215 : vector<2x1xi1>, vector<2x1xf32>
    %217 = vector.broadcast %203 : vector<2x1xf32> to vector<2x4xf32>
    %218 = arith.addf %217, %207 : vector<2x4xf32>
    %cst_54 = arith.constant 0.000000e+00 : f32
    %219 = vector.broadcast %cst_54 : f32 to vector<2x4xf32>
    %220 = arith.cmpf ogt, %218, %219 : vector<2x4xf32>
    %cst_55 = arith.constant 2.000000e-01 : f32
    %221 = vector.broadcast %cst_55 : f32 to vector<2x4xf32>
    %222 = arith.mulf %221, %218 : vector<2x4xf32>
    %223 = arith.select %220, %218, %222 : vector<2x4xi1>, vector<2x4xf32>
    %224 = vector.broadcast %216 : vector<2x1xf32> to vector<2x4xf32>
    %225 = arith.subf %223, %224 : vector<2x4xf32>
    %226 = math.exp %225 : vector<2x4xf32>
    %227 = vector.extract_strided_slice %226 {offsets = [0, 0], sizes = [2, 1], strides = [1, 1]} : vector<2x4xf32> to vector<2x1xf32>
    %228 = vector.broadcast %227 : vector<2x1xf32> to vector<2x48xf32>
    %229 = arith.mulf %228, %195 : vector<2x48xf32>
    %230 = vector.extract_strided_slice %226 {offsets = [0, 0], sizes = [2, 1], strides = [1, 1]} : vector<2x4xf32> to vector<2x1xf32>
    %231 = vector.extract_strided_slice %226 {offsets = [0, 1], sizes = [2, 1], strides = [1, 1]} : vector<2x4xf32> to vector<2x1xf32>
    %232 = vector.broadcast %231 : vector<2x1xf32> to vector<2x48xf32>
    %233 = arith.mulf %232, %196 : vector<2x48xf32>
    %234 = arith.addf %229, %233 : vector<2x48xf32>
    %235 = vector.extract_strided_slice %226 {offsets = [0, 1], sizes = [2, 1], strides = [1, 1]} : vector<2x4xf32> to vector<2x1xf32>
    %236 = arith.addf %230, %235 : vector<2x1xf32>
    %237 = vector.extract_strided_slice %226 {offsets = [0, 2], sizes = [2, 1], strides = [1, 1]} : vector<2x4xf32> to vector<2x1xf32>
    %238 = vector.broadcast %237 : vector<2x1xf32> to vector<2x48xf32>
    %239 = arith.mulf %238, %197 : vector<2x48xf32>
    %240 = arith.addf %234, %239 : vector<2x48xf32>
    %241 = vector.extract_strided_slice %226 {offsets = [0, 2], sizes = [2, 1], strides = [1, 1]} : vector<2x4xf32> to vector<2x1xf32>
    %242 = arith.addf %236, %241 : vector<2x1xf32>
    %243 = vector.extract_strided_slice %226 {offsets = [0, 3], sizes = [2, 1], strides = [1, 1]} : vector<2x4xf32> to vector<2x1xf32>
    %244 = vector.broadcast %243 : vector<2x1xf32> to vector<2x48xf32>
    %245 = arith.mulf %244, %198 : vector<2x48xf32>
    %246 = arith.addf %240, %245 : vector<2x48xf32>
    %247 = vector.extract_strided_slice %226 {offsets = [0, 3], sizes = [2, 1], strides = [1, 1]} : vector<2x4xf32> to vector<2x1xf32>
    %248 = arith.addf %242, %247 : vector<2x1xf32>
    %249 = tpu.reciprocal %248 {approx = true} : vector<2x1xf32> -> vector<2x1xf32>
    %250 = vector.broadcast %249 : vector<2x1xf32> to vector<2x48xf32>
    %251 = arith.mulf %246, %250 : vector<2x48xf32>
    %252 = vector.broadcast %190 : vector<1x48xf32> to vector<2x48xf32>
    %253 = arith.addf %251, %252 : vector<2x48xf32>
    %254 = arith.addf %204, %210 : vector<2x1xf32>
    %cst_56 = arith.constant 0.000000e+00 : f32
    %255 = vector.broadcast %cst_56 : f32 to vector<2x1xf32>
    %256 = arith.cmpf ogt, %254, %255 : vector<2x1xf32>
    %cst_57 = arith.constant 2.000000e-01 : f32
    %257 = vector.broadcast %cst_57 : f32 to vector<2x1xf32>
    %258 = arith.mulf %257, %254 : vector<2x1xf32>
    %259 = arith.select %256, %254, %258 : vector<2x1xi1>, vector<2x1xf32>
    %260 = vector.broadcast %204 : vector<2x1xf32> to vector<2x4xf32>
    %261 = arith.addf %260, %207 : vector<2x4xf32>
    %cst_58 = arith.constant 0.000000e+00 : f32
    %262 = vector.broadcast %cst_58 : f32 to vector<2x4xf32>
    %263 = arith.cmpf ogt, %261, %262 : vector<2x4xf32>
    %cst_59 = arith.constant 2.000000e-01 : f32
    %264 = vector.broadcast %cst_59 : f32 to vector<2x4xf32>
    %265 = arith.mulf %264, %261 : vector<2x4xf32>
    %266 = arith.select %263, %261, %265 : vector<2x4xi1>, vector<2x4xf32>
    %267 = vector.broadcast %259 : vector<2x1xf32> to vector<2x4xf32>
    %268 = arith.subf %266, %267 : vector<2x4xf32>
    %269 = math.exp %268 : vector<2x4xf32>
    %270 = vector.extract_strided_slice %269 {offsets = [0, 0], sizes = [2, 1], strides = [1, 1]} : vector<2x4xf32> to vector<2x1xf32>
    %271 = vector.broadcast %270 : vector<2x1xf32> to vector<2x48xf32>
    %272 = arith.mulf %271, %195 : vector<2x48xf32>
    %273 = vector.extract_strided_slice %269 {offsets = [0, 0], sizes = [2, 1], strides = [1, 1]} : vector<2x4xf32> to vector<2x1xf32>
    %274 = vector.extract_strided_slice %269 {offsets = [0, 1], sizes = [2, 1], strides = [1, 1]} : vector<2x4xf32> to vector<2x1xf32>
    %275 = vector.broadcast %274 : vector<2x1xf32> to vector<2x48xf32>
    %276 = arith.mulf %275, %196 : vector<2x48xf32>
    %277 = arith.addf %272, %276 : vector<2x48xf32>
    %278 = vector.extract_strided_slice %269 {offsets = [0, 1], sizes = [2, 1], strides = [1, 1]} : vector<2x4xf32> to vector<2x1xf32>
    %279 = arith.addf %273, %278 : vector<2x1xf32>
    %280 = vector.extract_strided_slice %269 {offsets = [0, 2], sizes = [2, 1], strides = [1, 1]} : vector<2x4xf32> to vector<2x1xf32>
    %281 = vector.broadcast %280 : vector<2x1xf32> to vector<2x48xf32>
    %282 = arith.mulf %281, %197 : vector<2x48xf32>
    %283 = arith.addf %277, %282 : vector<2x48xf32>
    %284 = vector.extract_strided_slice %269 {offsets = [0, 2], sizes = [2, 1], strides = [1, 1]} : vector<2x4xf32> to vector<2x1xf32>
    %285 = arith.addf %279, %284 : vector<2x1xf32>
    %286 = vector.extract_strided_slice %269 {offsets = [0, 3], sizes = [2, 1], strides = [1, 1]} : vector<2x4xf32> to vector<2x1xf32>
    %287 = vector.broadcast %286 : vector<2x1xf32> to vector<2x48xf32>
    %288 = arith.mulf %287, %198 : vector<2x48xf32>
    %289 = arith.addf %283, %288 : vector<2x48xf32>
    %290 = vector.extract_strided_slice %269 {offsets = [0, 3], sizes = [2, 1], strides = [1, 1]} : vector<2x4xf32> to vector<2x1xf32>
    %291 = arith.addf %285, %290 : vector<2x1xf32>
    %292 = tpu.reciprocal %291 {approx = true} : vector<2x1xf32> -> vector<2x1xf32>
    %293 = vector.broadcast %292 : vector<2x1xf32> to vector<2x48xf32>
    %294 = arith.mulf %289, %293 : vector<2x48xf32>
    %295 = vector.broadcast %190 : vector<1x48xf32> to vector<2x48xf32>
    %296 = arith.addf %294, %295 : vector<2x48xf32>
    %297 = arith.addf %205, %210 : vector<2x1xf32>
    %cst_60 = arith.constant 0.000000e+00 : f32
    %298 = vector.broadcast %cst_60 : f32 to vector<2x1xf32>
    %299 = arith.cmpf ogt, %297, %298 : vector<2x1xf32>
    %cst_61 = arith.constant 2.000000e-01 : f32
    %300 = vector.broadcast %cst_61 : f32 to vector<2x1xf32>
    %301 = arith.mulf %300, %297 : vector<2x1xf32>
    %302 = arith.select %299, %297, %301 : vector<2x1xi1>, vector<2x1xf32>
    %303 = vector.broadcast %205 : vector<2x1xf32> to vector<2x4xf32>
    %304 = arith.addf %303, %207 : vector<2x4xf32>
    %cst_62 = arith.constant 0.000000e+00 : f32
    %305 = vector.broadcast %cst_62 : f32 to vector<2x4xf32>
    %306 = arith.cmpf ogt, %304, %305 : vector<2x4xf32>
    %cst_63 = arith.constant 2.000000e-01 : f32
    %307 = vector.broadcast %cst_63 : f32 to vector<2x4xf32>
    %308 = arith.mulf %307, %304 : vector<2x4xf32>
    %309 = arith.select %306, %304, %308 : vector<2x4xi1>, vector<2x4xf32>
    %310 = vector.broadcast %302 : vector<2x1xf32> to vector<2x4xf32>
    %311 = arith.subf %309, %310 : vector<2x4xf32>
    %312 = math.exp %311 : vector<2x4xf32>
    %313 = vector.extract_strided_slice %312 {offsets = [0, 0], sizes = [2, 1], strides = [1, 1]} : vector<2x4xf32> to vector<2x1xf32>
    %314 = vector.broadcast %313 : vector<2x1xf32> to vector<2x48xf32>
    %315 = arith.mulf %314, %195 : vector<2x48xf32>
    %316 = vector.extract_strided_slice %312 {offsets = [0, 0], sizes = [2, 1], strides = [1, 1]} : vector<2x4xf32> to vector<2x1xf32>
    %317 = vector.extract_strided_slice %312 {offsets = [0, 1], sizes = [2, 1], strides = [1, 1]} : vector<2x4xf32> to vector<2x1xf32>
    %318 = vector.broadcast %317 : vector<2x1xf32> to vector<2x48xf32>
    %319 = arith.mulf %318, %196 : vector<2x48xf32>
    %320 = arith.addf %315, %319 : vector<2x48xf32>
    %321 = vector.extract_strided_slice %312 {offsets = [0, 1], sizes = [2, 1], strides = [1, 1]} : vector<2x4xf32> to vector<2x1xf32>
    %322 = arith.addf %316, %321 : vector<2x1xf32>
    %323 = vector.extract_strided_slice %312 {offsets = [0, 2], sizes = [2, 1], strides = [1, 1]} : vector<2x4xf32> to vector<2x1xf32>
    %324 = vector.broadcast %323 : vector<2x1xf32> to vector<2x48xf32>
    %325 = arith.mulf %324, %197 : vector<2x48xf32>
    %326 = arith.addf %320, %325 : vector<2x48xf32>
    %327 = vector.extract_strided_slice %312 {offsets = [0, 2], sizes = [2, 1], strides = [1, 1]} : vector<2x4xf32> to vector<2x1xf32>
    %328 = arith.addf %322, %327 : vector<2x1xf32>
    %329 = vector.extract_strided_slice %312 {offsets = [0, 3], sizes = [2, 1], strides = [1, 1]} : vector<2x4xf32> to vector<2x1xf32>
    %330 = vector.broadcast %329 : vector<2x1xf32> to vector<2x48xf32>
    %331 = arith.mulf %330, %198 : vector<2x48xf32>
    %332 = arith.addf %326, %331 : vector<2x48xf32>
    %333 = vector.extract_strided_slice %312 {offsets = [0, 3], sizes = [2, 1], strides = [1, 1]} : vector<2x4xf32> to vector<2x1xf32>
    %334 = arith.addf %328, %333 : vector<2x1xf32>
    %335 = tpu.reciprocal %334 {approx = true} : vector<2x1xf32> -> vector<2x1xf32>
    %336 = vector.broadcast %335 : vector<2x1xf32> to vector<2x48xf32>
    %337 = arith.mulf %332, %336 : vector<2x48xf32>
    %338 = vector.broadcast %190 : vector<1x48xf32> to vector<2x48xf32>
    %339 = arith.addf %337, %338 : vector<2x48xf32>
    %340 = arith.addf %206, %210 : vector<2x1xf32>
    %cst_64 = arith.constant 0.000000e+00 : f32
    %341 = vector.broadcast %cst_64 : f32 to vector<2x1xf32>
    %342 = arith.cmpf ogt, %340, %341 : vector<2x1xf32>
    %cst_65 = arith.constant 2.000000e-01 : f32
    %343 = vector.broadcast %cst_65 : f32 to vector<2x1xf32>
    %344 = arith.mulf %343, %340 : vector<2x1xf32>
    %345 = arith.select %342, %340, %344 : vector<2x1xi1>, vector<2x1xf32>
    %346 = vector.broadcast %206 : vector<2x1xf32> to vector<2x4xf32>
    %347 = arith.addf %346, %207 : vector<2x4xf32>
    %cst_66 = arith.constant 0.000000e+00 : f32
    %348 = vector.broadcast %cst_66 : f32 to vector<2x4xf32>
    %349 = arith.cmpf ogt, %347, %348 : vector<2x4xf32>
    %cst_67 = arith.constant 2.000000e-01 : f32
    %350 = vector.broadcast %cst_67 : f32 to vector<2x4xf32>
    %351 = arith.mulf %350, %347 : vector<2x4xf32>
    %352 = arith.select %349, %347, %351 : vector<2x4xi1>, vector<2x4xf32>
    %353 = vector.broadcast %345 : vector<2x1xf32> to vector<2x4xf32>
    %354 = arith.subf %352, %353 : vector<2x4xf32>
    %355 = math.exp %354 : vector<2x4xf32>
    %356 = vector.extract_strided_slice %355 {offsets = [0, 0], sizes = [2, 1], strides = [1, 1]} : vector<2x4xf32> to vector<2x1xf32>
    %357 = vector.broadcast %356 : vector<2x1xf32> to vector<2x48xf32>
    %358 = arith.mulf %357, %195 : vector<2x48xf32>
    %359 = vector.extract_strided_slice %355 {offsets = [0, 0], sizes = [2, 1], strides = [1, 1]} : vector<2x4xf32> to vector<2x1xf32>
    %360 = vector.extract_strided_slice %355 {offsets = [0, 1], sizes = [2, 1], strides = [1, 1]} : vector<2x4xf32> to vector<2x1xf32>
    %361 = vector.broadcast %360 : vector<2x1xf32> to vector<2x48xf32>
    %362 = arith.mulf %361, %196 : vector<2x48xf32>
    %363 = arith.addf %358, %362 : vector<2x48xf32>
    %364 = vector.extract_strided_slice %355 {offsets = [0, 1], sizes = [2, 1], strides = [1, 1]} : vector<2x4xf32> to vector<2x1xf32>
    %365 = arith.addf %359, %364 : vector<2x1xf32>
    %366 = vector.extract_strided_slice %355 {offsets = [0, 2], sizes = [2, 1], strides = [1, 1]} : vector<2x4xf32> to vector<2x1xf32>
    %367 = vector.broadcast %366 : vector<2x1xf32> to vector<2x48xf32>
    %368 = arith.mulf %367, %197 : vector<2x48xf32>
    %369 = arith.addf %363, %368 : vector<2x48xf32>
    %370 = vector.extract_strided_slice %355 {offsets = [0, 2], sizes = [2, 1], strides = [1, 1]} : vector<2x4xf32> to vector<2x1xf32>
    %371 = arith.addf %365, %370 : vector<2x1xf32>
    %372 = vector.extract_strided_slice %355 {offsets = [0, 3], sizes = [2, 1], strides = [1, 1]} : vector<2x4xf32> to vector<2x1xf32>
    %373 = vector.broadcast %372 : vector<2x1xf32> to vector<2x48xf32>
    %374 = arith.mulf %373, %198 : vector<2x48xf32>
    %375 = arith.addf %369, %374 : vector<2x48xf32>
    %376 = vector.extract_strided_slice %355 {offsets = [0, 3], sizes = [2, 1], strides = [1, 1]} : vector<2x4xf32> to vector<2x1xf32>
    %377 = arith.addf %371, %376 : vector<2x1xf32>
    %378 = tpu.reciprocal %377 {approx = true} : vector<2x1xf32> -> vector<2x1xf32>
    %379 = vector.broadcast %378 : vector<2x1xf32> to vector<2x48xf32>
    %380 = arith.mulf %375, %379 : vector<2x48xf32>
    %381 = vector.broadcast %190 : vector<1x48xf32> to vector<2x48xf32>
    %382 = arith.addf %380, %381 : vector<2x48xf32>
    %383 = tpu.concatenate %115, %152, %189 in 1 : vector<2x64xf32>, vector<2x64xf32>, vector<2x64xf32> -> vector<2x192xf32>
    %384 = tpu.concatenate %253, %296, %339, %382 in 1 : vector<2x48xf32>, vector<2x48xf32>, vector<2x48xf32>, vector<2x48xf32> -> vector<2x192xf32>
    %385 = arith.addf %383, %384 : vector<2x192xf32>
    %386 = arith.truncf %385 : vector<2x192xf32> to vector<2x192xbf16>
    %c0_68 = arith.constant 0 : index
    %c0_69 = arith.constant 0 : index
    %387 = vector.load %arg9[%c0_68, %c0_69] : memref<192x192xbf16, #tpu.memory_space<vmem>>, vector<192x192xbf16>
    %cst_70 = arith.constant dense<0.000000e+00> : vector<2x192xf32>
    %388 = tpu.matmul %386, %387, %cst_70 {dimension_numbers = #tpu.dot_dimension_numbers<[1], [0], [0], [1], [0, 0, 1, 1], [], []>} : vector<2x192xbf16>, vector<192x192xbf16>, vector<2x192xf32> -> vector<2x192xf32>
    %c7 = arith.constant 7 : index
    %c0_71 = arith.constant 0 : index
    %389 = vector.load %arg15[%c7, %c0_71] : memref<13x1024xf32, #tpu.memory_space<vmem>>, vector<1x192xf32>
    %390 = vector.broadcast %389 : vector<1x192xf32> to vector<2x192xf32>
    %391 = arith.addf %388, %390 : vector<2x192xf32>
    %cst_72 = arith.constant 0.000000e+00 : f32
    %392 = vector.broadcast %cst_72 : f32 to vector<2x192xf32>
    %393 = arith.maximumf %391, %392 : vector<2x192xf32>
    %394 = arith.truncf %393 : vector<2x192xf32> to vector<2x192xbf16>
    %c0_73 = arith.constant 0 : index
    %c0_74 = arith.constant 0 : index
    %395 = vector.load %arg10[%c0_73, %c0_74] : memref<192x192xbf16, #tpu.memory_space<vmem>>, vector<192x192xbf16>
    %cst_75 = arith.constant dense<0.000000e+00> : vector<2x192xf32>
    %396 = tpu.matmul %394, %395, %cst_75 {dimension_numbers = #tpu.dot_dimension_numbers<[1], [0], [0], [1], [0, 0, 1, 1], [], []>} : vector<2x192xbf16>, vector<192x192xbf16>, vector<2x192xf32> -> vector<2x192xf32>
    %c8 = arith.constant 8 : index
    %c0_76 = arith.constant 0 : index
    %397 = vector.load %arg15[%c8, %c0_76] : memref<13x1024xf32, #tpu.memory_space<vmem>>, vector<1x192xf32>
    %398 = vector.broadcast %397 : vector<1x192xf32> to vector<2x192xf32>
    %399 = arith.addf %396, %398 : vector<2x192xf32>
    %cst_77 = arith.constant 0.000000e+00 : f32
    %400 = vector.broadcast %cst_77 : f32 to vector<2x192xf32>
    %401 = arith.maximumf %399, %400 : vector<2x192xf32>
    %402 = arith.truncf %401 : vector<2x192xf32> to vector<2x192xbf16>
    %c0_78 = arith.constant 0 : index
    %c0_79 = arith.constant 0 : index
    %403 = vector.load %arg11[%c0_78, %c0_79] : memref<192x192xbf16, #tpu.memory_space<vmem>>, vector<192x192xbf16>
    %cst_80 = arith.constant dense<0.000000e+00> : vector<2x192xf32>
    %404 = tpu.matmul %402, %403, %cst_80 {dimension_numbers = #tpu.dot_dimension_numbers<[1], [0], [0], [1], [0, 0, 1, 1], [], []>} : vector<2x192xbf16>, vector<192x192xbf16>, vector<2x192xf32> -> vector<2x192xf32>
    %c9 = arith.constant 9 : index
    %c0_81 = arith.constant 0 : index
    %405 = vector.load %arg15[%c9, %c0_81] : memref<13x1024xf32, #tpu.memory_space<vmem>>, vector<1x192xf32>
    %406 = vector.broadcast %405 : vector<1x192xf32> to vector<2x192xf32>
    %407 = arith.addf %404, %406 : vector<2x192xf32>
    %cst_82 = arith.constant 0.000000e+00 : f32
    %408 = vector.broadcast %cst_82 : f32 to vector<2x192xf32>
    %409 = arith.maximumf %407, %408 : vector<2x192xf32>
    %410 = arith.truncf %409 : vector<2x192xf32> to vector<2x192xbf16>
    %c0_83 = arith.constant 0 : index
    %c0_84 = arith.constant 0 : index
    %411 = vector.load %arg12[%c0_83, %c0_84] : memref<192x1024xbf16, #tpu.memory_space<vmem>>, vector<192x1024xbf16>
    %cst_85 = arith.constant dense<0.000000e+00> : vector<2x1024xf32>
    %412 = tpu.matmul %410, %411, %cst_85 {dimension_numbers = #tpu.dot_dimension_numbers<[1], [0], [0], [1], [0, 0, 1, 1], [], []>} : vector<2x192xbf16>, vector<192x1024xbf16>, vector<2x1024xf32> -> vector<2x1024xf32>
    %c10 = arith.constant 10 : index
    %c0_86 = arith.constant 0 : index
    %413 = vector.load %arg15[%c10, %c0_86] : memref<13x1024xf32, #tpu.memory_space<vmem>>, vector<1x1024xf32>
    %414 = vector.broadcast %413 : vector<1x1024xf32> to vector<2x1024xf32>
    %415 = arith.addf %412, %414 : vector<2x1024xf32>
    %cst_87 = arith.constant 0.000000e+00 : f32
    %416 = vector.broadcast %cst_87 : f32 to vector<2x1024xf32>
    %417 = arith.cmpf ogt, %415, %416 : vector<2x1024xf32>
    %cst_88 = arith.constant 0.000000e+00 : f32
    %418 = vector.broadcast %cst_88 : f32 to vector<2x1024xf32>
    %419 = arith.minimumf %415, %418 : vector<2x1024xf32>
    %420 = math.exp %419 : vector<2x1024xf32>
    %cst_89 = arith.constant 1.000000e+00 : f32
    %421 = vector.broadcast %cst_89 : f32 to vector<2x1024xf32>
    %422 = arith.subf %420, %421 : vector<2x1024xf32>
    %cst_90 = arith.constant 1.67326319 : f32
    %423 = vector.broadcast %cst_90 : f32 to vector<2x1024xf32>
    %424 = arith.mulf %423, %422 : vector<2x1024xf32>
    %425 = arith.select %417, %415, %424 : vector<2x1024xi1>, vector<2x1024xf32>
    %cst_91 = arith.constant 1.05070102 : f32
    %426 = vector.broadcast %cst_91 : f32 to vector<2x1024xf32>
    %427 = arith.mulf %426, %425 : vector<2x1024xf32>
    %428 = arith.truncf %427 : vector<2x1024xf32> to vector<2x1024xbf16>
    %c0_92 = arith.constant 0 : index
    %c0_93 = arith.constant 0 : index
    %429 = vector.load %arg13[%c0_92, %c0_93] : memref<1024x128xbf16, #tpu.memory_space<vmem>>, vector<1024x128xbf16>
    %cst_94 = arith.constant dense<0.000000e+00> : vector<2x128xf32>
    %430 = tpu.matmul %428, %429, %cst_94 {dimension_numbers = #tpu.dot_dimension_numbers<[1], [0], [0], [1], [0, 0, 1, 1], [], []>} : vector<2x1024xbf16>, vector<1024x128xbf16>, vector<2x128xf32> -> vector<2x128xf32>
    %c11 = arith.constant 11 : index
    %c0_95 = arith.constant 0 : index
    %431 = vector.load %arg15[%c11, %c0_95] : memref<13x1024xf32, #tpu.memory_space<vmem>>, vector<1x128xf32>
    %432 = vector.broadcast %431 : vector<1x128xf32> to vector<2x128xf32>
    %433 = arith.addf %430, %432 : vector<2x128xf32>
    %cst_96 = arith.constant 0.000000e+00 : f32
    %434 = vector.broadcast %cst_96 : f32 to vector<2x128xf32>
    %435 = arith.cmpf ogt, %433, %434 : vector<2x128xf32>
    %cst_97 = arith.constant 0.000000e+00 : f32
    %436 = vector.broadcast %cst_97 : f32 to vector<2x128xf32>
    %437 = arith.minimumf %433, %436 : vector<2x128xf32>
    %438 = math.exp %437 : vector<2x128xf32>
    %cst_98 = arith.constant 1.000000e+00 : f32
    %439 = vector.broadcast %cst_98 : f32 to vector<2x128xf32>
    %440 = arith.subf %438, %439 : vector<2x128xf32>
    %cst_99 = arith.constant 1.67326319 : f32
    %441 = vector.broadcast %cst_99 : f32 to vector<2x128xf32>
    %442 = arith.mulf %441, %440 : vector<2x128xf32>
    %443 = arith.select %435, %433, %442 : vector<2x128xi1>, vector<2x128xf32>
    %cst_100 = arith.constant 1.05070102 : f32
    %444 = vector.broadcast %cst_100 : f32 to vector<2x128xf32>
    %445 = arith.mulf %444, %443 : vector<2x128xf32>
    %446 = arith.truncf %445 : vector<2x128xf32> to vector<2x128xbf16>
    %c0_101 = arith.constant 0 : index
    %c0_102 = arith.constant 0 : index
    %447 = vector.load %arg14[%c0_101, %c0_102] : memref<128x2xbf16, #tpu.memory_space<vmem>>, vector<128x2xbf16>
    %cst_103 = arith.constant dense<0.000000e+00> : vector<2x2xf32>
    %448 = tpu.matmul %446, %447, %cst_103 {dimension_numbers = #tpu.dot_dimension_numbers<[1], [0], [0], [1], [0, 0, 1, 1], [], []>} : vector<2x128xbf16>, vector<128x2xbf16>, vector<2x2xf32> -> vector<2x2xf32>
    %c12 = arith.constant 12 : index
    %c0_104 = arith.constant 0 : index
    %449 = vector.load %arg15[%c12, %c0_104] : memref<13x1024xf32, #tpu.memory_space<vmem>>, vector<1x2xf32>
    %450 = vector.broadcast %449 : vector<1x2xf32> to vector<2x2xf32>
    %451 = arith.addf %448, %450 : vector<2x2xf32>
    %cst_105 = arith.constant dense<0xFF800000> : vector<2xf32>
    %452 = vector.multi_reduction <maximumf>, %451, %cst_105 [1] : vector<2x2xf32> to vector<2xf32>
    %453 = vector.shape_cast %452 : vector<2xf32> to vector<2x1xf32>
    %454 = vector.broadcast %453 : vector<2x1xf32> to vector<2x2xf32>
    %455 = arith.subf %451, %454 : vector<2x2xf32>
    %456 = math.exp %455 : vector<2x2xf32>
    %cst_106 = arith.constant dense<0.000000e+00> : vector<2xf32>
    %457 = vector.multi_reduction <add>, %456, %cst_106 [1] : vector<2x2xf32> to vector<2xf32>
    %458 = vector.shape_cast %457 : vector<2xf32> to vector<2x1xf32>
    %459 = vector.broadcast %458 : vector<2x1xf32> to vector<2x2xf32>
    %460 = arith.divf %456, %459 : vector<2x2xf32>
    %c0_107 = arith.constant 0 : index
    %c0_108 = arith.constant 0 : index
    %461 = vector.load %arg16[%c0_107, %c0_108] : memref<2x2xf32, #tpu.memory_space<vmem>>, vector<2x2xf32>
    tpu.vector_store %arg16[%c0_107, %c0_108], %460 {strides = array<i32>} : memref<2x2xf32, #tpu.memory_space<vmem>>, vector<2x2xf32>,
    return
  }
}

</mosaic_0001>

<llo_original>
// kernel: build_model_forward.1
$region0: #{build_model_forward.1}
  #allocation0 [shape = 'u32[]', space=smem, size = 0x4, offset = 0x4, fixed_abs, tag = 'smem constant byte address 0x4 - core index']
  #allocation1 [shape = 'u32[144,128]{1,0:T(1,128)}', space=vmem, size = 0x12000, scoped, tag = 'internal scratch']
  %s0 = inlined_call_operand.vmem [shape: f32[2,512], index: 0, kind: input, shape index: {}]
  %s1 = inlined_call_operand.vmem [shape: f32[2,6], index: 1, kind: input, shape index: {}]
  %s2 = inlined_call_operand.hbm [shape: bf16[512,256], index: 2, kind: input, shape index: {}]
  %s3 = inlined_call_operand.hbm [shape: bf16[256,768], index: 3, kind: input, shape index: {}]
  %s4 = inlined_call_operand.hbm [shape: bf16[6,32], index: 4, kind: input, shape index: {}]
  %s5 = inlined_call_operand.hbm [shape: bf16[32,64], index: 5, kind: input, shape index: {}]
  %s6 = inlined_call_operand.hbm [shape: bf16[64,128], index: 6, kind: input, shape index: {}]
  %s7 = inlined_call_operand.vmem [shape: bf16[128,66], index: 7, kind: input, shape index: {}]
  %s8 = inlined_call_operand.vmem [shape: bf16[128,50], index: 8, kind: input, shape index: {}]
  %s9 = inlined_call_operand.vmem [shape: bf16[192,192], index: 9, kind: input, shape index: {}]
  %s10 = inlined_call_operand.hbm [shape: bf16[192,192], index: 10, kind: input, shape index: {}]
  %s11 = inlined_call_operand.hbm [shape: bf16[192,192], index: 11, kind: input, shape index: {}]
  %s12 = inlined_call_operand.hbm [shape: bf16[192,1024], index: 12, kind: input, shape index: {}]
  %s13 = inlined_call_operand.hbm [shape: bf16[1024,128], index: 13, kind: input, shape index: {}]
  %s14 = inlined_call_operand.vmem [shape: bf16[128,2], index: 14, kind: input, shape index: {}]
  %s15 = inlined_call_operand.vmem [shape: f32[13,1024], index: 15, kind: input, shape index: {}]
  %s16 = inlined_call_operand.hbm [shape: f32[2,2], index: 16, kind: output, shape index: {}]
  %s17 = sld [smem:[#allocation0]]
  $region110: #{build_model_forward.1} parent=0
    _
  %s19 = ssub.s32 1, %s17
  %s20 = scalar_select 0, %s19, %s17
  $region1: #{build_model_forward.1} parent=0
    #allocation2 [shape = 'u8[262144]{0}', space=vmem, size = 0x40000, scoped, tag = 'input window, operand 2, single buffered']
    #allocation3 [shape = 's32[1]{0}', space=sflag, size = 0x4, scoped, tag = 'scoped memory for build_model_forward.1']
    #allocation4 [shape = 's32[1]{0}', space=sflag, size = 0x4, scoped, tag = 'scoped memory for build_model_forward.1']
    #allocation5 [shape = 'u8[393216]{0}', space=vmem, size = 0x60000, scoped, tag = 'input window, operand 3, single buffered']
    #allocation6 [shape = 's32[1]{0}', space=sflag, size = 0x4, scoped, tag = 'scoped memory for build_model_forward.1']
    #allocation7 [shape = 'u8[2048]{0}', space=vmem, size = 0x800, scoped, tag = 'input window, operand 4, single buffered']
    #allocation8 [shape = 'u8[8192]{0}', space=vmem, size = 0x2000, scoped, tag = 'input window, operand 5, single buffered']
    #allocation9 [shape = 's32[1]{0}', space=sflag, size = 0x4, scoped, tag = 'scoped memory for build_model_forward.1']
    #allocation10 [shape = 'u8[16384]{0}', space=vmem, size = 0x4000, scoped, tag = 'input window, operand 6, single buffered']
    #allocation11 [shape = 'u8[98304]{0}', space=vmem, size = 0x18000, scoped, tag = 'input window, operand 10, single buffered']
    #allocation12 [shape = 's32[1]{0}', space=sflag, size = 0x4, scoped, tag = 'scoped memory for build_model_forward.1']
    #allocation13 [shape = 'u8[98304]{0}', space=vmem, size = 0x18000, scoped, tag = 'input window, operand 11, single buffered']
    #allocation14 [shape = 'u8[393216]{0}', space=vmem, size = 0x60000, scoped, tag = 'input window, operand 12, single buffered']
    #allocation15 [shape = 's32[1]{0}', space=sflag, size = 0x4, scoped, tag = 'scoped memory for build_model_forward.1']
    #allocation16 [shape = 'u8[262144]{0}', space=vmem, size = 0x40000, scoped, tag = 'input window, operand 13, single buffered']
    #allocation17 [shape = 'u8[1024]{0}', space=vmem, size = 0x400, scoped, tag = 'output window, operand 0, single buffered']
    %21 = vsyncpa [#allocation3], 0
    %22 = vsyncpa [#allocation6], 0
    %23 = vsyncpa [#allocation9], 0
    %24 = vsyncpa [#allocation12], 0
    %25 = vsyncpa [#allocation15], 0
    %26 = vsyncpa [#allocation4], 0
    // Predicated region
    $region2: #{build_model_forward.1} parent=1 // pred_check
      _
    $region3: #{build_model_forward.1} parent=1 // pred_check_branch
      %28 = sbr.rel (0) target = $region5
    $region4: #{build_model_forward.1} parent=1 // pred_region
      _
    $region5: #{build_model_forward.1} parent=1 // pred_fallthru
      _
    // Predicated region
    $region6: #{build_model_forward.1} parent=1 // pred_check
      _
    $region7: #{build_model_forward.1} parent=1 // pred_check_branch
      %30 = sbr.rel (0) target = $region9
    $region8: #{build_model_forward.1} parent=1 // pred_region
      _
    $region9: #{build_model_forward.1} parent=1 // pred_fallthru
      _
    // Predicated region
    $region10: #{build_model_forward.1} parent=1 // pred_check
      _
    $region11: #{build_model_forward.1} parent=1 // pred_check_branch
      %32 = sbr.rel (0) target = $region13
    $region12: #{build_model_forward.1} parent=1 // pred_region
      %s34 = ssub.s32 8192, 8192
      %35 = vsyncadd [#allocation3], %s34
      %s36 = sshll.u32 [#allocation2], 4
      %s37 = int_to_ptr.vmem [resolvable:$true] %s36
      %42 = dma.hbm_to_vmem [thread:$0]  %s2, 8192, %s37, [#allocation3], 128, 128, 8
    $region13: #{build_model_forward.1} parent=1 // pred_fallthru
      _
    // Predicated region
    $region14: #{build_model_forward.1} parent=1 // pred_check
      _
    $region15: #{build_model_forward.1} parent=1 // pred_check_branch
      %44 = sbr.rel (0) target = $region17
    $region16: #{build_model_forward.1} parent=1 // pred_region
      %s46 = ssub.s32 12288, 12288
      %47 = vsyncadd [#allocation6], %s46
      %s48 = sshll.u32 [#allocation5], 4
      %s49 = int_to_ptr.vmem [resolvable:$true] %s48
      %54 = dma.hbm_to_vmem [thread:$0]  %s3, 12288, %s49, [#allocation6], 384, 384, 24
    $region17: #{build_model_forward.1} parent=1 // pred_fallthru
      _
    // Predicated region
    $region18: #{build_model_forward.1} parent=1 // pred_check
      _
    $region19: #{build_model_forward.1} parent=1 // pred_check_branch
      %56 = sbr.rel (0) target = $region21
    $region20: #{build_model_forward.1} parent=1 // pred_region
      %s58 = ssub.s32 64, 64
      %59 = vsyncadd [#allocation6], %s58
      %s61 = sshll.u32 [#allocation7], 4
      %s62 = int_to_ptr.vmem [resolvable:$true] %s61
      %64 = dma.hbm_to_vmem [thread:$0]  %s4, 64, %s62, [#allocation6]
    $region21: #{build_model_forward.1} parent=1 // pred_fallthru
      _
    // Predicated region
    $region22: #{build_model_forward.1} parent=1 // pred_check
      _
    $region23: #{build_model_forward.1} parent=1 // pred_check_branch
      %66 = sbr.rel (0) target = $region25
    $region24: #{build_model_forward.1} parent=1 // pred_region
      %s68 = ssub.s32 256, 256
      %69 = vsyncadd [#allocation9], %s68
      %s70 = sshll.u32 [#allocation8], 4
      %s71 = int_to_ptr.vmem [resolvable:$true] %s70
      %76 = dma.hbm_to_vmem [thread:$0]  %s5, 256, %s71, [#allocation9], 64, 64, 4
    $region25: #{build_model_forward.1} parent=1 // pred_fallthru
      _
    // Predicated region
    $region26: #{build_model_forward.1} parent=1 // pred_check
      _
    $region27: #{build_model_forward.1} parent=1 // pred_check_branch
      %78 = sbr.rel (0) target = $region29
    $region28: #{build_model_forward.1} parent=1 // pred_region
      %s80 = ssub.s32 512, 512
      %81 = vsyncadd [#allocation9], %s80
      %s82 = sshll.u32 [#allocation10], 4
      %s83 = int_to_ptr.vmem [resolvable:$true] %s82
      %88 = dma.hbm_to_vmem [thread:$0]  %s6, 512, %s83, [#allocation9], 64, 64, 4
    $region29: #{build_model_forward.1} parent=1 // pred_fallthru
      _
    // Predicated region
    $region30: #{build_model_forward.1} parent=1 // pred_check
      _
    $region31: #{build_model_forward.1} parent=1 // pred_check_branch
      %90 = sbr.rel (0) target = $region33
    $region32: #{build_model_forward.1} parent=1 // pred_region
      _
    $region33: #{build_model_forward.1} parent=1 // pred_fallthru
      _
    // Predicated region
    $region34: #{build_model_forward.1} parent=1 // pred_check
      _
    $region35: #{build_model_forward.1} parent=1 // pred_check_branch
      %92 = sbr.rel (0) target = $region37
    $region36: #{build_model_forward.1} parent=1 // pred_region
      _
    $region37: #{build_model_forward.1} parent=1 // pred_fallthru
      _
    // Predicated region
    $region38: #{build_model_forward.1} parent=1 // pred_check
      _
    $region39: #{build_model_forward.1} parent=1 // pred_check_branch
      %94 = sbr.rel (0) target = $region41
    $region40: #{build_model_forward.1} parent=1 // pred_region
      _
    $region41: #{build_model_forward.1} parent=1 // pred_fallthru
      _
    // Predicated region
    $region42: #{build_model_forward.1} parent=1 // pred_check
      _
    $region43: #{build_model_forward.1} parent=1 // pred_check_branch
      %96 = sbr.rel (0) target = $region45
    $region44: #{build_model_forward.1} parent=1 // pred_region
      %s98 = ssub.s32 3072, 3072
      %99 = vsyncadd [#allocation12], %s98
      %s100 = sshll.u32 [#allocation11], 4
      %s101 = int_to_ptr.vmem [resolvable:$true] %s100
      %106 = dma.hbm_to_vmem [thread:$0]  %s10, 3072, %s101, [#allocation12], 128, 128, 8
    $region45: #{build_model_forward.1} parent=1 // pred_fallthru
      _
    // Predicated region
    $region46: #{build_model_forward.1} parent=1 // pred_check
      _
    $region47: #{build_model_forward.1} parent=1 // pred_check_branch
      %108 = sbr.rel (0) target = $region49
    $region48: #{build_model_forward.1} parent=1 // pred_region
      %s110 = ssub.s32 3072, 3072
      %111 = vsyncadd [#allocation12], %s110
      %s112 = sshll.u32 [#allocation13], 4
      %s113 = int_to_ptr.vmem [resolvable:$true] %s112
      %118 = dma.hbm_to_vmem [thread:$0]  %s11, 3072, %s113, [#allocation12], 128, 128, 8
    $region49: #{build_model_forward.1} parent=1 // pred_fallthru
      _
    // Predicated region
    $region50: #{build_model_forward.1} parent=1 // pred_check
      _
    $region51: #{build_model_forward.1} parent=1 // pred_check_branch
      %120 = sbr.rel (0) target = $region53
    $region52: #{build_model_forward.1} parent=1 // pred_region
      %s122 = ssub.s32 12288, 12288
      %123 = vsyncadd [#allocation15], %s122
      %s124 = sshll.u32 [#allocation14], 4
      %s125 = int_to_ptr.vmem [resolvable:$true] %s124
      %130 = dma.hbm_to_vmem [thread:$0]  %s12, 12288, %s125, [#allocation15], 512, 512, 32
    $region53: #{build_model_forward.1} parent=1 // pred_fallthru
      _
    // Predicated region
    $region54: #{build_model_forward.1} parent=1 // pred_check
      _
    $region55: #{build_model_forward.1} parent=1 // pred_check_branch
      %132 = sbr.rel (0) target = $region57
    $region56: #{build_model_forward.1} parent=1 // pred_region
      %s134 = ssub.s32 8192, 8192
      %135 = vsyncadd [#allocation15], %s134
      %s136 = sshll.u32 [#allocation16], 4
      %s137 = int_to_ptr.vmem [resolvable:$true] %s136
      %142 = dma.hbm_to_vmem [thread:$0]  %s13, 8192, %s137, [#allocation15], 64, 64, 4
    $region57: #{build_model_forward.1} parent=1 // pred_fallthru
      _
    // Predicated region
    $region58: #{build_model_forward.1} parent=1 // pred_check
      _
    $region59: #{build_model_forward.1} parent=1 // pred_check_branch
      %144 = sbr.rel (0) target = $region61
    $region60: #{build_model_forward.1} parent=1 // pred_region
      _
    $region61: #{build_model_forward.1} parent=1 // pred_fallthru
      _
    // Predicated region
    $region62: #{build_model_forward.1} parent=1 // pred_check
      _
    $region63: #{build_model_forward.1} parent=1 // pred_check_branch
      %146 = sbr.rel (0) target = $region65
    $region64: #{build_model_forward.1} parent=1 // pred_region
      _
    $region65: #{build_model_forward.1} parent=1 // pred_fallthru
      _
    // Predicated region
    $region66: #{build_model_forward.1} parent=1 // pred_check
      _
    $region67: #{build_model_forward.1} parent=1 // pred_check_branch
      %148 = sbr.rel (0) target = $region69
    $region68: #{build_model_forward.1} parent=1 // pred_region
      %149 = dma.done [#allocation3], 8192
    $region69: #{build_model_forward.1} parent=1 // pred_fallthru
      _
    // Predicated region
    $region70: #{build_model_forward.1} parent=1 // pred_check
      _
    $region71: #{build_model_forward.1} parent=1 // pred_check_branch
      %151 = sbr.rel (0) target = $region73
    $region72: #{build_model_forward.1} parent=1 // pred_region
      %152 = dma.done [#allocation6], 12288
    $region73: #{build_model_forward.1} parent=1 // pred_fallthru
      _
    // Predicated region
    $region74: #{build_model_forward.1} parent=1 // pred_check
      _
    $region75: #{build_model_forward.1} parent=1 // pred_check_branch
      %154 = sbr.rel (0) target = $region77
    $region76: #{build_model_forward.1} parent=1 // pred_region
      %155 = dma.done [#allocation6], 64
    $region77: #{build_model_forward.1} parent=1 // pred_fallthru
      _
    // Predicated region
    $region78: #{build_model_forward.1} parent=1 // pred_check
      _
    $region79: #{build_model_forward.1} parent=1 // pred_check_branch
      %157 = sbr.rel (0) target = $region81
    $region80: #{build_model_forward.1} parent=1 // pred_region
      %158 = dma.done [#allocation9], 256
    $region81: #{build_model_forward.1} parent=1 // pred_fallthru
      _
    // Predicated region
    $region82: #{build_model_forward.1} parent=1 // pred_check
      _
    $region83: #{build_model_forward.1} parent=1 // pred_check_branch
      %160 = sbr.rel (0) target = $region85
    $region84: #{build_model_forward.1} parent=1 // pred_region
      %161 = dma.done [#allocation9], 512
    $region85: #{build_model_forward.1} parent=1 // pred_fallthru
      _
    // Predicated region
    $region86: #{build_model_forward.1} parent=1 // pred_check
      _
    $region87: #{build_model_forward.1} parent=1 // pred_check_branch
      %163 = sbr.rel (0) target = $region89
    $region88: #{build_model_forward.1} parent=1 // pred_region
      %164 = dma.done [#allocation12], 3072
    $region89: #{build_model_forward.1} parent=1 // pred_fallthru
      _
    // Predicated region
    $region90: #{build_model_forward.1} parent=1 // pred_check
      _
    $region91: #{build_model_forward.1} parent=1 // pred_check_branch
      %166 = sbr.rel (0) target = $region93
    $region92: #{build_model_forward.1} parent=1 // pred_region
      %167 = dma.done [#allocation12], 3072
    $region93: #{build_model_forward.1} parent=1 // pred_fallthru
      _
    // Predicated region
    $region94: #{build_model_forward.1} parent=1 // pred_check
      _
    $region95: #{build_model_forward.1} parent=1 // pred_check_branch
      %169 = sbr.rel (0) target = $region97
    $region96: #{build_model_forward.1} parent=1 // pred_region
      %170 = dma.done [#allocation15], 12288
    $region97: #{build_model_forward.1} parent=1 // pred_fallthru
      _
    // Predicated region
    $region98: #{build_model_forward.1} parent=1 // pred_check
      _
    $region99: #{build_model_forward.1} parent=1 // pred_check_branch
      %172 = sbr.rel (0) target = $region101
    $region100: #{build_model_forward.1} parent=1 // pred_region
      %173 = dma.done [#allocation15], 8192
    $region101: #{build_model_forward.1} parent=1 // pred_fallthru
      _
    %v175 = vld [vmem:[%s0] sm:$0xff]
    %v177 = vcombine.high %v175, %v175
    %v179 = vunpack.c.l.s4 1983009808
    %v180 = vunpack.c.0.s8 %v179
    %v181 = vlaneseq
    %v182 = vshrl.u32 %v181, 7
    %v183 = vsub.s32 %v180, %v182
    %v184 = vrot.slane %v175, %v183
    %v186 = vunpack.c.l.s4 1983009808
    %v187 = vunpack.c.0.s8 %v186
    %v188 = vlaneseq
    %v189 = vshrl.u32 %v188, 7
    %v190 = vsub.s32 %v187, %v189
    %v191 = vrot.slane %v177, %v190
    %v192 = vcombine.high %v184, %v184
    %v193 = vcombine.high %v191, %v191
    %v198 = vpack.c.bf16 %v184, %v184
    %v199 = vpack.c.bf16 %v192, %v192
    %v200 = vpack.c.bf16 %v191, %v191
    %v201 = vpack.c.bf16 %v193, %v193
    %v202 = vld [vmem:[#allocation2] sm:$0xff]
    %v203 = vld [vmem:[#allocation2 + $0x8] sm:$0xff]
    %v204 = vld [vmem:[#allocation2 + $0x10] sm:$0xff]
    %v205 = vld [vmem:[#allocation2 + $0x18] sm:$0xff]
    %v206 = vld [vmem:[#allocation2 + $0x20] sm:$0xff]
    %v207 = vld [vmem:[#allocation2 + $0x28] sm:$0xff]
    %v208 = vld [vmem:[#allocation2 + $0x30] sm:$0xff]
    %v209 = vld [vmem:[#allocation2 + $0x38] sm:$0xff]
    %v210 = vld [vmem:[#allocation2 + $0x40] sm:$0xff]
    %v211 = vld [vmem:[#allocation2 + $0x48] sm:$0xff]
    %v212 = vld [vmem:[#allocation2 + $0x50] sm:$0xff]
    %v213 = vld [vmem:[#allocation2 + $0x58] sm:$0xff]
    %v214 = vld [vmem:[#allocation2 + $0x60] sm:$0xff]
    %v215 = vld [vmem:[#allocation2 + $0x68] sm:$0xff]
    %v216 = vld [vmem:[#allocation2 + $0x70] sm:$0xff]
    %v217 = vld [vmem:[#allocation2 + $0x78] sm:$0xff]
    %v218 = vld [vmem:[#allocation2 + $0x80] sm:$0xff]
    %v219 = vld [vmem:[#allocation2 + $0x88] sm:$0xff]
    %v220 = vld [vmem:[#allocation2 + $0x90] sm:$0xff]
    %v221 = vld [vmem:[#allocation2 + $0x98] sm:$0xff]
    %v222 = vld [vmem:[#allocation2 + $0xa0] sm:$0xff]
    %v223 = vld [vmem:[#allocation2 + $0xa8] sm:$0xff]
    %v224 = vld [vmem:[#allocation2 + $0xb0] sm:$0xff]
    %v225 = vld [vmem:[#allocation2 + $0xb8] sm:$0xff]
    %v226 = vld [vmem:[#allocation2 + $0xc0] sm:$0xff]
    %v227 = vld [vmem:[#allocation2 + $0xc8] sm:$0xff]
    %v228 = vld [vmem:[#allocation2 + $0xd0] sm:$0xff]
    %v229 = vld [vmem:[#allocation2 + $0xd8] sm:$0xff]
    %v230 = vld [vmem:[#allocation2 + $0xe0] sm:$0xff]
    %v231 = vld [vmem:[#allocation2 + $0xe8] sm:$0xff]
    %v232 = vld [vmem:[#allocation2 + $0xf0] sm:$0xff]
    %v233 = vld [vmem:[#allocation2 + $0xf8] sm:$0xff]
    %v234 = vld [vmem:[#allocation2 + $0x100] sm:$0xff]
    %v235 = vld [vmem:[#allocation2 + $0x108] sm:$0xff]
    %v236 = vld [vmem:[#allocation2 + $0x110] sm:$0xff]
    %v237 = vld [vmem:[#allocation2 + $0x118] sm:$0xff]
    %v238 = vld [vmem:[#allocation2 + $0x120] sm:$0xff]
    %v239 = vld [vmem:[#allocation2 + $0x128] sm:$0xff]
    %v240 = vld [vmem:[#allocation2 + $0x130] sm:$0xff]
    %v241 = vld [vmem:[#allocation2 + $0x138] sm:$0xff]
    %v242 = vld [vmem:[#allocation2 + $0x140] sm:$0xff]
    %v243 = vld [vmem:[#allocation2 + $0x148] sm:$0xff]
    %v244 = vld [vmem:[#allocation2 + $0x150] sm:$0xff]
    %v245 = vld [vmem:[#allocation2 + $0x158] sm:$0xff]
    %v246 = vld [vmem:[#allocation2 + $0x160] sm:$0xff]
    %v247 = vld [vmem:[#allocation2 + $0x168] sm:$0xff]
    %v248 = vld [vmem:[#allocation2 + $0x170] sm:$0xff]
    %v249 = vld [vmem:[#allocation2 + $0x178] sm:$0xff]
    %v250 = vld [vmem:[#allocation2 + $0x180] sm:$0xff]
    %v251 = vld [vmem:[#allocation2 + $0x188] sm:$0xff]
    %v252 = vld [vmem:[#allocation2 + $0x190] sm:$0xff]
    %v253 = vld [vmem:[#allocation2 + $0x198] sm:$0xff]
    %v254 = vld [vmem:[#allocation2 + $0x1a0] sm:$0xff]
    %v255 = vld [vmem:[#allocation2 + $0x1a8] sm:$0xff]
    %v256 = vld [vmem:[#allocation2 + $0x1b0] sm:$0xff]
    %v257 = vld [vmem:[#allocation2 + $0x1b8] sm:$0xff]
    %v258 = vld [vmem:[#allocation2 + $0x1c0] sm:$0xff]
    %v259 = vld [vmem:[#allocation2 + $0x1c8] sm:$0xff]
    %v260 = vld [vmem:[#allocation2 + $0x1d0] sm:$0xff]
    %v261 = vld [vmem:[#allocation2 + $0x1d8] sm:$0xff]
    %v262 = vld [vmem:[#allocation2 + $0x1e0] sm:$0xff]
    %v263 = vld [vmem:[#allocation2 + $0x1e8] sm:$0xff]
    %v264 = vld [vmem:[#allocation2 + $0x1f0] sm:$0xff]
    %v265 = vld [vmem:[#allocation2 + $0x1f8] sm:$0xff]
    %v266 = vld [vmem:[%s15] ss:$8 sm:$0x3]
    %v268 = vlaneseq
    %v269 = vshrl.u32 %v268, 7
    %v270 = vsub.s32 0, %v269
    %v271 = vrot.slane %v266, %v270
    %v272 = vlaneseq
    %v273 = vshrl.u32 %v272, 7
    %v274 = vsub.s32 1, %v273
    %v275 = vrot.slane %v266, %v274
    %v342 = vunpack.c.l.b16 %v202
    %v343 = vunpack.c.h.b16 %v202
    %v344 = vunpack.c.l.b16 %v203
    %v345 = vunpack.c.h.b16 %v203
    %v346 = vunpack.c.l.b16 %v204
    %v347 = vunpack.c.h.b16 %v204
    %v348 = vunpack.c.l.b16 %v205
    %v349 = vunpack.c.h.b16 %v205
    %v350 = vunpack.c.l.b16 %v206
    %v351 = vunpack.c.h.b16 %v206
    %v352 = vunpack.c.l.b16 %v207
    %v353 = vunpack.c.h.b16 %v207
    %v354 = vunpack.c.l.b16 %v208
    %v355 = vunpack.c.h.b16 %v208
    %v356 = vunpack.c.l.b16 %v209
    %v357 = vunpack.c.h.b16 %v209
    %v358 = vunpack.c.l.b16 %v210
    %v359 = vunpack.c.h.b16 %v210
    %v360 = vunpack.c.l.b16 %v211
    %v361 = vunpack.c.h.b16 %v211
    %v362 = vunpack.c.l.b16 %v212
    %v363 = vunpack.c.h.b16 %v212
    %v364 = vunpack.c.l.b16 %v213
    %v365 = vunpack.c.h.b16 %v213
    %v366 = vunpack.c.l.b16 %v214
    %v367 = vunpack.c.h.b16 %v214
    %v368 = vunpack.c.l.b16 %v215
    %v369 = vunpack.c.h.b16 %v215
    %v370 = vunpack.c.l.b16 %v216
    %v371 = vunpack.c.h.b16 %v216
    %v372 = vunpack.c.l.b16 %v217
    %v373 = vunpack.c.h.b16 %v217
    %v374 = vunpack.c.l.b16 %v218
    %v375 = vunpack.c.h.b16 %v218
    %v376 = vunpack.c.l.b16 %v219
    %v377 = vunpack.c.h.b16 %v219
    %v378 = vunpack.c.l.b16 %v220
    %v379 = vunpack.c.h.b16 %v220
    %v380 = vunpack.c.l.b16 %v221
    %v381 = vunpack.c.h.b16 %v221
    %v382 = vunpack.c.l.b16 %v222
    %v383 = vunpack.c.h.b16 %v222
    %v384 = vunpack.c.l.b16 %v223
    %v385 = vunpack.c.h.b16 %v223
    %v386 = vunpack.c.l.b16 %v224
    %v387 = vunpack.c.h.b16 %v224
    %v388 = vunpack.c.l.b16 %v225
    %v389 = vunpack.c.h.b16 %v225
    %v390 = vunpack.c.l.b16 %v226
    %v391 = vunpack.c.h.b16 %v226
    %v392 = vunpack.c.l.b16 %v227
    %v393 = vunpack.c.h.b16 %v227
    %v394 = vunpack.c.l.b16 %v228
    %v395 = vunpack.c.h.b16 %v228
    %v396 = vunpack.c.l.b16 %v229
    %v397 = vunpack.c.h.b16 %v229
    %v398 = vunpack.c.l.b16 %v230
    %v399 = vunpack.c.h.b16 %v230
    %v400 = vunpack.c.l.b16 %v231
    %v401 = vunpack.c.h.b16 %v231
    %v402 = vunpack.c.l.b16 %v232
    %v403 = vunpack.c.h.b16 %v232
    %v404 = vunpack.c.l.b16 %v233
    %v405 = vunpack.c.h.b16 %v233
    %v406 = vunpack.c.l.b16 %v234
    %v407 = vunpack.c.h.b16 %v234
    %v408 = vunpack.c.l.b16 %v235
    %v409 = vunpack.c.h.b16 %v235
    %v410 = vunpack.c.l.b16 %v236
    %v411 = vunpack.c.h.b16 %v236
    %v412 = vunpack.c.l.b16 %v237
    %v413 = vunpack.c.h.b16 %v237
    %v414 = vunpack.c.l.b16 %v238
    %v415 = vunpack.c.h.b16 %v238
    %v416 = vunpack.c.l.b16 %v239
    %v417 = vunpack.c.h.b16 %v239
    %v418 = vunpack.c.l.b16 %v240
    %v419 = vunpack.c.h.b16 %v240
    %v420 = vunpack.c.l.b16 %v241
    %v421 = vunpack.c.h.b16 %v241
    %v422 = vunpack.c.l.b16 %v242
    %v423 = vunpack.c.h.b16 %v242
    %v424 = vunpack.c.l.b16 %v243
    %v425 = vunpack.c.h.b16 %v243
    %v426 = vunpack.c.l.b16 %v244
    %v427 = vunpack.c.h.b16 %v244
    %v428 = vunpack.c.l.b16 %v245
    %v429 = vunpack.c.h.b16 %v245
    %v430 = vunpack.c.l.b16 %v246
    %v431 = vunpack.c.h.b16 %v246
    %v432 = vunpack.c.l.b16 %v247
    %v433 = vunpack.c.h.b16 %v247
    %v434 = vunpack.c.l.b16 %v248
    %v435 = vunpack.c.h.b16 %v248
    %v436 = vunpack.c.l.b16 %v249
    %v437 = vunpack.c.h.b16 %v249
    %v438 = vunpack.c.l.b16 %v250
    %v439 = vunpack.c.h.b16 %v250
    %v440 = vunpack.c.l.b16 %v251
    %v441 = vunpack.c.h.b16 %v251
    %v442 = vunpack.c.l.b16 %v252
    %v443 = vunpack.c.h.b16 %v252
    %v444 = vunpack.c.l.b16 %v253
    %v445 = vunpack.c.h.b16 %v253
    %v446 = vunpack.c.l.b16 %v254
    %v447 = vunpack.c.h.b16 %v254
    %v448 = vunpack.c.l.b16 %v255
    %v449 = vunpack.c.h.b16 %v255
    %v450 = vunpack.c.l.b16 %v256
    %v451 = vunpack.c.h.b16 %v256
    %v452 = vunpack.c.l.b16 %v257
    %v453 = vunpack.c.h.b16 %v257
    %v454 = vunpack.c.l.b16 %v258
    %v455 = vunpack.c.h.b16 %v258
    %v456 = vunpack.c.l.b16 %v259
    %v457 = vunpack.c.h.b16 %v259
    %v458 = vunpack.c.l.b16 %v260
    %v459 = vunpack.c.h.b16 %v260
    %v460 = vunpack.c.l.b16 %v261
    %v461 = vunpack.c.h.b16 %v261
    %v462 = vunpack.c.l.b16 %v262
    %v463 = vunpack.c.h.b16 %v262
    %v464 = vunpack.c.l.b16 %v263
    %v465 = vunpack.c.h.b16 %v263
    %v466 = vunpack.c.l.b16 %v264
    %v467 = vunpack.c.h.b16 %v264
    %v468 = vunpack.c.l.b16 %v265
    %v469 = vunpack.c.h.b16 %v265
    %v470 = vpack.c.b16 %v344, %v342
    %v471 = vpack.c.b16 %v345, %v343
    %v472 = vpack.c.b16 %v348, %v346
    %v473 = vpack.c.b16 %v349, %v347
    %v474 = vpack.c.b16 %v352, %v350
    %v475 = vpack.c.b16 %v353, %v351
    %v476 = vpack.c.b16 %v356, %v354
    %v477 = vpack.c.b16 %v357, %v355
    %v478 = vpack.c.b16 %v360, %v358
    %v479 = vpack.c.b16 %v361, %v359
    %v480 = vpack.c.b16 %v364, %v362
    %v481 = vpack.c.b16 %v365, %v363
    %v482 = vpack.c.b16 %v368, %v366
    %v483 = vpack.c.b16 %v369, %v367
    %v484 = vpack.c.b16 %v372, %v370
    %v485 = vpack.c.b16 %v373, %v371
    %v486 = vpack.c.b16 %v376, %v374
    %v487 = vpack.c.b16 %v377, %v375
    %v488 = vpack.c.b16 %v380, %v378
    %v489 = vpack.c.b16 %v381, %v379
    %v490 = vpack.c.b16 %v384, %v382
    %v491 = vpack.c.b16 %v385, %v383
    %v492 = vpack.c.b16 %v388, %v386
    %v493 = vpack.c.b16 %v389, %v387
    %v494 = vpack.c.b16 %v392, %v390
    %v495 = vpack.c.b16 %v393, %v391
    %v496 = vpack.c.b16 %v396, %v394
    %v497 = vpack.c.b16 %v397, %v395
    %v498 = vpack.c.b16 %v400, %v398
    %v499 = vpack.c.b16 %v401, %v399
    %v500 = vpack.c.b16 %v404, %v402
    %v501 = vpack.c.b16 %v405, %v403
    %v502 = vpack.c.b16 %v408, %v406
    %v503 = vpack.c.b16 %v409, %v407
    %v504 = vpack.c.b16 %v412, %v410
    %v505 = vpack.c.b16 %v413, %v411
    %v506 = vpack.c.b16 %v416, %v414
    %v507 = vpack.c.b16 %v417, %v415
    %v508 = vpack.c.b16 %v420, %v418
    %v509 = vpack.c.b16 %v421, %v419
    %v510 = vpack.c.b16 %v424, %v422
    %v511 = vpack.c.b16 %v425, %v423
    %v512 = vpack.c.b16 %v428, %v426
    %v513 = vpack.c.b16 %v429, %v427
    %v514 = vpack.c.b16 %v432, %v430
    %v515 = vpack.c.b16 %v433, %v431
    %v516 = vpack.c.b16 %v436, %v434
    %v517 = vpack.c.b16 %v437, %v435
    %v518 = vpack.c.b16 %v440, %v438
    %v519 = vpack.c.b16 %v441, %v439
    %v520 = vpack.c.b16 %v444, %v442
    %v521 = vpack.c.b16 %v445, %v443
    %v522 = vpack.c.b16 %v448, %v446
    %v523 = vpack.c.b16 %v449, %v447
    %v524 = vpack.c.b16 %v452, %v450
    %v525 = vpack.c.b16 %v453, %v451
    %v526 = vpack.c.b16 %v456, %v454
    %v527 = vpack.c.b16 %v457, %v455
    %v528 = vpack.c.b16 %v460, %v458
    %v529 = vpack.c.b16 %v461, %v459
    %v530 = vpack.c.b16 %v464, %v462
    %v531 = vpack.c.b16 %v465, %v463
    %v532 = vpack.c.b16 %v468, %v466
    %v533 = vpack.c.b16 %v469, %v467
    %598 = vmatprep.subr.bf16.mxu0 %v485
    %599 = vmatpush1.bf16.msra.mxu0 %v484
    %600 = vmatprep.subr.bf16.mxu0 %v483
    %601 = vmatpush1.bf16.msra.mxu0 %v482
    %602 = vmatprep.subr.bf16.mxu0 %v481
    %603 = vmatpush1.bf16.msra.mxu0 %v480
    %604 = vmatprep.subr.bf16.mxu0 %v479
    %605 = vmatpush1.bf16.msra.mxu0 %v478
    %606 = vmatprep.subr.bf16.mxu0 %v477
    %607 = vmatpush1.bf16.msra.mxu0 %v476
    %608 = vmatprep.subr.bf16.mxu0 %v475
    %609 = vmatpush1.bf16.msra.mxu0 %v474
    %610 = vmatprep.subr.bf16.mxu0 %v473
    %611 = vmatpush1.bf16.msra.mxu0 %v472
    %612 = vmatprep.subr.bf16.mxu0 %v471
    %613 = vmatpush1.bf16.msra.mxu0 %v470
    %614 = vmatprep.subr.bf16.mxu0 %v501
    %615 = vmatpush2.bf16.msra.mxu0 %v500
    %616 = vmatprep.subr.bf16.mxu0 %v499
    %617 = vmatpush2.bf16.msra.mxu0 %v498
    %618 = vmatprep.subr.bf16.mxu0 %v497
    %619 = vmatpush2.bf16.msra.mxu0 %v496
    %620 = vmatprep.subr.bf16.mxu0 %v495
    %621 = vmatpush2.bf16.msra.mxu0 %v494
    %622 = vmatprep.subr.bf16.mxu0 %v493
    %623 = vmatpush2.bf16.msra.mxu0 %v492
    %624 = vmatprep.subr.bf16.mxu0 %v491
    %625 = vmatpush2.bf16.msra.mxu0 %v490
    %626 = vmatprep.subr.bf16.mxu0 %v489
    %627 = vmatpush2.bf16.msra.mxu0 %v488
    %628 = vmatprep.subr.bf16.mxu0 %v487
    %629 = vmatpush2.bf16.msra.mxu0 %v486
    %630 = vmatprep.mubr.bf16.mxu0 %v199
    %631 = vmatmul.mubr.bf16.gmra.mxu0 %v198
    %v632 = vpop.f32.mrf.mxu0
    %v633 = vadd.f32 %v271, %v632
    %v634 = vpop.f32.mrf.mxu0
    %v635 = vadd.f32 %v275, %v634
    %v636 = vpop.f32.mrf.mxu0
    %v637 = vpop.f32.mrf.mxu0
    %638 = vdwg.mxu0
    %639 = vmatprep.subr.bf16.mxu0 %v517
    %640 = vmatpush1.bf16.msra.mxu0 %v516
    %641 = vmatprep.subr.bf16.mxu0 %v515
    %642 = vmatpush1.bf16.msra.mxu0 %v514
    %643 = vmatprep.subr.bf16.mxu0 %v513
    %644 = vmatpush1.bf16.msra.mxu0 %v512
    %645 = vmatprep.subr.bf16.mxu0 %v511
    %646 = vmatpush1.bf16.msra.mxu0 %v510
    %647 = vmatprep.subr.bf16.mxu0 %v509
    %648 = vmatpush1.bf16.msra.mxu0 %v508
    %649 = vmatprep.subr.bf16.mxu0 %v507
    %650 = vmatpush1.bf16.msra.mxu0 %v506
    %651 = vmatprep.subr.bf16.mxu0 %v505
    %652 = vmatpush1.bf16.msra.mxu0 %v504
    %653 = vmatprep.subr.bf16.mxu0 %v503
    %654 = vmatpush1.bf16.msra.mxu0 %v502
    %655 = vmatprep.subr.bf16.mxu0 %v533
    %656 = vmatpush2.bf16.msra.mxu0 %v532
    %657 = vmatprep.subr.bf16.mxu0 %v531
    %658 = vmatpush2.bf16.msra.mxu0 %v530
    %659 = vmatprep.subr.bf16.mxu0 %v529
    %660 = vmatpush2.bf16.msra.mxu0 %v528
    %661 = vmatprep.subr.bf16.mxu0 %v527
    %662 = vmatpush2.bf16.msra.mxu0 %v526
    %663 = vmatprep.subr.bf16.mxu0 %v525
    %664 = vmatpush2.bf16.msra.mxu0 %v524
    %665 = vmatprep.subr.bf16.mxu0 %v523
    %666 = vmatpush2.bf16.msra.mxu0 %v522
    %667 = vmatprep.subr.bf16.mxu0 %v521
    %668 = vmatpush2.bf16.msra.mxu0 %v520
    %669 = vmatprep.subr.bf16.mxu0 %v519
    %670 = vmatpush2.bf16.msra.mxu0 %v518
    %671 = vmatprep.mubr.bf16.mxu0 %v201
    %672 = vmatmul.mubr.bf16.gmra.mxu0 %v200
    %v673 = vpop.f32.mrf.mxu0
    %v674 = vadd.f32 %v633, %v673
    %v675 = vpop.f32.mrf.mxu0
    %v676 = vadd.f32 %v635, %v675
    %v677 = vpop.f32.mrf.mxu0
    %v678 = vpop.f32.mrf.mxu0
    %679 = vdwg.mxu0
    %v680 = vmax.f32 %v674, 0.0
    %v681 = vmax.f32 %v676, 0.0
    %v682 = vpack.c.bf16 %v680, %v680
    %v683 = vpack.c.bf16 %v681, %v681
    %v684 = vld [vmem:[#allocation5] sm:$0xff]
    %v685 = vld [vmem:[#allocation5 + $0x8] sm:$0xff]
    %v686 = vld [vmem:[#allocation5 + $0x10] sm:$0xff]
    %v687 = vld [vmem:[#allocation5 + $0x18] sm:$0xff]
    %v688 = vld [vmem:[#allocation5 + $0x20] sm:$0xff]
    %v689 = vld [vmem:[#allocation5 + $0x28] sm:$0xff]
    %v690 = vld [vmem:[#allocation5 + $0x30] sm:$0xff]
    %v691 = vld [vmem:[#allocation5 + $0x38] sm:$0xff]
    %v692 = vld [vmem:[#allocation5 + $0x40] sm:$0xff]
    %v693 = vld [vmem:[#allocation5 + $0x48] sm:$0xff]
    %v694 = vld [vmem:[#allocation5 + $0x50] sm:$0xff]
    %v695 = vld [vmem:[#allocation5 + $0x58] sm:$0xff]
    %v696 = vld [vmem:[#allocation5 + $0x60] sm:$0xff]
    %v697 = vld [vmem:[#allocation5 + $0x68] sm:$0xff]
    %v698 = vld [vmem:[#allocation5 + $0x70] sm:$0xff]
    %v699 = vld [vmem:[#allocation5 + $0x78] sm:$0xff]
    %v700 = vld [vmem:[#allocation5 + $0x80] sm:$0xff]
    %v701 = vld [vmem:[#allocation5 + $0x88] sm:$0xff]
    %v702 = vld [vmem:[#allocation5 + $0x90] sm:$0xff]
    %v703 = vld [vmem:[#allocation5 + $0x98] sm:$0xff]
    %v704 = vld [vmem:[#allocation5 + $0xa0] sm:$0xff]
    %v705 = vld [vmem:[#allocation5 + $0xa8] sm:$0xff]
    %v706 = vld [vmem:[#allocation5 + $0xb0] sm:$0xff]
    %v707 = vld [vmem:[#allocation5 + $0xb8] sm:$0xff]
    %v708 = vld [vmem:[#allocation5 + $0xc0] sm:$0xff]
    %v709 = vld [vmem:[#allocation5 + $0xc8] sm:$0xff]
    %v710 = vld [vmem:[#allocation5 + $0xd0] sm:$0xff]
    %v711 = vld [vmem:[#allocation5 + $0xd8] sm:$0xff]
    %v712 = vld [vmem:[#allocation5 + $0xe0] sm:$0xff]
    %v713 = vld [vmem:[#allocation5 + $0xe8] sm:$0xff]
    %v714 = vld [vmem:[#allocation5 + $0xf0] sm:$0xff]
    %v715 = vld [vmem:[#allocation5 + $0xf8] sm:$0xff]
    %v716 = vld [vmem:[#allocation5 + $0x100] sm:$0xff]
    %v717 = vld [vmem:[#allocation5 + $0x108] sm:$0xff]
    %v718 = vld [vmem:[#allocation5 + $0x110] sm:$0xff]
    %v719 = vld [vmem:[#allocation5 + $0x118] sm:$0xff]
    %v720 = vld [vmem:[#allocation5 + $0x120] sm:$0xff]
    %v721 = vld [vmem:[#allocation5 + $0x128] sm:$0xff]
    %v722 = vld [vmem:[#allocation5 + $0x130] sm:$0xff]
    %v723 = vld [vmem:[#allocation5 + $0x138] sm:$0xff]
    %v724 = vld [vmem:[#allocation5 + $0x140] sm:$0xff]
    %v725 = vld [vmem:[#allocation5 + $0x148] sm:$0xff]
    %v726 = vld [vmem:[#allocation5 + $0x150] sm:$0xff]
    %v727 = vld [vmem:[#allocation5 + $0x158] sm:$0xff]
    %v728 = vld [vmem:[#allocation5 + $0x160] sm:$0xff]
    %v729 = vld [vmem:[#allocation5 + $0x168] sm:$0xff]
    %v730 = vld [vmem:[#allocation5 + $0x170] sm:$0xff]
    %v731 = vld [vmem:[#allocation5 + $0x178] sm:$0xff]
    %v732 = vld [vmem:[#allocation5 + $0x180] sm:$0xff]
    %v733 = vld [vmem:[#allocation5 + $0x188] sm:$0xff]
    %v734 = vld [vmem:[#allocation5 + $0x190] sm:$0xff]
    %v735 = vld [vmem:[#allocation5 + $0x198] sm:$0xff]
    %v736 = vld [vmem:[#allocation5 + $0x1a0] sm:$0xff]
    %v737 = vld [vmem:[#allocation5 + $0x1a8] sm:$0xff]
    %v738 = vld [vmem:[#allocation5 + $0x1b0] sm:$0xff]
    %v739 = vld [vmem:[#allocation5 + $0x1b8] sm:$0xff]
    %v740 = vld [vmem:[#allocation5 + $0x1c0] sm:$0xff]
    %v741 = vld [vmem:[#allocation5 + $0x1c8] sm:$0xff]
    %v742 = vld [vmem:[#allocation5 + $0x1d0] sm:$0xff]
    %v743 = vld [vmem:[#allocation5 + $0x1d8] sm:$0xff]
    %v744 = vld [vmem:[#allocation5 + $0x1e0] sm:$0xff]
    %v745 = vld [vmem:[#allocation5 + $0x1e8] sm:$0xff]
    %v746 = vld [vmem:[#allocation5 + $0x1f0] sm:$0xff]
    %v747 = vld [vmem:[#allocation5 + $0x1f8] sm:$0xff]
    %v748 = vld [vmem:[#allocation5 + $0x200] sm:$0xff]
    %v749 = vld [vmem:[#allocation5 + $0x208] sm:$0xff]
    %v750 = vld [vmem:[#allocation5 + $0x210] sm:$0xff]
    %v751 = vld [vmem:[#allocation5 + $0x218] sm:$0xff]
    %v752 = vld [vmem:[#allocation5 + $0x220] sm:$0xff]
    %v753 = vld [vmem:[#allocation5 + $0x228] sm:$0xff]
    %v754 = vld [vmem:[#allocation5 + $0x230] sm:$0xff]
    %v755 = vld [vmem:[#allocation5 + $0x238] sm:$0xff]
    %v756 = vld [vmem:[#allocation5 + $0x240] sm:$0xff]
    %v757 = vld [vmem:[#allocation5 + $0x248] sm:$0xff]
    %v758 = vld [vmem:[#allocation5 + $0x250] sm:$0xff]
    %v759 = vld [vmem:[#allocation5 + $0x258] sm:$0xff]
    %v760 = vld [vmem:[#allocation5 + $0x260] sm:$0xff]
    %v761 = vld [vmem:[#allocation5 + $0x268] sm:$0xff]
    %v762 = vld [vmem:[#allocation5 + $0x270] sm:$0xff]
    %v763 = vld [vmem:[#allocation5 + $0x278] sm:$0xff]
    %v764 = vld [vmem:[#allocation5 + $0x280] sm:$0xff]
    %v765 = vld [vmem:[#allocation5 + $0x288] sm:$0xff]
    %v766 = vld [vmem:[#allocation5 + $0x290] sm:$0xff]
    %v767 = vld [vmem:[#allocation5 + $0x298] sm:$0xff]
    %v768 = vld [vmem:[#allocation5 + $0x2a0] sm:$0xff]
    %v769 = vld [vmem:[#allocation5 + $0x2a8] sm:$0xff]
    %v770 = vld [vmem:[#allocation5 + $0x2b0] sm:$0xff]
    %v771 = vld [vmem:[#allocation5 + $0x2b8] sm:$0xff]
    %v772 = vld [vmem:[#allocation5 + $0x2c0] sm:$0xff]
    %v773 = vld [vmem:[#allocation5 + $0x2c8] sm:$0xff]
    %v774 = vld [vmem:[#allocation5 + $0x2d0] sm:$0xff]
    %v775 = vld [vmem:[#allocation5 + $0x2d8] sm:$0xff]
    %v776 = vld [vmem:[#allocation5 + $0x2e0] sm:$0xff]
    %v777 = vld [vmem:[#allocation5 + $0x2e8] sm:$0xff]
    %v778 = vld [vmem:[#allocation5 + $0x2f0] sm:$0xff]
    %v779 = vld [vmem:[#allocation5 + $0x2f8] sm:$0xff]
    %s780 = scalar_lea.vmem %s15, 1
    %v781 = vld [vmem:[%s780] ss:$8 sm:$0xf]
    %v782 = vld [vmem:[%s780] ss:$8 sm:$0x30]
    %v783 = vor.u32 %v781, %v782
    %v785 = vlaneseq
    %v786 = vshrl.u32 %v785, 7
    %v787 = vsub.s32 0, %v786
    %v788 = vrot.slane %v783, %v787
    %v789 = vlaneseq
    %v790 = vshrl.u32 %v789, 7
    %v791 = vsub.s32 1, %v790
    %v792 = vrot.slane %v783, %v791
    %v793 = vlaneseq
    %v794 = vshrl.u32 %v793, 7
    %v795 = vsub.s32 2, %v794
    %v796 = vrot.slane %v783, %v795
    %v797 = vlaneseq
    %v798 = vshrl.u32 %v797, 7
    %v799 = vsub.s32 3, %v798
    %v800 = vrot.slane %v783, %v799
    %v801 = vlaneseq
    %v802 = vshrl.u32 %v801, 7
    %v803 = vsub.s32 4, %v802
    %v804 = vrot.slane %v783, %v803
    %v805 = vlaneseq
    %v806 = vshrl.u32 %v805, 7
    %v807 = vsub.s32 5, %v806
    %v808 = vrot.slane %v783, %v807
    %v911 = vunpack.c.l.b16 %v684
    %v912 = vunpack.c.h.b16 %v684
    %v913 = vunpack.c.l.b16 %v685
    %v914 = vunpack.c.h.b16 %v685
    %v915 = vunpack.c.l.b16 %v686
    %v916 = vunpack.c.h.b16 %v686
    %v917 = vunpack.c.l.b16 %v687
    %v918 = vunpack.c.h.b16 %v687
    %v919 = vunpack.c.l.b16 %v688
    %v920 = vunpack.c.h.b16 %v688
    %v921 = vunpack.c.l.b16 %v689
    %v922 = vunpack.c.h.b16 %v689
    %v923 = vunpack.c.l.b16 %v690
    %v924 = vunpack.c.h.b16 %v690
    %v925 = vunpack.c.l.b16 %v691
    %v926 = vunpack.c.h.b16 %v691
    %v927 = vunpack.c.l.b16 %v692
    %v928 = vunpack.c.h.b16 %v692
    %v929 = vunpack.c.l.b16 %v693
    %v930 = vunpack.c.h.b16 %v693
    %v931 = vunpack.c.l.b16 %v694
    %v932 = vunpack.c.h.b16 %v694
    %v933 = vunpack.c.l.b16 %v695
    %v934 = vunpack.c.h.b16 %v695
    %v935 = vunpack.c.l.b16 %v696
    %v936 = vunpack.c.h.b16 %v696
    %v937 = vunpack.c.l.b16 %v697
    %v938 = vunpack.c.h.b16 %v697
    %v939 = vunpack.c.l.b16 %v698
    %v940 = vunpack.c.h.b16 %v698
    %v941 = vunpack.c.l.b16 %v699
    %v942 = vunpack.c.h.b16 %v699
    %v943 = vunpack.c.l.b16 %v700
    %v944 = vunpack.c.h.b16 %v700
    %v945 = vunpack.c.l.b16 %v701
    %v946 = vunpack.c.h.b16 %v701
    %v947 = vunpack.c.l.b16 %v702
    %v948 = vunpack.c.h.b16 %v702
    %v949 = vunpack.c.l.b16 %v703
    %v950 = vunpack.c.h.b16 %v703
    %v951 = vunpack.c.l.b16 %v704
    %v952 = vunpack.c.h.b16 %v704
    %v953 = vunpack.c.l.b16 %v705
    %v954 = vunpack.c.h.b16 %v705
    %v955 = vunpack.c.l.b16 %v706
    %v956 = vunpack.c.h.b16 %v706
    %v957 = vunpack.c.l.b16 %v707
    %v958 = vunpack.c.h.b16 %v707
    %v959 = vunpack.c.l.b16 %v708
    %v960 = vunpack.c.h.b16 %v708
    %v961 = vunpack.c.l.b16 %v709
    %v962 = vunpack.c.h.b16 %v709
    %v963 = vunpack.c.l.b16 %v710
    %v964 = vunpack.c.h.b16 %v710
    %v965 = vunpack.c.l.b16 %v711
    %v966 = vunpack.c.h.b16 %v711
    %v967 = vunpack.c.l.b16 %v712
    %v968 = vunpack.c.h.b16 %v712
    %v969 = vunpack.c.l.b16 %v713
    %v970 = vunpack.c.h.b16 %v713
    %v971 = vunpack.c.l.b16 %v714
    %v972 = vunpack.c.h.b16 %v714
    %v973 = vunpack.c.l.b16 %v715
    %v974 = vunpack.c.h.b16 %v715
    %v975 = vunpack.c.l.b16 %v716
    %v976 = vunpack.c.h.b16 %v716
    %v977 = vunpack.c.l.b16 %v717
    %v978 = vunpack.c.h.b16 %v717
    %v979 = vunpack.c.l.b16 %v718
    %v980 = vunpack.c.h.b16 %v718
    %v981 = vunpack.c.l.b16 %v719
    %v982 = vunpack.c.h.b16 %v719
    %v983 = vunpack.c.l.b16 %v720
    %v984 = vunpack.c.h.b16 %v720
    %v985 = vunpack.c.l.b16 %v721
    %v986 = vunpack.c.h.b16 %v721
    %v987 = vunpack.c.l.b16 %v722
    %v988 = vunpack.c.h.b16 %v722
    %v989 = vunpack.c.l.b16 %v723
    %v990 = vunpack.c.h.b16 %v723
    %v991 = vunpack.c.l.b16 %v724
    %v992 = vunpack.c.h.b16 %v724
    %v993 = vunpack.c.l.b16 %v725
    %v994 = vunpack.c.h.b16 %v725
    %v995 = vunpack.c.l.b16 %v726
    %v996 = vunpack.c.h.b16 %v726
    %v997 = vunpack.c.l.b16 %v727
    %v998 = vunpack.c.h.b16 %v727
    %v999 = vunpack.c.l.b16 %v728
    %v1000 = vunpack.c.h.b16 %v728
    %v1001 = vunpack.c.l.b16 %v729
    %v1002 = vunpack.c.h.b16 %v729
    %v1003 = vunpack.c.l.b16 %v730
    %v1004 = vunpack.c.h.b16 %v730
    %v1005 = vunpack.c.l.b16 %v731
    %v1006 = vunpack.c.h.b16 %v731
    %v1007 = vunpack.c.l.b16 %v732
    %v1008 = vunpack.c.h.b16 %v732
    %v1009 = vunpack.c.l.b16 %v733
    %v1010 = vunpack.c.h.b16 %v733
    %v1011 = vunpack.c.l.b16 %v734
    %v1012 = vunpack.c.h.b16 %v734
    %v1013 = vunpack.c.l.b16 %v735
    %v1014 = vunpack.c.h.b16 %v735
    %v1015 = vunpack.c.l.b16 %v736
    %v1016 = vunpack.c.h.b16 %v736
    %v1017 = vunpack.c.l.b16 %v737
    %v1018 = vunpack.c.h.b16 %v737
    %v1019 = vunpack.c.l.b16 %v738
    %v1020 = vunpack.c.h.b16 %v738
    %v1021 = vunpack.c.l.b16 %v739
    %v1022 = vunpack.c.h.b16 %v739
    %v1023 = vunpack.c.l.b16 %v740
    %v1024 = vunpack.c.h.b16 %v740
    %v1025 = vunpack.c.l.b16 %v741
    %v1026 = vunpack.c.h.b16 %v741
    %v1027 = vunpack.c.l.b16 %v742
    %v1028 = vunpack.c.h.b16 %v742
    %v1029 = vunpack.c.l.b16 %v743
    %v1030 = vunpack.c.h.b16 %v743
    %v1031 = vunpack.c.l.b16 %v744
    %v1032 = vunpack.c.h.b16 %v744
    %v1033 = vunpack.c.l.b16 %v745
    %v1034 = vunpack.c.h.b16 %v745
    %v1035 = vunpack.c.l.b16 %v746
    %v1036 = vunpack.c.h.b16 %v746
    %v1037 = vunpack.c.l.b16 %v747
    %v1038 = vunpack.c.h.b16 %v747
    %v1039 = vunpack.c.l.b16 %v748
    %v1040 = vunpack.c.h.b16 %v748
    %v1041 = vunpack.c.l.b16 %v749
    %v1042 = vunpack.c.h.b16 %v749
    %v1043 = vunpack.c.l.b16 %v750
    %v1044 = vunpack.c.h.b16 %v750
    %v1045 = vunpack.c.l.b16 %v751
    %v1046 = vunpack.c.h.b16 %v751
    %v1047 = vunpack.c.l.b16 %v752
    %v1048 = vunpack.c.h.b16 %v752
    %v1049 = vunpack.c.l.b16 %v753
    %v1050 = vunpack.c.h.b16 %v753
    %v1051 = vunpack.c.l.b16 %v754
    %v1052 = vunpack.c.h.b16 %v754
    %v1053 = vunpack.c.l.b16 %v755
    %v1054 = vunpack.c.h.b16 %v755
    %v1055 = vunpack.c.l.b16 %v756
    %v1056 = vunpack.c.h.b16 %v756
    %v1057 = vunpack.c.l.b16 %v757
    %v1058 = vunpack.c.h.b16 %v757
    %v1059 = vunpack.c.l.b16 %v758
    %v1060 = vunpack.c.h.b16 %v758
    %v1061 = vunpack.c.l.b16 %v759
    %v1062 = vunpack.c.h.b16 %v759
    %v1063 = vunpack.c.l.b16 %v760
    %v1064 = vunpack.c.h.b16 %v760
    %v1065 = vunpack.c.l.b16 %v761
    %v1066 = vunpack.c.h.b16 %v761
    %v1067 = vunpack.c.l.b16 %v762
    %v1068 = vunpack.c.h.b16 %v762
    %v1069 = vunpack.c.l.b16 %v763
    %v1070 = vunpack.c.h.b16 %v763
    %v1071 = vunpack.c.l.b16 %v764
    %v1072 = vunpack.c.h.b16 %v764
    %v1073 = vunpack.c.l.b16 %v765
    %v1074 = vunpack.c.h.b16 %v765
    %v1075 = vunpack.c.l.b16 %v766
    %v1076 = vunpack.c.h.b16 %v766
    %v1077 = vunpack.c.l.b16 %v767
    %v1078 = vunpack.c.h.b16 %v767
    %v1079 = vunpack.c.l.b16 %v768
    %v1080 = vunpack.c.h.b16 %v768
    %v1081 = vunpack.c.l.b16 %v769
    %v1082 = vunpack.c.h.b16 %v769
    %v1083 = vunpack.c.l.b16 %v770
    %v1084 = vunpack.c.h.b16 %v770
    %v1085 = vunpack.c.l.b16 %v771
    %v1086 = vunpack.c.h.b16 %v771
    %v1087 = vunpack.c.l.b16 %v772
    %v1088 = vunpack.c.h.b16 %v772
    %v1089 = vunpack.c.l.b16 %v773
    %v1090 = vunpack.c.h.b16 %v773
    %v1091 = vunpack.c.l.b16 %v774
    %v1092 = vunpack.c.h.b16 %v774
    %v1093 = vunpack.c.l.b16 %v775
    %v1094 = vunpack.c.h.b16 %v775
    %v1095 = vunpack.c.l.b16 %v776
    %v1096 = vunpack.c.h.b16 %v776
    %v1097 = vunpack.c.l.b16 %v777
    %v1098 = vunpack.c.h.b16 %v777
    %v1099 = vunpack.c.l.b16 %v778
    %v1100 = vunpack.c.h.b16 %v778
    %v1101 = vunpack.c.l.b16 %v779
    %v1102 = vunpack.c.h.b16 %v779
    %v1103 = vpack.c.b16 %v917, %v911
    %v1104 = vpack.c.b16 %v918, %v912
    %v1105 = vpack.c.b16 %v919, %v913
    %v1106 = vpack.c.b16 %v920, %v914
    %v1107 = vpack.c.b16 %v921, %v915
    %v1108 = vpack.c.b16 %v922, %v916
    %v1109 = vpack.c.b16 %v929, %v923
    %v1110 = vpack.c.b16 %v930, %v924
    %v1111 = vpack.c.b16 %v931, %v925
    %v1112 = vpack.c.b16 %v932, %v926
    %v1113 = vpack.c.b16 %v933, %v927
    %v1114 = vpack.c.b16 %v934, %v928
    %v1115 = vpack.c.b16 %v941, %v935
    %v1116 = vpack.c.b16 %v942, %v936
    %v1117 = vpack.c.b16 %v943, %v937
    %v1118 = vpack.c.b16 %v944, %v938
    %v1119 = vpack.c.b16 %v945, %v939
    %v1120 = vpack.c.b16 %v946, %v940
    %v1121 = vpack.c.b16 %v953, %v947
    %v1122 = vpack.c.b16 %v954, %v948
    %v1123 = vpack.c.b16 %v955, %v949
    %v1124 = vpack.c.b16 %v956, %v950
    %v1125 = vpack.c.b16 %v957, %v951
    %v1126 = vpack.c.b16 %v958, %v952
    %v1127 = vpack.c.b16 %v965, %v959
    %v1128 = vpack.c.b16 %v966, %v960
    %v1129 = vpack.c.b16 %v967, %v961
    %v1130 = vpack.c.b16 %v968, %v962
    %v1131 = vpack.c.b16 %v969, %v963
    %v1132 = vpack.c.b16 %v970, %v964
    %v1133 = vpack.c.b16 %v977, %v971
    %v1134 = vpack.c.b16 %v978, %v972
    %v1135 = vpack.c.b16 %v979, %v973
    %v1136 = vpack.c.b16 %v980, %v974
    %v1137 = vpack.c.b16 %v981, %v975
    %v1138 = vpack.c.b16 %v982, %v976
    %v1139 = vpack.c.b16 %v989, %v983
    %v1140 = vpack.c.b16 %v990, %v984
    %v1141 = vpack.c.b16 %v991, %v985
    %v1142 = vpack.c.b16 %v992, %v986
    %v1143 = vpack.c.b16 %v993, %v987
    %v1144 = vpack.c.b16 %v994, %v988
    %v1145 = vpack.c.b16 %v1001, %v995
    %v1146 = vpack.c.b16 %v1002, %v996
    %v1147 = vpack.c.b16 %v1003, %v997
    %v1148 = vpack.c.b16 %v1004, %v998
    %v1149 = vpack.c.b16 %v1005, %v999
    %v1150 = vpack.c.b16 %v1006, %v1000
    %v1151 = vpack.c.b16 %v1013, %v1007
    %v1152 = vpack.c.b16 %v1014, %v1008
    %v1153 = vpack.c.b16 %v1015, %v1009
    %v1154 = vpack.c.b16 %v1016, %v1010
    %v1155 = vpack.c.b16 %v1017, %v1011
    %v1156 = vpack.c.b16 %v1018, %v1012
    %v1157 = vpack.c.b16 %v1025, %v1019
    %v1158 = vpack.c.b16 %v1026, %v1020
    %v1159 = vpack.c.b16 %v1027, %v1021
    %v1160 = vpack.c.b16 %v1028, %v1022
    %v1161 = vpack.c.b16 %v1029, %v1023
    %v1162 = vpack.c.b16 %v1030, %v1024
    %v1163 = vpack.c.b16 %v1037, %v1031
    %v1164 = vpack.c.b16 %v1038, %v1032
    %v1165 = vpack.c.b16 %v1039, %v1033
    %v1166 = vpack.c.b16 %v1040, %v1034
    %v1167 = vpack.c.b16 %v1041, %v1035
    %v1168 = vpack.c.b16 %v1042, %v1036
    %v1169 = vpack.c.b16 %v1049, %v1043
    %v1170 = vpack.c.b16 %v1050, %v1044
    %v1171 = vpack.c.b16 %v1051, %v1045
    %v1172 = vpack.c.b16 %v1052, %v1046
    %v1173 = vpack.c.b16 %v1053, %v1047
    %v1174 = vpack.c.b16 %v1054, %v1048
    %v1175 = vpack.c.b16 %v1061, %v1055
    %v1176 = vpack.c.b16 %v1062, %v1056
    %v1177 = vpack.c.b16 %v1063, %v1057
    %v1178 = vpack.c.b16 %v1064, %v1058
    %v1179 = vpack.c.b16 %v1065, %v1059
    %v1180 = vpack.c.b16 %v1066, %v1060
    %v1181 = vpack.c.b16 %v1073, %v1067
    %v1182 = vpack.c.b16 %v1074, %v1068
    %v1183 = vpack.c.b16 %v1075, %v1069
    %v1184 = vpack.c.b16 %v1076, %v1070
    %v1185 = vpack.c.b16 %v1077, %v1071
    %v1186 = vpack.c.b16 %v1078, %v1072
    %v1187 = vpack.c.b16 %v1085, %v1079
    %v1188 = vpack.c.b16 %v1086, %v1080
    %v1189 = vpack.c.b16 %v1087, %v1081
    %v1190 = vpack.c.b16 %v1088, %v1082
    %v1191 = vpack.c.b16 %v1089, %v1083
    %v1192 = vpack.c.b16 %v1090, %v1084
    %v1193 = vpack.c.b16 %v1097, %v1091
    %v1194 = vpack.c.b16 %v1098, %v1092
    %v1195 = vpack.c.b16 %v1099, %v1093
    %v1196 = vpack.c.b16 %v1100, %v1094
    %v1197 = vpack.c.b16 %v1101, %v1095
    %v1198 = vpack.c.b16 %v1102, %v1096
    %1295 = vmatprep.subr.bf16.mxu0 %v1146
    %1296 = vmatpush1.bf16.msra.mxu0 %v1145
    %1297 = vmatprep.subr.bf16.mxu0 %v1140
    %1298 = vmatpush1.bf16.msra.mxu0 %v1139
    %1299 = vmatprep.subr.bf16.mxu0 %v1134
    %1300 = vmatpush1.bf16.msra.mxu0 %v1133
    %1301 = vmatprep.subr.bf16.mxu0 %v1128
    %1302 = vmatpush1.bf16.msra.mxu0 %v1127
    %1303 = vmatprep.subr.bf16.mxu0 %v1122
    %1304 = vmatpush1.bf16.msra.mxu0 %v1121
    %1305 = vmatprep.subr.bf16.mxu0 %v1116
    %1306 = vmatpush1.bf16.msra.mxu0 %v1115
    %1307 = vmatprep.subr.bf16.mxu0 %v1110
    %1308 = vmatpush1.bf16.msra.mxu0 %v1109
    %1309 = vmatprep.subr.bf16.mxu0 %v1104
    %1310 = vmatpush1.bf16.msra.mxu0 %v1103
    %1311 = vmatprep.subr.bf16.mxu0 %v1194
    %1312 = vmatpush2.bf16.msra.mxu0 %v1193
    %1313 = vmatprep.subr.bf16.mxu0 %v1188
    %1314 = vmatpush2.bf16.msra.mxu0 %v1187
    %1315 = vmatprep.subr.bf16.mxu0 %v1182
    %1316 = vmatpush2.bf16.msra.mxu0 %v1181
    %1317 = vmatprep.subr.bf16.mxu0 %v1176
    %1318 = vmatpush2.bf16.msra.mxu0 %v1175
    %1319 = vmatprep.subr.bf16.mxu0 %v1170
    %1320 = vmatpush2.bf16.msra.mxu0 %v1169
    %1321 = vmatprep.subr.bf16.mxu0 %v1164
    %1322 = vmatpush2.bf16.msra.mxu0 %v1163
    %1323 = vmatprep.subr.bf16.mxu0 %v1158
    %1324 = vmatpush2.bf16.msra.mxu0 %v1157
    %1325 = vmatprep.subr.bf16.mxu0 %v1152
    %1326 = vmatpush2.bf16.msra.mxu0 %v1151
    %1327 = vmatprep.mubr.bf16.mxu0 %v683
    %1328 = vmatmul.mubr.bf16.gmra.mxu0 %v682
    %v1329 = vpop.f32.mrf.mxu0
    %v1330 = vadd.f32 %v788, %v1329
    %v1331 = vpop.f32.mrf.mxu0
    %v1332 = vadd.f32 %v792, %v1331
    %v1333 = vpop.f32.mrf.mxu0
    %v1334 = vpop.f32.mrf.mxu0
    %1335 = vdwg.mxu0
    %1336 = vmatprep.subr.bf16.mxu0 %v1148
    %1337 = vmatpush1.bf16.msra.mxu0 %v1147
    %1338 = vmatprep.subr.bf16.mxu0 %v1142
    %1339 = vmatpush1.bf16.msra.mxu0 %v1141
    %1340 = vmatprep.subr.bf16.mxu0 %v1136
    %1341 = vmatpush1.bf16.msra.mxu0 %v1135
    %1342 = vmatprep.subr.bf16.mxu0 %v1130
    %1343 = vmatpush1.bf16.msra.mxu0 %v1129
    %1344 = vmatprep.subr.bf16.mxu0 %v1124
    %1345 = vmatpush1.bf16.msra.mxu0 %v1123
    %1346 = vmatprep.subr.bf16.mxu0 %v1118
    %1347 = vmatpush1.bf16.msra.mxu0 %v1117
    %1348 = vmatprep.subr.bf16.mxu0 %v1112
    %1349 = vmatpush1.bf16.msra.mxu0 %v1111
    %1350 = vmatprep.subr.bf16.mxu0 %v1106
    %1351 = vmatpush1.bf16.msra.mxu0 %v1105
    %1352 = vmatprep.subr.bf16.mxu0 %v1196
    %1353 = vmatpush2.bf16.msra.mxu0 %v1195
    %1354 = vmatprep.subr.bf16.mxu0 %v1190
    %1355 = vmatpush2.bf16.msra.mxu0 %v1189
    %1356 = vmatprep.subr.bf16.mxu0 %v1184
    %1357 = vmatpush2.bf16.msra.mxu0 %v1183
    %1358 = vmatprep.subr.bf16.mxu0 %v1178
    %1359 = vmatpush2.bf16.msra.mxu0 %v1177
    %1360 = vmatprep.subr.bf16.mxu0 %v1172
    %1361 = vmatpush2.bf16.msra.mxu0 %v1171
    %1362 = vmatprep.subr.bf16.mxu0 %v1166
    %1363 = vmatpush2.bf16.msra.mxu0 %v1165
    %1364 = vmatprep.subr.bf16.mxu0 %v1160
    %1365 = vmatpush2.bf16.msra.mxu0 %v1159
    %1366 = vmatprep.subr.bf16.mxu0 %v1154
    %1367 = vmatpush2.bf16.msra.mxu0 %v1153
    %1368 = vmatprep.mubr.bf16.mxu0 %v683
    %1369 = vmatmul.mubr.bf16.gmra.mxu0 %v682
    %v1370 = vpop.f32.mrf.mxu0
    %v1371 = vadd.f32 %v796, %v1370
    %v1372 = vpop.f32.mrf.mxu0
    %v1373 = vadd.f32 %v800, %v1372
    %v1374 = vpop.f32.mrf.mxu0
    %v1375 = vpop.f32.mrf.mxu0
    %1376 = vdwg.mxu0
    %1377 = vmatprep.subr.bf16.mxu0 %v1150
    %1378 = vmatpush1.bf16.msra.mxu0 %v1149
    %1379 = vmatprep.subr.bf16.mxu0 %v1144
    %1380 = vmatpush1.bf16.msra.mxu0 %v1143
    %1381 = vmatprep.subr.bf16.mxu0 %v1138
    %1382 = vmatpush1.bf16.msra.mxu0 %v1137
    %1383 = vmatprep.subr.bf16.mxu0 %v1132
    %1384 = vmatpush1.bf16.msra.mxu0 %v1131
    %1385 = vmatprep.subr.bf16.mxu0 %v1126
    %1386 = vmatpush1.bf16.msra.mxu0 %v1125
    %1387 = vmatprep.subr.bf16.mxu0 %v1120
    %1388 = vmatpush1.bf16.msra.mxu0 %v1119
    %1389 = vmatprep.subr.bf16.mxu0 %v1114
    %1390 = vmatpush1.bf16.msra.mxu0 %v1113
    %1391 = vmatprep.subr.bf16.mxu0 %v1108
    %1392 = vmatpush1.bf16.msra.mxu0 %v1107
    %1393 = vmatprep.subr.bf16.mxu0 %v1198
    %1394 = vmatpush2.bf16.msra.mxu0 %v1197
    %1395 = vmatprep.subr.bf16.mxu0 %v1192
    %1396 = vmatpush2.bf16.msra.mxu0 %v1191
    %1397 = vmatprep.subr.bf16.mxu0 %v1186
    %1398 = vmatpush2.bf16.msra.mxu0 %v1185
    %1399 = vmatprep.subr.bf16.mxu0 %v1180
    %1400 = vmatpush2.bf16.msra.mxu0 %v1179
    %1401 = vmatprep.subr.bf16.mxu0 %v1174
    %1402 = vmatpush2.bf16.msra.mxu0 %v1173
    %1403 = vmatprep.subr.bf16.mxu0 %v1168
    %1404 = vmatpush2.bf16.msra.mxu0 %v1167
    %1405 = vmatprep.subr.bf16.mxu0 %v1162
    %1406 = vmatpush2.bf16.msra.mxu0 %v1161
    %1407 = vmatprep.subr.bf16.mxu0 %v1156
    %1408 = vmatpush2.bf16.msra.mxu0 %v1155
    %1409 = vmatprep.mubr.bf16.mxu0 %v683
    %1410 = vmatmul.mubr.bf16.gmra.mxu0 %v682
    %v1411 = vpop.f32.mrf.mxu0
    %v1412 = vadd.f32 %v804, %v1411
    %v1413 = vpop.f32.mrf.mxu0
    %v1414 = vadd.f32 %v808, %v1413
    %v1415 = vpop.f32.mrf.mxu0
    %v1416 = vpop.f32.mrf.mxu0
    %1417 = vdwg.mxu0
    %v1418 = vld [vmem:[%s1] sm:$0x3]
    %v1419 = vpack.c.bf16 %v1418, %v1418
    %v1420 = vld [vmem:[#allocation7] sm:$0x7]
    %v1421 = vld [vmem:[%s15 + $0x2] ss:$0 sm:$0xff]
    %vm1422 = vcmask 48128
    %v1424 = vsel %vm1422, %v1419, 0
    %vm1426 = vcmask 1042432
    %v1428 = vsel %vm1426, %v1420, 0
    %1430 = vmatprep.subr.bf16.mxu0 0
    %1431 = vmatpush1.bf16.msra.mxu0 0
    %1432 = vmatprep.subr.bf16.mxu0 0
    %1433 = vmatpush1.bf16.msra.mxu0 0
    %1434 = vmatprep.subr.bf16.mxu0 0
    %1435 = vmatpush1.bf16.msra.mxu0 0
    %1436 = vmatprep.subr.bf16.mxu0 0
    %1437 = vmatpush1.bf16.msra.mxu0 0
    %1438 = vmatprep.subr.bf16.mxu0 0
    %1439 = vmatpush1.bf16.msra.mxu0 0
    %1440 = vmatprep.subr.bf16.mxu0 0
    %1441 = vmatpush1.bf16.msra.mxu0 0
    %1442 = vmatprep.subr.bf16.mxu0 0
    %1443 = vmatpush1.bf16.msra.mxu0 0
    %1444 = vmatprep.subr.bf16.mxu0 0
    %1445 = vmatpush1.bf16.msra.mxu0 %v1428
    %1446 = vmatprep.subr.bf16.mxu0 0
    %1447 = vmatpush2.bf16.msra.mxu0 0
    %1448 = vmatprep.subr.bf16.mxu0 0
    %1449 = vmatpush2.bf16.msra.mxu0 0
    %1450 = vmatprep.subr.bf16.mxu0 0
    %1451 = vmatpush2.bf16.msra.mxu0 0
    %1452 = vmatprep.subr.bf16.mxu0 0
    %1453 = vmatpush2.bf16.msra.mxu0 0
    %1454 = vmatprep.subr.bf16.mxu0 0
    %1455 = vmatpush2.bf16.msra.mxu0 0
    %1456 = vmatprep.subr.bf16.mxu0 0
    %1457 = vmatpush2.bf16.msra.mxu0 0
    %1458 = vmatprep.subr.bf16.mxu0 0
    %1459 = vmatpush2.bf16.msra.mxu0 0
    %1460 = vmatprep.subr.bf16.mxu0 0
    %1461 = vmatpush2.bf16.msra.mxu0 0
    %1462 = vmatprep.mubr.bf16.mxu0 0
    %1463 = vmatmul.mubr.bf16.gmra.mxu0 %v1424
    %v1464 = vpop.f32.mrf.mxu0
    %v1465 = vadd.f32 %v1421, %v1464
    %v1466 = vpop.f32.mrf.mxu0
    %v1467 = vpop.f32.mrf.mxu0
    %v1468 = vpop.f32.mrf.mxu0
    %1469 = vdwg.mxu0
    %vm1470 = vcmp.gt.f32.partialorder %v1465, 0.0
    %v1471 = vmin.f32 %v1465, 0.0
    %v1472 = vmul.f32 %v1471, 1.442695
    %v1473 = vpow.pop %v1472
    %v1474 = vsub.f32 %v1473, 1.0
    %v1475 = vmul.f32 %v1474, 0.5
    %v1476 = vsel %vm1470, %v1465, %v1475
    %v1477 = vpack.c.bf16 %v1476, %v1476
    %v1478 = vld [vmem:[#allocation8] sm:$0xf]
    %v1479 = vld [vmem:[#allocation8 + $0x4] sm:$0xf]
    %v1480 = vld [vmem:[#allocation8 + $0x8] sm:$0xf]
    %v1481 = vld [vmem:[#allocation8 + $0xc] sm:$0xf]
    %v1482 = vld [vmem:[%s15 + $0x3] ss:$0 sm:$0xff]
    %v1487 = vunpack.c.l.b16 %v1478
    %v1488 = vunpack.c.l.b16 %v1479
    %v1489 = vunpack.c.l.b16 %v1480
    %v1490 = vunpack.c.l.b16 %v1481
    %v1491 = vpack.c.b16 %v1488, %v1487
    %v1492 = vpack.c.b16 %v1490, %v1489
    %vm1495 = vcmask 261120
    %v1497 = vsel %vm1495, %v1477, 0
    %1499 = vmatprep.subr.bf16.mxu0 0
    %1500 = vmatpush1.bf16.msra.mxu0 0
    %1501 = vmatprep.subr.bf16.mxu0 0
    %1502 = vmatpush1.bf16.msra.mxu0 0
    %1503 = vmatprep.subr.bf16.mxu0 0
    %1504 = vmatpush1.bf16.msra.mxu0 0
    %1505 = vmatprep.subr.bf16.mxu0 0
    %1506 = vmatpush1.bf16.msra.mxu0 0
    %1507 = vmatprep.subr.bf16.mxu0 0
    %1508 = vmatpush1.bf16.msra.mxu0 0
    %1509 = vmatprep.subr.bf16.mxu0 0
    %1510 = vmatpush1.bf16.msra.mxu0 0
    %1511 = vmatprep.subr.bf16.mxu0 0
    %1512 = vmatpush1.bf16.msra.mxu0 %v1492
    %1513 = vmatprep.subr.bf16.mxu0 0
    %1514 = vmatpush1.bf16.msra.mxu0 %v1491
    %1515 = vmatprep.subr.bf16.mxu0 0
    %1516 = vmatpush2.bf16.msra.mxu0 0
    %1517 = vmatprep.subr.bf16.mxu0 0
    %1518 = vmatpush2.bf16.msra.mxu0 0
    %1519 = vmatprep.subr.bf16.mxu0 0
    %1520 = vmatpush2.bf16.msra.mxu0 0
    %1521 = vmatprep.subr.bf16.mxu0 0
    %1522 = vmatpush2.bf16.msra.mxu0 0
    %1523 = vmatprep.subr.bf16.mxu0 0
    %1524 = vmatpush2.bf16.msra.mxu0 0
    %1525 = vmatprep.subr.bf16.mxu0 0
    %1526 = vmatpush2.bf16.msra.mxu0 0
    %1527 = vmatprep.subr.bf16.mxu0 0
    %1528 = vmatpush2.bf16.msra.mxu0 0
    %1529 = vmatprep.subr.bf16.mxu0 0
    %1530 = vmatpush2.bf16.msra.mxu0 0
    %1531 = vmatprep.mubr.bf16.mxu0 0
    %1532 = vmatmul.mubr.bf16.gmra.mxu0 %v1497
    %v1533 = vpop.f32.mrf.mxu0
    %v1534 = vadd.f32 %v1482, %v1533
    %v1535 = vpop.f32.mrf.mxu0
    %v1536 = vpop.f32.mrf.mxu0
    %v1537 = vpop.f32.mrf.mxu0
    %1538 = vdwg.mxu0
    %v1539 = vsub.f32 0.0, %v1534
    %v1540 = vmul.f32 %v1539, 1.442695
    %v1541 = vpow.pop %v1540
    %v1542 = vadd.f32 %v1541, 1.0
    %v1543 = vrcp.pop %v1542
    %v1544 = vmul.f32 %v1534, %v1543
    %v1545 = vpack.c.bf16 %v1544, %v1544
    %v1546 = vld [vmem:[#allocation10] sm:$0xf]
    %v1547 = vld [vmem:[#allocation10 + $0x4] sm:$0xf]
    %v1548 = vld [vmem:[#allocation10 + $0x8] sm:$0xf]
    %v1549 = vld [vmem:[#allocation10 + $0xc] sm:$0xf]
    %v1550 = vld [vmem:[#allocation10 + $0x10] sm:$0xf]
    %v1551 = vld [vmem:[#allocation10 + $0x14] sm:$0xf]
    %v1552 = vld [vmem:[#allocation10 + $0x18] sm:$0xf]
    %v1553 = vld [vmem:[#allocation10 + $0x1c] sm:$0xf]
    %v1554 = vld [vmem:[%s15 + $0x4] ss:$0 sm:$0xff]
    %v1563 = vunpack.c.l.b16 %v1546
    %v1564 = vunpack.c.l.b16 %v1547
    %v1565 = vunpack.c.l.b16 %v1548
    %v1566 = vunpack.c.l.b16 %v1549
    %v1567 = vunpack.c.l.b16 %v1550
    %v1568 = vunpack.c.l.b16 %v1551
    %v1569 = vunpack.c.l.b16 %v1552
    %v1570 = vunpack.c.l.b16 %v1553
    %v1571 = vpack.c.b16 %v1564, %v1563
    %v1572 = vpack.c.b16 %v1566, %v1565
    %v1573 = vpack.c.b16 %v1568, %v1567
    %v1574 = vpack.c.b16 %v1570, %v1569
    %vm1579 = vcmask 523264
    %v1581 = vsel %vm1579, %v1545, 0
    %1583 = vmatprep.subr.bf16.mxu0 0
    %1584 = vmatpush1.bf16.msra.mxu0 0
    %1585 = vmatprep.subr.bf16.mxu0 0
    %1586 = vmatpush1.bf16.msra.mxu0 0
    %1587 = vmatprep.subr.bf16.mxu0 0
    %1588 = vmatpush1.bf16.msra.mxu0 0
    %1589 = vmatprep.subr.bf16.mxu0 0
    %1590 = vmatpush1.bf16.msra.mxu0 0
    %1591 = vmatprep.subr.bf16.mxu0 0
    %1592 = vmatpush1.bf16.msra.mxu0 %v1574
    %1593 = vmatprep.subr.bf16.mxu0 0
    %1594 = vmatpush1.bf16.msra.mxu0 %v1573
    %1595 = vmatprep.subr.bf16.mxu0 0
    %1596 = vmatpush1.bf16.msra.mxu0 %v1572
    %1597 = vmatprep.subr.bf16.mxu0 0
    %1598 = vmatpush1.bf16.msra.mxu0 %v1571
    %1599 = vmatprep.subr.bf16.mxu0 0
    %1600 = vmatpush2.bf16.msra.mxu0 0
    %1601 = vmatprep.subr.bf16.mxu0 0
    %1602 = vmatpush2.bf16.msra.mxu0 0
    %1603 = vmatprep.subr.bf16.mxu0 0
    %1604 = vmatpush2.bf16.msra.mxu0 0
    %1605 = vmatprep.subr.bf16.mxu0 0
    %1606 = vmatpush2.bf16.msra.mxu0 0
    %1607 = vmatprep.subr.bf16.mxu0 0
    %1608 = vmatpush2.bf16.msra.mxu0 0
    %1609 = vmatprep.subr.bf16.mxu0 0
    %1610 = vmatpush2.bf16.msra.mxu0 0
    %1611 = vmatprep.subr.bf16.mxu0 0
    %1612 = vmatpush2.bf16.msra.mxu0 0
    %1613 = vmatprep.subr.bf16.mxu0 0
    %1614 = vmatpush2.bf16.msra.mxu0 0
    %1615 = vmatprep.mubr.bf16.mxu0 0
    %1616 = vmatmul.mubr.bf16.gmra.mxu0 %v1581
    %v1617 = vpop.f32.mrf.mxu0
    %v1618 = vadd.f32 %v1554, %v1617
    %v1619 = vpop.f32.mrf.mxu0
    %v1620 = vpop.f32.mrf.mxu0
    %v1621 = vpop.f32.mrf.mxu0
    %1622 = vdwg.mxu0
    %vm1623 = vcmp.gt.f32.partialorder %v1618, 0.0
    %v1624 = vmul.f32 %v1618, 0.01
    %v1625 = vsel %vm1623, %v1618, %v1624
    %v1626 = vld [vmem:[%s15 + $0x5] ss:$0 sm:$0xff]
    %v1628 = vrot.slane %v1373, 6
    %v1631 = vrot.slane %v1625, 4
    %vm1633 = vcmask 1041408
    %v1634 = vsel %vm1633, %v1330, %v1628
    %vm1635 = vcmask 1043456
    %v1636 = vsel %vm1635, %v1634, %v1631
    %v1637 = vpack.c.bf16 %v1636, %v1636
    %v1638 = vld [vmem:[%s7] sm:$0xf]
    %v1639 = vld [vmem:[%s7 + $0x4] sm:$0xf]
    %v1640 = vld [vmem:[%s7 + $0x8] sm:$0xf]
    %v1641 = vld [vmem:[%s7 + $0xc] sm:$0xf]
    %v1642 = vld [vmem:[%s7 + $0x10] sm:$0xf]
    %v1643 = vld [vmem:[%s7 + $0x14] sm:$0xf]
    %v1644 = vld [vmem:[%s7 + $0x18] sm:$0xf]
    %v1645 = vld [vmem:[%s7 + $0x1c] sm:$0xf]
    %v1646 = vld [vmem:[%s7 + $0x20] sm:$0xf]
    %v1647 = vld [vmem:[%s7 + $0x24] sm:$0xf]
    %v1648 = vld [vmem:[%s7 + $0x28] sm:$0xf]
    %v1649 = vld [vmem:[%s7 + $0x2c] sm:$0xf]
    %v1650 = vld [vmem:[%s7 + $0x30] sm:$0xf]
    %v1651 = vld [vmem:[%s7 + $0x34] sm:$0xf]
    %v1652 = vld [vmem:[%s7 + $0x38] sm:$0xf]
    %v1653 = vld [vmem:[%s7 + $0x3c] sm:$0xf]
    %v1670 = vunpack.c.l.b16 %v1638
    %v1671 = vunpack.c.l.b16 %v1639
    %v1672 = vunpack.c.l.b16 %v1640
    %v1673 = vunpack.c.l.b16 %v1641
    %v1674 = vunpack.c.l.b16 %v1642
    %v1675 = vunpack.c.l.b16 %v1643
    %v1676 = vunpack.c.l.b16 %v1644
    %v1677 = vunpack.c.l.b16 %v1645
    %v1678 = vunpack.c.l.b16 %v1646
    %v1679 = vunpack.c.l.b16 %v1647
    %v1680 = vunpack.c.l.b16 %v1648
    %v1681 = vunpack.c.l.b16 %v1649
    %v1682 = vunpack.c.l.b16 %v1650
    %v1683 = vunpack.c.l.b16 %v1651
    %v1684 = vunpack.c.l.b16 %v1652
    %v1685 = vunpack.c.l.b16 %v1653
    %v1686 = vpack.c.b16 %v1671, %v1670
    %v1687 = vpack.c.b16 %v1673, %v1672
    %v1688 = vpack.c.b16 %v1675, %v1674
    %v1689 = vpack.c.b16 %v1677, %v1676
    %v1690 = vpack.c.b16 %v1679, %v1678
    %v1691 = vpack.c.b16 %v1681, %v1680
    %v1692 = vpack.c.b16 %v1683, %v1682
    %v1693 = vpack.c.b16 %v1685, %v1684
    %1702 = vmatprep.subr.bf16.mxu0 0
    %1703 = vmatpush1.bf16.msra.mxu0 %v1693
    %1704 = vmatprep.subr.bf16.mxu0 0
    %1705 = vmatpush1.bf16.msra.mxu0 %v1692
    %1706 = vmatprep.subr.bf16.mxu0 0
    %1707 = vmatpush1.bf16.msra.mxu0 %v1691
    %1708 = vmatprep.subr.bf16.mxu0 0
    %1709 = vmatpush1.bf16.msra.mxu0 %v1690
    %1710 = vmatprep.subr.bf16.mxu0 0
    %1711 = vmatpush1.bf16.msra.mxu0 %v1689
    %1712 = vmatprep.subr.bf16.mxu0 0
    %1713 = vmatpush1.bf16.msra.mxu0 %v1688
    %1714 = vmatprep.subr.bf16.mxu0 0
    %1715 = vmatpush1.bf16.msra.mxu0 %v1687
    %1716 = vmatprep.subr.bf16.mxu0 0
    %1717 = vmatpush1.bf16.msra.mxu0 %v1686
    %1718 = vmatprep.subr.bf16.mxu0 0
    %1719 = vmatpush2.bf16.msra.mxu0 0
    %1720 = vmatprep.subr.bf16.mxu0 0
    %1721 = vmatpush2.bf16.msra.mxu0 0
    %1722 = vmatprep.subr.bf16.mxu0 0
    %1723 = vmatpush2.bf16.msra.mxu0 0
    %1724 = vmatprep.subr.bf16.mxu0 0
    %1725 = vmatpush2.bf16.msra.mxu0 0
    %1726 = vmatprep.subr.bf16.mxu0 0
    %1727 = vmatpush2.bf16.msra.mxu0 0
    %1728 = vmatprep.subr.bf16.mxu0 0
    %1729 = vmatpush2.bf16.msra.mxu0 0
    %1730 = vmatprep.subr.bf16.mxu0 0
    %1731 = vmatpush2.bf16.msra.mxu0 0
    %1732 = vmatprep.subr.bf16.mxu0 0
    %1733 = vmatpush2.bf16.msra.mxu0 0
    %1734 = vmatprep.mubr.bf16.mxu0 0
    %1735 = vmatmul.mubr.bf16.gmra.mxu0 %v1637
    %v1736 = vpop.f32.mrf.mxu0
    %v1737 = vadd.f32 0.0, %v1736
    %v1738 = vpop.f32.mrf.mxu0
    %v1739 = vpop.f32.mrf.mxu0
    %v1740 = vpop.f32.mrf.mxu0
    %1741 = vdwg.mxu0
    %1743 = vrot.lane.b32.xlu0 %v1737, 64
    %v1744 = vpop.permute.xlu0 %1743
    %v1746 = vrot.slane %v1737, 2
    %1747 = vrot.lane.b32.xlu0 %v1746, 65
    %v1748 = vpop.permute.xlu0 %1747
    %v1750 = vrot.slane %v1737, 4
    %1751 = vrot.lane.b32.xlu0 %v1750, 66
    %v1752 = vpop.permute.xlu0 %1751
    %vm1754 = vcmask 7168
    %v1755 = vsel %vm1754, %v1744, %v1748
    %vm1756 = vcmask 15360
    %v1757 = vsel %vm1756, %v1755, %v1752
    %v1759 = vmax.f32 %v1737, %v1746
    %v1761 = vmax.f32 %v1759, %v1750
    %1763 = vrot.lane.b32.xlu0 %v1761, 1
    %v1764 = vpop.permute.xlu0 %1763
    %v1766 = vadd.f32 %v1737, %v1764
    %vm1767 = vcmp.gt.f32.partialorder %v1766, 0.0
    %v1768 = vmul.f32 %v1766, 0.2
    %v1769 = vsel %vm1767, %v1766, %v1768
    %1770 = vset.pattern.permute.xlu0 65
    %1771 = vperm.xlu0 %1770, %v1737
    %v1772 = vpop.permute.xlu0 %1771
    %v1774 = vadd.f32 %v1772, %v1757
    %vm1775 = vcmp.gt.f32.partialorder %v1774, 0.0
    %v1776 = vmul.f32 %v1774, 0.2
    %v1777 = vsel %vm1775, %v1774, %v1776
    %1779 = vset.pattern.permute.xlu0 65
    %1780 = vperm.xlu0 %1779, %v1769
    %v1781 = vpop.permute.xlu0 %1780
    %v1783 = vsub.f32 %v1777, %v1781
    %v1784 = vmul.f32 %v1783, 1.442695
    %v1785 = vpow.pop %v1784
    %1787 = vset.pattern.permute.xlu0 0
    %1788 = vperm.xlu0 %1787, %v1785
    %v1789 = vpop.permute.xlu0 %1788
    %v1791 = vmul.f32 %v1789, %v1737
    %1792 = vset.pattern.permute.xlu0 1
    %1793 = vperm.xlu0 %1792, %v1785
    %v1794 = vpop.permute.xlu0 %1793
    %v1796 = vmul.f32 %v1794, %v1746
    %v1797 = vadd.f32 %v1791, %v1796
    %1798 = vrot.lane.b32.xlu0 %v1785, 127
    %v1799 = vpop.permute.xlu0 %1798
    %v1801 = vadd.f32 %v1785, %v1799
    %1802 = vset.pattern.permute.xlu0 2
    %1803 = vperm.xlu0 %1802, %v1785
    %v1804 = vpop.permute.xlu0 %1803
    %v1806 = vmul.f32 %v1804, %v1750
    %v1807 = vadd.f32 %v1797, %v1806
    %1808 = vrot.lane.b32.xlu0 %v1785, 126
    %v1809 = vpop.permute.xlu0 %1808
    %v1811 = vadd.f32 %v1801, %v1809
    %v1812 = vrcp.pop %v1811
    %1814 = vset.pattern.permute.xlu0 0
    %1815 = vperm.xlu0 %1814, %v1812
    %v1816 = vpop.permute.xlu0 %1815
    %v1818 = vmul.f32 %v1807, %v1816
    %v1819 = vadd.f32 %v1818, %v1626
    %v1820 = vrot.slane %v1761, 6
    %1821 = vrot.lane.b32.xlu0 %v1820, 1
    %v1822 = vpop.permute.xlu0 %1821
    %v1824 = vadd.f32 %v1737, %v1822
    %vm1825 = vcmp.gt.f32.partialorder %v1824, 0.0
    %v1826 = vmul.f32 %v1824, 0.2
    %v1827 = vsel %vm1825, %v1824, %v1826
    %v1829 = vrot.slane %v1757, 6
    %v1831 = vadd.f32 %v1772, %v1829
    %vm1832 = vcmp.gt.f32.partialorder %v1831, 0.0
    %v1833 = vmul.f32 %v1831, 0.2
    %v1834 = vsel %vm1832, %v1831, %v1833
    %1836 = vset.pattern.permute.xlu0 65
    %1837 = vperm.xlu0 %1836, %v1827
    %v1838 = vpop.permute.xlu0 %1837
    %v1840 = vsub.f32 %v1834, %v1838
    %v1841 = vmul.f32 %v1840, 1.442695
    %v1842 = vpow.pop %v1841
    %1844 = vset.pattern.permute.xlu0 0
    %1845 = vperm.xlu0 %1844, %v1842
    %v1846 = vpop.permute.xlu0 %1845
    %v1848 = vrot.slane %v1737, 6
    %v1850 = vmul.f32 %v1846, %v1848
    %1851 = vset.pattern.permute.xlu0 1
    %1852 = vperm.xlu0 %1851, %v1842
    %v1853 = vpop.permute.xlu0 %1852
    %v1855 = vmul.f32 %v1853, %v1737
    %v1856 = vadd.f32 %v1850, %v1855
    %1857 = vrot.lane.b32.xlu0 %v1842, 127
    %v1858 = vpop.permute.xlu0 %1857
    %v1860 = vadd.f32 %v1842, %v1858
    %1861 = vset.pattern.permute.xlu0 2
    %1862 = vperm.xlu0 %1861, %v1842
    %v1863 = vpop.permute.xlu0 %1862
    %v1865 = vmul.f32 %v1863, %v1746
    %v1866 = vadd.f32 %v1856, %v1865
    %1867 = vrot.lane.b32.xlu0 %v1842, 126
    %v1868 = vpop.permute.xlu0 %1867
    %v1870 = vadd.f32 %v1860, %v1868
    %v1871 = vrcp.pop %v1870
    %1873 = vset.pattern.permute.xlu0 0
    %1874 = vperm.xlu0 %1873, %v1871
    %v1875 = vpop.permute.xlu0 %1874
    %v1877 = vmul.f32 %v1866, %v1875
    %v1878 = vadd.f32 %v1877, %v1626
    %v1879 = vrot.slane %v1761, 4
    %1880 = vrot.lane.b32.xlu0 %v1879, 1
    %v1881 = vpop.permute.xlu0 %1880
    %v1883 = vadd.f32 %v1737, %v1881
    %vm1884 = vcmp.gt.f32.partialorder %v1883, 0.0
    %v1885 = vmul.f32 %v1883, 0.2
    %v1886 = vsel %vm1884, %v1883, %v1885
    %v1887 = vrot.slane %v1757, 4
    %v1889 = vadd.f32 %v1772, %v1887
    %vm1890 = vcmp.gt.f32.partialorder %v1889, 0.0
    %v1891 = vmul.f32 %v1889, 0.2
    %v1892 = vsel %vm1890, %v1889, %v1891
    %1894 = vset.pattern.permute.xlu0 65
    %1895 = vperm.xlu0 %1894, %v1886
    %v1896 = vpop.permute.xlu0 %1895
    %v1898 = vsub.f32 %v1892, %v1896
    %v1899 = vmul.f32 %v1898, 1.442695
    %v1900 = vpow.pop %v1899
    %1902 = vset.pattern.permute.xlu0 0
    %1903 = vperm.xlu0 %1902, %v1900
    %v1904 = vpop.permute.xlu0 %1903
    %v1906 = vmul.f32 %v1904, %v1750
    %1907 = vset.pattern.permute.xlu0 1
    %1908 = vperm.xlu0 %1907, %v1900
    %v1909 = vpop.permute.xlu0 %1908
    %v1911 = vmul.f32 %v1909, %v1848
    %v1912 = vadd.f32 %v1906, %v1911
    %1913 = vrot.lane.b32.xlu0 %v1900, 127
    %v1914 = vpop.permute.xlu0 %1913
    %v1916 = vadd.f32 %v1900, %v1914
    %1917 = vset.pattern.permute.xlu0 2
    %1918 = vperm.xlu0 %1917, %v1900
    %v1919 = vpop.permute.xlu0 %1918
    %v1921 = vmul.f32 %v1919, %v1737
    %v1922 = vadd.f32 %v1912, %v1921
    %1923 = vrot.lane.b32.xlu0 %v1900, 126
    %v1924 = vpop.permute.xlu0 %1923
    %v1926 = vadd.f32 %v1916, %v1924
    %v1927 = vrcp.pop %v1926
    %1929 = vset.pattern.permute.xlu0 0
    %1930 = vperm.xlu0 %1929, %v1927
    %v1931 = vpop.permute.xlu0 %1930
    %v1933 = vmul.f32 %v1922, %v1931
    %v1934 = vadd.f32 %v1933, %v1626
    %v1935 = vld [vmem:[%s15 + $0x6] ss:$0 sm:$0xff]
    %v1937 = vrot.slane %v1332, 6
    %v1940 = vrot.slane %v1414, 4
    %v1943 = vrot.slane %v1412, 2
    %v1945 = vsel %vm1633, %v1371, %v1937
    %v1946 = vsel %vm1635, %v1945, %v1940
    %vm1947 = vcmask 1045504
    %v1948 = vsel %vm1947, %v1946, %v1943
    %v1949 = vpack.c.bf16 %v1948, %v1948
    %v1950 = vld [vmem:[%s8] sm:$0xf]
    %v1951 = vld [vmem:[%s8 + $0x4] sm:$0xf]
    %v1952 = vld [vmem:[%s8 + $0x8] sm:$0xf]
    %v1953 = vld [vmem:[%s8 + $0xc] sm:$0xf]
    %v1954 = vld [vmem:[%s8 + $0x10] sm:$0xf]
    %v1955 = vld [vmem:[%s8 + $0x14] sm:$0xf]
    %v1956 = vld [vmem:[%s8 + $0x18] sm:$0xf]
    %v1957 = vld [vmem:[%s8 + $0x1c] sm:$0xf]
    %v1958 = vld [vmem:[%s8 + $0x20] sm:$0xf]
    %v1959 = vld [vmem:[%s8 + $0x24] sm:$0xf]
    %v1960 = vld [vmem:[%s8 + $0x28] sm:$0xf]
    %v1961 = vld [vmem:[%s8 + $0x2c] sm:$0xf]
    %v1962 = vld [vmem:[%s8 + $0x30] sm:$0xf]
    %v1963 = vld [vmem:[%s8 + $0x34] sm:$0xf]
    %v1964 = vld [vmem:[%s8 + $0x38] sm:$0xf]
    %v1965 = vld [vmem:[%s8 + $0x3c] sm:$0xf]
    %v1982 = vunpack.c.l.b16 %v1950
    %v1983 = vunpack.c.l.b16 %v1951
    %v1984 = vunpack.c.l.b16 %v1952
    %v1985 = vunpack.c.l.b16 %v1953
    %v1986 = vunpack.c.l.b16 %v1954
    %v1987 = vunpack.c.l.b16 %v1955
    %v1988 = vunpack.c.l.b16 %v1956
    %v1989 = vunpack.c.l.b16 %v1957
    %v1990 = vunpack.c.l.b16 %v1958
    %v1991 = vunpack.c.l.b16 %v1959
    %v1992 = vunpack.c.l.b16 %v1960
    %v1993 = vunpack.c.l.b16 %v1961
    %v1994 = vunpack.c.l.b16 %v1962
    %v1995 = vunpack.c.l.b16 %v1963
    %v1996 = vunpack.c.l.b16 %v1964
    %v1997 = vunpack.c.l.b16 %v1965
    %v1998 = vpack.c.b16 %v1983, %v1982
    %v1999 = vpack.c.b16 %v1985, %v1984
    %v2000 = vpack.c.b16 %v1987, %v1986
    %v2001 = vpack.c.b16 %v1989, %v1988
    %v2002 = vpack.c.b16 %v1991, %v1990
    %v2003 = vpack.c.b16 %v1993, %v1992
    %v2004 = vpack.c.b16 %v1995, %v1994
    %v2005 = vpack.c.b16 %v1997, %v1996
    %2014 = vmatprep.subr.bf16.mxu0 0
    %2015 = vmatpush1.bf16.msra.mxu0 %v2005
    %2016 = vmatprep.subr.bf16.mxu0 0
    %2017 = vmatpush1.bf16.msra.mxu0 %v2004
    %2018 = vmatprep.subr.bf16.mxu0 0
    %2019 = vmatpush1.bf16.msra.mxu0 %v2003
    %2020 = vmatprep.subr.bf16.mxu0 0
    %2021 = vmatpush1.bf16.msra.mxu0 %v2002
    %2022 = vmatprep.subr.bf16.mxu0 0
    %2023 = vmatpush1.bf16.msra.mxu0 %v2001
    %2024 = vmatprep.subr.bf16.mxu0 0
    %2025 = vmatpush1.bf16.msra.mxu0 %v2000
    %2026 = vmatprep.subr.bf16.mxu0 0
    %2027 = vmatpush1.bf16.msra.mxu0 %v1999
    %2028 = vmatprep.subr.bf16.mxu0 0
    %2029 = vmatpush1.bf16.msra.mxu0 %v1998
    %2030 = vmatprep.subr.bf16.mxu0 0
    %2031 = vmatpush2.bf16.msra.mxu0 0
    %2032 = vmatprep.subr.bf16.mxu0 0
    %2033 = vmatpush2.bf16.msra.mxu0 0
    %2034 = vmatprep.subr.bf16.mxu0 0
    %2035 = vmatpush2.bf16.msra.mxu0 0
    %2036 = vmatprep.subr.bf16.mxu0 0
    %2037 = vmatpush2.bf16.msra.mxu0 0
    %2038 = vmatprep.subr.bf16.mxu0 0
    %2039 = vmatpush2.bf16.msra.mxu0 0
    %2040 = vmatprep.subr.bf16.mxu0 0
    %2041 = vmatpush2.bf16.msra.mxu0 0
    %2042 = vmatprep.subr.bf16.mxu0 0
    %2043 = vmatpush2.bf16.msra.mxu0 0
    %2044 = vmatprep.subr.bf16.mxu0 0
    %2045 = vmatpush2.bf16.msra.mxu0 0
    %2046 = vmatprep.mubr.bf16.mxu0 0
    %2047 = vmatmul.mubr.bf16.gmra.mxu0 %v1949
    %v2048 = vpop.f32.mrf.mxu0
    %v2049 = vadd.f32 0.0, %v2048
    %v2050 = vpop.f32.mrf.mxu0
    %v2051 = vpop.f32.mrf.mxu0
    %v2052 = vpop.f32.mrf.mxu0
    %2053 = vdwg.mxu0
    %2055 = vrot.lane.b32.xlu0 %v2049, 80
    %v2056 = vpop.permute.xlu0 %2055
    %v2058 = vrot.slane %v2049, 2
    %2059 = vrot.lane.b32.xlu0 %v2058, 81
    %v2060 = vpop.permute.xlu0 %2059
    %v2062 = vrot.slane %v2049, 4
    %2063 = vrot.lane.b32.xlu0 %v2062, 82
    %v2064 = vpop.permute.xlu0 %2063
    %v2066 = vrot.slane %v2049, 6
    %2067 = vrot.lane.b32.xlu0 %v2066, 83
    %v2068 = vpop.permute.xlu0 %2067
    %v2070 = vsel %vm1754, %v2056, %v2060
    %v2071 = vsel %vm1756, %v2070, %v2064
    %vm2072 = vcmask 23552
    %v2073 = vsel %vm2072, %v2071, %v2068
    %v2075 = vmax.f32 %v2049, %v2058
    %v2077 = vmax.f32 %v2075, %v2062
    %v2079 = vmax.f32 %v2077, %v2066
    %2081 = vrot.lane.b32.xlu0 %v2079, 1
    %v2082 = vpop.permute.xlu0 %2081
    %v2084 = vadd.f32 %v2049, %v2082
    %vm2085 = vcmp.gt.f32.partialorder %v2084, 0.0
    %v2086 = vmul.f32 %v2084, 0.2
    %v2087 = vsel %vm2085, %v2084, %v2086
    %2088 = vset.pattern.permute.xlu0 49
    %2089 = vperm.xlu0 %2088, %v2049
    %v2090 = vpop.permute.xlu0 %2089
    %v2092 = vadd.f32 %v2090, %v2073
    %vm2093 = vcmp.gt.f32.partialorder %v2092, 0.0
    %v2094 = vmul.f32 %v2092, 0.2
    %v2095 = vsel %vm2093, %v2092, %v2094
    %2097 = vset.pattern.permute.xlu0 49
    %2098 = vperm.xlu0 %2097, %v2087
    %v2099 = vpop.permute.xlu0 %2098
    %v2101 = vsub.f32 %v2095, %v2099
    %v2102 = vmul.f32 %v2101, 1.442695
    %v2103 = vpow.pop %v2102
    %2105 = vset.pattern.permute.xlu0 0
    %2106 = vperm.xlu0 %2105, %v2103
    %v2107 = vpop.permute.xlu0 %2106
    %v2109 = vmul.f32 %v2107, %v2049
    %2110 = vset.pattern.permute.xlu0 1
    %2111 = vperm.xlu0 %2110, %v2103
    %v2112 = vpop.permute.xlu0 %2111
    %v2114 = vmul.f32 %v2112, %v2058
    %v2115 = vadd.f32 %v2109, %v2114
    %2116 = vrot.lane.b32.xlu0 %v2103, 127
    %v2117 = vpop.permute.xlu0 %2116
    %v2119 = vadd.f32 %v2103, %v2117
    %2120 = vset.pattern.permute.xlu0 2
    %2121 = vperm.xlu0 %2120, %v2103
    %v2122 = vpop.permute.xlu0 %2121
    %v2124 = vmul.f32 %v2122, %v2062
    %v2125 = vadd.f32 %v2115, %v2124
    %2126 = vrot.lane.b32.xlu0 %v2103, 126
    %v2127 = vpop.permute.xlu0 %2126
    %v2129 = vadd.f32 %v2119, %v2127
    %2130 = vset.pattern.permute.xlu0 3
    %2131 = vperm.xlu0 %2130, %v2103
    %v2132 = vpop.permute.xlu0 %2131
    %v2134 = vmul.f32 %v2132, %v2066
    %v2135 = vadd.f32 %v2125, %v2134
    %2136 = vrot.lane.b32.xlu0 %v2103, 125
    %v2137 = vpop.permute.xlu0 %2136
    %v2139 = vadd.f32 %v2129, %v2137
    %v2140 = vrcp.pop %v2139
    %2142 = vset.pattern.permute.xlu0 0
    %2143 = vperm.xlu0 %2142, %v2140
    %v2144 = vpop.permute.xlu0 %2143
    %v2146 = vmul.f32 %v2135, %v2144
    %v2147 = vadd.f32 %v2146, %v1935
    %v2148 = vrot.slane %v2079, 6
    %2149 = vrot.lane.b32.xlu0 %v2148, 1
    %v2150 = vpop.permute.xlu0 %2149
    %v2152 = vadd.f32 %v2049, %v2150
    %vm2153 = vcmp.gt.f32.partialorder %v2152, 0.0
    %v2154 = vmul.f32 %v2152, 0.2
    %v2155 = vsel %vm2153, %v2152, %v2154
    %v2157 = vrot.slane %v2073, 6
    %v2159 = vadd.f32 %v2090, %v2157
    %vm2160 = vcmp.gt.f32.partialorder %v2159, 0.0
    %v2161 = vmul.f32 %v2159, 0.2
    %v2162 = vsel %vm2160, %v2159, %v2161
    %2164 = vset.pattern.permute.xlu0 49
    %2165 = vperm.xlu0 %2164, %v2155
    %v2166 = vpop.permute.xlu0 %2165
    %v2168 = vsub.f32 %v2162, %v2166
    %v2169 = vmul.f32 %v2168, 1.442695
    %v2170 = vpow.pop %v2169
    %2172 = vset.pattern.permute.xlu0 0
    %2173 = vperm.xlu0 %2172, %v2170
    %v2174 = vpop.permute.xlu0 %2173
    %v2176 = vmul.f32 %v2174, %v2066
    %2177 = vset.pattern.permute.xlu0 1
    %2178 = vperm.xlu0 %2177, %v2170
    %v2179 = vpop.permute.xlu0 %2178
    %v2181 = vmul.f32 %v2179, %v2049
    %v2182 = vadd.f32 %v2176, %v2181
    %2183 = vrot.lane.b32.xlu0 %v2170, 127
    %v2184 = vpop.permute.xlu0 %2183
    %v2186 = vadd.f32 %v2170, %v2184
    %2187 = vset.pattern.permute.xlu0 2
    %2188 = vperm.xlu0 %2187, %v2170
    %v2189 = vpop.permute.xlu0 %2188
    %v2191 = vmul.f32 %v2189, %v2058
    %v2192 = vadd.f32 %v2182, %v2191
    %2193 = vrot.lane.b32.xlu0 %v2170, 126
    %v2194 = vpop.permute.xlu0 %2193
    %v2196 = vadd.f32 %v2186, %v2194
    %2197 = vset.pattern.permute.xlu0 3
    %2198 = vperm.xlu0 %2197, %v2170
    %v2199 = vpop.permute.xlu0 %2198
    %v2201 = vmul.f32 %v2199, %v2062
    %v2202 = vadd.f32 %v2192, %v2201
    %2203 = vrot.lane.b32.xlu0 %v2170, 125
    %v2204 = vpop.permute.xlu0 %2203
    %v2206 = vadd.f32 %v2196, %v2204
    %v2207 = vrcp.pop %v2206
    %2209 = vset.pattern.permute.xlu0 0
    %2210 = vperm.xlu0 %2209, %v2207
    %v2211 = vpop.permute.xlu0 %2210
    %v2213 = vmul.f32 %v2202, %v2211
    %v2214 = vadd.f32 %v2213, %v1935
    %v2215 = vrot.slane %v2079, 4
    %2216 = vrot.lane.b32.xlu0 %v2215, 1
    %v2217 = vpop.permute.xlu0 %2216
    %v2219 = vadd.f32 %v2049, %v2217
    %vm2220 = vcmp.gt.f32.partialorder %v2219, 0.0
    %v2221 = vmul.f32 %v2219, 0.2
    %v2222 = vsel %vm2220, %v2219, %v2221
    %v2223 = vrot.slane %v2073, 4
    %v2225 = vadd.f32 %v2090, %v2223
    %vm2226 = vcmp.gt.f32.partialorder %v2225, 0.0
    %v2227 = vmul.f32 %v2225, 0.2
    %v2228 = vsel %vm2226, %v2225, %v2227
    %2230 = vset.pattern.permute.xlu0 49
    %2231 = vperm.xlu0 %2230, %v2222
    %v2232 = vpop.permute.xlu0 %2231
    %v2234 = vsub.f32 %v2228, %v2232
    %v2235 = vmul.f32 %v2234, 1.442695
    %v2236 = vpow.pop %v2235
    %2238 = vset.pattern.permute.xlu0 0
    %2239 = vperm.xlu0 %2238, %v2236
    %v2240 = vpop.permute.xlu0 %2239
    %v2242 = vmul.f32 %v2240, %v2062
    %2243 = vset.pattern.permute.xlu0 1
    %2244 = vperm.xlu0 %2243, %v2236
    %v2245 = vpop.permute.xlu0 %2244
    %v2247 = vmul.f32 %v2245, %v2066
    %v2248 = vadd.f32 %v2242, %v2247
    %2249 = vrot.lane.b32.xlu0 %v2236, 127
    %v2250 = vpop.permute.xlu0 %2249
    %v2252 = vadd.f32 %v2236, %v2250
    %2253 = vset.pattern.permute.xlu0 2
    %2254 = vperm.xlu0 %2253, %v2236
    %v2255 = vpop.permute.xlu0 %2254
    %v2257 = vmul.f32 %v2255, %v2049
    %v2258 = vadd.f32 %v2248, %v2257
    %2259 = vrot.lane.b32.xlu0 %v2236, 126
    %v2260 = vpop.permute.xlu0 %2259
    %v2262 = vadd.f32 %v2252, %v2260
    %2263 = vset.pattern.permute.xlu0 3
    %2264 = vperm.xlu0 %2263, %v2236
    %v2265 = vpop.permute.xlu0 %2264
    %v2267 = vmul.f32 %v2265, %v2058
    %v2268 = vadd.f32 %v2258, %v2267
    %2269 = vrot.lane.b32.xlu0 %v2236, 125
    %v2270 = vpop.permute.xlu0 %2269
    %v2272 = vadd.f32 %v2262, %v2270
    %v2273 = vrcp.pop %v2272
    %2275 = vset.pattern.permute.xlu0 0
    %2276 = vperm.xlu0 %2275, %v2273
    %v2277 = vpop.permute.xlu0 %2276
    %v2279 = vmul.f32 %v2268, %v2277
    %v2280 = vadd.f32 %v2279, %v1935
    %v2281 = vrot.slane %v2079, 2
    %2282 = vrot.lane.b32.xlu0 %v2281, 1
    %v2283 = vpop.permute.xlu0 %2282
    %v2285 = vadd.f32 %v2049, %v2283
    %vm2286 = vcmp.gt.f32.partialorder %v2285, 0.0
    %v2287 = vmul.f32 %v2285, 0.2
    %v2288 = vsel %vm2286, %v2285, %v2287
    %v2289 = vrot.slane %v2073, 2
    %v2291 = vadd.f32 %v2090, %v2289
    %vm2292 = vcmp.gt.f32.partialorder %v2291, 0.0
    %v2293 = vmul.f32 %v2291, 0.2
    %v2294 = vsel %vm2292, %v2291, %v2293
    %2296 = vset.pattern.permute.xlu0 49
    %2297 = vperm.xlu0 %2296, %v2288
    %v2298 = vpop.permute.xlu0 %2297
    %v2300 = vsub.f32 %v2294, %v2298
    %v2301 = vmul.f32 %v2300, 1.442695
    %v2302 = vpow.pop %v2301
    %2304 = vset.pattern.permute.xlu0 0
    %2305 = vperm.xlu0 %2304, %v2302
    %v2306 = vpop.permute.xlu0 %2305
    %v2308 = vmul.f32 %v2306, %v2058
    %2309 = vset.pattern.permute.xlu0 1
    %2310 = vperm.xlu0 %2309, %v2302
    %v2311 = vpop.permute.xlu0 %2310
    %v2313 = vmul.f32 %v2311, %v2062
    %v2314 = vadd.f32 %v2308, %v2313
    %2315 = vrot.lane.b32.xlu0 %v2302, 127
    %v2316 = vpop.permute.xlu0 %2315
    %v2318 = vadd.f32 %v2302, %v2316
    %2319 = vset.pattern.permute.xlu0 2
    %2320 = vperm.xlu0 %2319, %v2302
    %v2321 = vpop.permute.xlu0 %2320
    %v2323 = vmul.f32 %v2321, %v2066
    %v2324 = vadd.f32 %v2314, %v2323
    %2325 = vrot.lane.b32.xlu0 %v2302, 126
    %v2326 = vpop.permute.xlu0 %2325
    %v2328 = vadd.f32 %v2318, %v2326
    %2329 = vset.pattern.permute.xlu0 3
    %2330 = vperm.xlu0 %2329, %v2302
    %v2331 = vpop.permute.xlu0 %2330
    %v2333 = vmul.f32 %v2331, %v2049
    %v2334 = vadd.f32 %v2324, %v2333
    %2335 = vrot.lane.b32.xlu0 %v2302, 125
    %v2336 = vpop.permute.xlu0 %2335
    %v2338 = vadd.f32 %v2328, %v2336
    %v2339 = vrcp.pop %v2338
    %2341 = vset.pattern.permute.xlu0 0
    %2342 = vperm.xlu0 %2341, %v2339
    %v2343 = vpop.permute.xlu0 %2342
    %v2345 = vmul.f32 %v2334, %v2343
    %v2346 = vadd.f32 %v2345, %v1935
    %v2348 = vrot.slane %v1878, 2
    %2349 = vrot.lane.b32.xlu0 %v2348, 64
    %v2350 = vpop.permute.xlu0 %2349
    %v2353 = vrot.slane %v1934, 4
    %v2355 = vsel %vm1579, %v1819, %v2350
    %v2357 = vrot.slane %v2214, 2
    %2358 = vrot.lane.b32.xlu0 %v2357, 48
    %v2359 = vpop.permute.xlu0 %2358
    %v2362 = vrot.slane %v2280, 4
    %2363 = vrot.lane.b32.xlu0 %v2362, 96
    %v2364 = vpop.permute.xlu0 %2363
    %v2367 = vrot.slane %v2346, 6
    %2368 = vrot.lane.b32.xlu0 %v2367, 16
    %v2369 = vpop.permute.xlu0 %2368
    %vm2371 = vcmask 392192
    %v2372 = vsel %vm2371, %v2147, %v2359
    %vm2373 = vcmask 785408
    %v2374 = vsel %vm2373, %v2372, %v2364
    %vm2375 = vcmask 130048
    %v2376 = vsel %vm2375, %v2364, %v2369
    %v2377 = vadd.f32 %v2355, %v2374
    %v2378 = vadd.f32 %v2353, %v2376
    %v2379 = vpack.c.bf16 %v2377, %v2377
    %v2380 = vpack.c.bf16 %v2378, %v2378
    %v2381 = vld [vmem:[%s9] sm:$0xff]
    %v2382 = vld [vmem:[%s9 + $0x8] sm:$0xff]
    %v2383 = vld [vmem:[%s9 + $0x10] sm:$0xff]
    %v2384 = vld [vmem:[%s9 + $0x18] sm:$0xff]
    %v2385 = vld [vmem:[%s9 + $0x20] sm:$0xff]
    %v2386 = vld [vmem:[%s9 + $0x28] sm:$0xff]
    %v2387 = vld [vmem:[%s9 + $0x30] sm:$0xff]
    %v2388 = vld [vmem:[%s9 + $0x38] sm:$0xff]
    %v2389 = vld [vmem:[%s9 + $0x40] sm:$0xff]
    %v2390 = vld [vmem:[%s9 + $0x48] sm:$0xff]
    %v2391 = vld [vmem:[%s9 + $0x50] sm:$0xff]
    %v2392 = vld [vmem:[%s9 + $0x58] sm:$0xff]
    %v2393 = vld [vmem:[%s9 + $0x60] sm:$0xff]
    %v2394 = vld [vmem:[%s9 + $0x68] sm:$0xff]
    %v2395 = vld [vmem:[%s9 + $0x70] sm:$0xff]
    %v2396 = vld [vmem:[%s9 + $0x78] sm:$0xff]
    %v2397 = vld [vmem:[%s9 + $0x80] sm:$0xff]
    %v2398 = vld [vmem:[%s9 + $0x88] sm:$0xff]
    %v2399 = vld [vmem:[%s9 + $0x90] sm:$0xff]
    %v2400 = vld [vmem:[%s9 + $0x98] sm:$0xff]
    %v2401 = vld [vmem:[%s9 + $0xa0] sm:$0xff]
    %v2402 = vld [vmem:[%s9 + $0xa8] sm:$0xff]
    %v2403 = vld [vmem:[%s9 + $0xb0] sm:$0xff]
    %v2404 = vld [vmem:[%s9 + $0xb8] sm:$0xff]
    %s2405 = scalar_lea.vmem %s15, 7
    %v2406 = vld [vmem:[%s2405] ss:$8 sm:$0x3]
    %v2408 = vlaneseq
    %v2409 = vshrl.u32 %v2408, 7
    %v2410 = vsub.s32 0, %v2409
    %v2411 = vrot.slane %v2406, %v2410
    %v2412 = vlaneseq
    %v2413 = vshrl.u32 %v2412, 7
    %v2414 = vsub.s32 1, %v2413
    %v2415 = vrot.slane %v2406, %v2414
    %v2442 = vunpack.c.l.b16 %v2381
    %v2443 = vunpack.c.h.b16 %v2381
    %v2444 = vunpack.c.l.b16 %v2382
    %v2445 = vunpack.c.h.b16 %v2382
    %v2446 = vunpack.c.l.b16 %v2383
    %v2447 = vunpack.c.h.b16 %v2383
    %v2448 = vunpack.c.l.b16 %v2384
    %v2449 = vunpack.c.h.b16 %v2384
    %v2450 = vunpack.c.l.b16 %v2385
    %v2451 = vunpack.c.h.b16 %v2385
    %v2452 = vunpack.c.l.b16 %v2386
    %v2453 = vunpack.c.h.b16 %v2386
    %v2454 = vunpack.c.l.b16 %v2387
    %v2455 = vunpack.c.h.b16 %v2387
    %v2456 = vunpack.c.l.b16 %v2388
    %v2457 = vunpack.c.h.b16 %v2388
    %v2458 = vunpack.c.l.b16 %v2389
    %v2459 = vunpack.c.h.b16 %v2389
    %v2460 = vunpack.c.l.b16 %v2390
    %v2461 = vunpack.c.h.b16 %v2390
    %v2462 = vunpack.c.l.b16 %v2391
    %v2463 = vunpack.c.h.b16 %v2391
    %v2464 = vunpack.c.l.b16 %v2392
    %v2465 = vunpack.c.h.b16 %v2392
    %v2466 = vunpack.c.l.b16 %v2393
    %v2467 = vunpack.c.h.b16 %v2393
    %v2468 = vunpack.c.l.b16 %v2394
    %v2469 = vunpack.c.h.b16 %v2394
    %v2470 = vunpack.c.l.b16 %v2395
    %v2471 = vunpack.c.h.b16 %v2395
    %v2472 = vunpack.c.l.b16 %v2396
    %v2473 = vunpack.c.h.b16 %v2396
    %v2474 = vunpack.c.l.b16 %v2397
    %v2475 = vunpack.c.h.b16 %v2397
    %v2476 = vunpack.c.l.b16 %v2398
    %v2477 = vunpack.c.h.b16 %v2398
    %v2478 = vunpack.c.l.b16 %v2399
    %v2479 = vunpack.c.h.b16 %v2399
    %v2480 = vunpack.c.l.b16 %v2400
    %v2481 = vunpack.c.h.b16 %v2400
    %v2482 = vunpack.c.l.b16 %v2401
    %v2483 = vunpack.c.h.b16 %v2401
    %v2484 = vunpack.c.l.b16 %v2402
    %v2485 = vunpack.c.h.b16 %v2402
    %v2486 = vunpack.c.l.b16 %v2403
    %v2487 = vunpack.c.h.b16 %v2403
    %v2488 = vunpack.c.l.b16 %v2404
    %v2489 = vunpack.c.h.b16 %v2404
    %v2490 = vpack.c.b16 %v2444, %v2442
    %v2491 = vpack.c.b16 %v2445, %v2443
    %v2492 = vpack.c.b16 %v2448, %v2446
    %v2493 = vpack.c.b16 %v2449, %v2447
    %v2494 = vpack.c.b16 %v2452, %v2450
    %v2495 = vpack.c.b16 %v2453, %v2451
    %v2496 = vpack.c.b16 %v2456, %v2454
    %v2497 = vpack.c.b16 %v2457, %v2455
    %v2498 = vpack.c.b16 %v2460, %v2458
    %v2499 = vpack.c.b16 %v2461, %v2459
    %v2500 = vpack.c.b16 %v2464, %v2462
    %v2501 = vpack.c.b16 %v2465, %v2463
    %v2502 = vpack.c.b16 %v2468, %v2466
    %v2503 = vpack.c.b16 %v2469, %v2467
    %v2504 = vpack.c.b16 %v2472, %v2470
    %v2505 = vpack.c.b16 %v2473, %v2471
    %v2506 = vpack.c.b16 %v2476, %v2474
    %v2507 = vpack.c.b16 %v2477, %v2475
    %v2508 = vpack.c.b16 %v2480, %v2478
    %v2509 = vpack.c.b16 %v2481, %v2479
    %v2510 = vpack.c.b16 %v2484, %v2482
    %v2511 = vpack.c.b16 %v2485, %v2483
    %v2512 = vpack.c.b16 %v2488, %v2486
    %v2513 = vpack.c.b16 %v2489, %v2487
    %v2539 = vsel %vm1579, %v2380, 0
    %2541 = vmatprep.subr.bf16.mxu0 %v2505
    %2542 = vmatpush1.bf16.msra.mxu0 %v2504
    %2543 = vmatprep.subr.bf16.mxu0 %v2503
    %2544 = vmatpush1.bf16.msra.mxu0 %v2502
    %2545 = vmatprep.subr.bf16.mxu0 %v2501
    %2546 = vmatpush1.bf16.msra.mxu0 %v2500
    %2547 = vmatprep.subr.bf16.mxu0 %v2499
    %2548 = vmatpush1.bf16.msra.mxu0 %v2498
    %2549 = vmatprep.subr.bf16.mxu0 %v2497
    %2550 = vmatpush1.bf16.msra.mxu0 %v2496
    %2551 = vmatprep.subr.bf16.mxu0 %v2495
    %2552 = vmatpush1.bf16.msra.mxu0 %v2494
    %2553 = vmatprep.subr.bf16.mxu0 %v2493
    %2554 = vmatpush1.bf16.msra.mxu0 %v2492
    %2555 = vmatprep.subr.bf16.mxu0 %v2491
    %2556 = vmatpush1.bf16.msra.mxu0 %v2490
    %2557 = vmatprep.subr.bf16.mxu0 0
    %2558 = vmatpush2.bf16.msra.mxu0 0
    %2559 = vmatprep.subr.bf16.mxu0 0
    %2560 = vmatpush2.bf16.msra.mxu0 0
    %2561 = vmatprep.subr.bf16.mxu0 0
    %2562 = vmatpush2.bf16.msra.mxu0 0
    %2563 = vmatprep.subr.bf16.mxu0 0
    %2564 = vmatpush2.bf16.msra.mxu0 0
    %2565 = vmatprep.subr.bf16.mxu0 %v2513
    %2566 = vmatpush2.bf16.msra.mxu0 %v2512
    %2567 = vmatprep.subr.bf16.mxu0 %v2511
    %2568 = vmatpush2.bf16.msra.mxu0 %v2510
    %2569 = vmatprep.subr.bf16.mxu0 %v2509
    %2570 = vmatpush2.bf16.msra.mxu0 %v2508
    %2571 = vmatprep.subr.bf16.mxu0 %v2507
    %2572 = vmatpush2.bf16.msra.mxu0 %v2506
    %2573 = vmatprep.mubr.bf16.mxu0 %v2539
    %2574 = vmatmul.mubr.bf16.gmra.mxu0 %v2379
    %v2575 = vpop.f32.mrf.mxu0
    %v2576 = vadd.f32 %v2411, %v2575
    %v2577 = vpop.f32.mrf.mxu0
    %v2578 = vadd.f32 %v2415, %v2577
    %v2579 = vpop.f32.mrf.mxu0
    %v2580 = vpop.f32.mrf.mxu0
    %2581 = vdwg.mxu0
    %v2582 = vmax.f32 %v2576, 0.0
    %v2583 = vmax.f32 %v2578, 0.0
    %v2584 = vpack.c.bf16 %v2582, %v2582
    %v2585 = vpack.c.bf16 %v2583, %v2583
    %v2586 = vld [vmem:[#allocation11] sm:$0xff]
    %v2587 = vld [vmem:[#allocation11 + $0x8] sm:$0xff]
    %v2588 = vld [vmem:[#allocation11 + $0x10] sm:$0xff]
    %v2589 = vld [vmem:[#allocation11 + $0x18] sm:$0xff]
    %v2590 = vld [vmem:[#allocation11 + $0x20] sm:$0xff]
    %v2591 = vld [vmem:[#allocation11 + $0x28] sm:$0xff]
    %v2592 = vld [vmem:[#allocation11 + $0x30] sm:$0xff]
    %v2593 = vld [vmem:[#allocation11 + $0x38] sm:$0xff]
    %v2594 = vld [vmem:[#allocation11 + $0x40] sm:$0xff]
    %v2595 = vld [vmem:[#allocation11 + $0x48] sm:$0xff]
    %v2596 = vld [vmem:[#allocation11 + $0x50] sm:$0xff]
    %v2597 = vld [vmem:[#allocation11 + $0x58] sm:$0xff]
    %v2598 = vld [vmem:[#allocation11 + $0x60] sm:$0xff]
    %v2599 = vld [vmem:[#allocation11 + $0x68] sm:$0xff]
    %v2600 = vld [vmem:[#allocation11 + $0x70] sm:$0xff]
    %v2601 = vld [vmem:[#allocation11 + $0x78] sm:$0xff]
    %v2602 = vld [vmem:[#allocation11 + $0x80] sm:$0xff]
    %v2603 = vld [vmem:[#allocation11 + $0x88] sm:$0xff]
    %v2604 = vld [vmem:[#allocation11 + $0x90] sm:$0xff]
    %v2605 = vld [vmem:[#allocation11 + $0x98] sm:$0xff]
    %v2606 = vld [vmem:[#allocation11 + $0xa0] sm:$0xff]
    %v2607 = vld [vmem:[#allocation11 + $0xa8] sm:$0xff]
    %v2608 = vld [vmem:[#allocation11 + $0xb0] sm:$0xff]
    %v2609 = vld [vmem:[#allocation11 + $0xb8] sm:$0xff]
    %s2610 = scalar_lea.vmem %s15, 64
    %v2611 = vld [vmem:[%s2610] ss:$8 sm:$0x3]
    %v2613 = vlaneseq
    %v2614 = vshrl.u32 %v2613, 7
    %v2615 = vsub.s32 0, %v2614
    %v2616 = vrot.slane %v2611, %v2615
    %v2617 = vlaneseq
    %v2618 = vshrl.u32 %v2617, 7
    %v2619 = vsub.s32 1, %v2618
    %v2620 = vrot.slane %v2611, %v2619
    %v2647 = vunpack.c.l.b16 %v2586
    %v2648 = vunpack.c.h.b16 %v2586
    %v2649 = vunpack.c.l.b16 %v2587
    %v2650 = vunpack.c.h.b16 %v2587
    %v2651 = vunpack.c.l.b16 %v2588
    %v2652 = vunpack.c.h.b16 %v2588
    %v2653 = vunpack.c.l.b16 %v2589
    %v2654 = vunpack.c.h.b16 %v2589
    %v2655 = vunpack.c.l.b16 %v2590
    %v2656 = vunpack.c.h.b16 %v2590
    %v2657 = vunpack.c.l.b16 %v2591
    %v2658 = vunpack.c.h.b16 %v2591
    %v2659 = vunpack.c.l.b16 %v2592
    %v2660 = vunpack.c.h.b16 %v2592
    %v2661 = vunpack.c.l.b16 %v2593
    %v2662 = vunpack.c.h.b16 %v2593
    %v2663 = vunpack.c.l.b16 %v2594
    %v2664 = vunpack.c.h.b16 %v2594
    %v2665 = vunpack.c.l.b16 %v2595
    %v2666 = vunpack.c.h.b16 %v2595
    %v2667 = vunpack.c.l.b16 %v2596
    %v2668 = vunpack.c.h.b16 %v2596
    %v2669 = vunpack.c.l.b16 %v2597
    %v2670 = vunpack.c.h.b16 %v2597
    %v2671 = vunpack.c.l.b16 %v2598
    %v2672 = vunpack.c.h.b16 %v2598
    %v2673 = vunpack.c.l.b16 %v2599
    %v2674 = vunpack.c.h.b16 %v2599
    %v2675 = vunpack.c.l.b16 %v2600
    %v2676 = vunpack.c.h.b16 %v2600
    %v2677 = vunpack.c.l.b16 %v2601
    %v2678 = vunpack.c.h.b16 %v2601
    %v2679 = vunpack.c.l.b16 %v2602
    %v2680 = vunpack.c.h.b16 %v2602
    %v2681 = vunpack.c.l.b16 %v2603
    %v2682 = vunpack.c.h.b16 %v2603
    %v2683 = vunpack.c.l.b16 %v2604
    %v2684 = vunpack.c.h.b16 %v2604
    %v2685 = vunpack.c.l.b16 %v2605
    %v2686 = vunpack.c.h.b16 %v2605
    %v2687 = vunpack.c.l.b16 %v2606
    %v2688 = vunpack.c.h.b16 %v2606
    %v2689 = vunpack.c.l.b16 %v2607
    %v2690 = vunpack.c.h.b16 %v2607
    %v2691 = vunpack.c.l.b16 %v2608
    %v2692 = vunpack.c.h.b16 %v2608
    %v2693 = vunpack.c.l.b16 %v2609
    %v2694 = vunpack.c.h.b16 %v2609
    %v2695 = vpack.c.b16 %v2649, %v2647
    %v2696 = vpack.c.b16 %v2650, %v2648
    %v2697 = vpack.c.b16 %v2653, %v2651
    %v2698 = vpack.c.b16 %v2654, %v2652
    %v2699 = vpack.c.b16 %v2657, %v2655
    %v2700 = vpack.c.b16 %v2658, %v2656
    %v2701 = vpack.c.b16 %v2661, %v2659
    %v2702 = vpack.c.b16 %v2662, %v2660
    %v2703 = vpack.c.b16 %v2665, %v2663
    %v2704 = vpack.c.b16 %v2666, %v2664
    %v2705 = vpack.c.b16 %v2669, %v2667
    %v2706 = vpack.c.b16 %v2670, %v2668
    %v2707 = vpack.c.b16 %v2673, %v2671
    %v2708 = vpack.c.b16 %v2674, %v2672
    %v2709 = vpack.c.b16 %v2677, %v2675
    %v2710 = vpack.c.b16 %v2678, %v2676
    %v2711 = vpack.c.b16 %v2681, %v2679
    %v2712 = vpack.c.b16 %v2682, %v2680
    %v2713 = vpack.c.b16 %v2685, %v2683
    %v2714 = vpack.c.b16 %v2686, %v2684
    %v2715 = vpack.c.b16 %v2689, %v2687
    %v2716 = vpack.c.b16 %v2690, %v2688
    %v2717 = vpack.c.b16 %v2693, %v2691
    %v2718 = vpack.c.b16 %v2694, %v2692
    %v2744 = vsel %vm1579, %v2585, 0
    %2746 = vmatprep.subr.bf16.mxu0 %v2710
    %2747 = vmatpush1.bf16.msra.mxu0 %v2709
    %2748 = vmatprep.subr.bf16.mxu0 %v2708
    %2749 = vmatpush1.bf16.msra.mxu0 %v2707
    %2750 = vmatprep.subr.bf16.mxu0 %v2706
    %2751 = vmatpush1.bf16.msra.mxu0 %v2705
    %2752 = vmatprep.subr.bf16.mxu0 %v2704
    %2753 = vmatpush1.bf16.msra.mxu0 %v2703
    %2754 = vmatprep.subr.bf16.mxu0 %v2702
    %2755 = vmatpush1.bf16.msra.mxu0 %v2701
    %2756 = vmatprep.subr.bf16.mxu0 %v2700
    %2757 = vmatpush1.bf16.msra.mxu0 %v2699
    %2758 = vmatprep.subr.bf16.mxu0 %v2698
    %2759 = vmatpush1.bf16.msra.mxu0 %v2697
    %2760 = vmatprep.subr.bf16.mxu0 %v2696
    %2761 = vmatpush1.bf16.msra.mxu0 %v2695
    %2762 = vmatprep.subr.bf16.mxu0 0
    %2763 = vmatpush2.bf16.msra.mxu0 0
    %2764 = vmatprep.subr.bf16.mxu0 0
    %2765 = vmatpush2.bf16.msra.mxu0 0
    %2766 = vmatprep.subr.bf16.mxu0 0
    %2767 = vmatpush2.bf16.msra.mxu0 0
    %2768 = vmatprep.subr.bf16.mxu0 0
    %2769 = vmatpush2.bf16.msra.mxu0 0
    %2770 = vmatprep.subr.bf16.mxu0 %v2718
    %2771 = vmatpush2.bf16.msra.mxu0 %v2717
    %2772 = vmatprep.subr.bf16.mxu0 %v2716
    %2773 = vmatpush2.bf16.msra.mxu0 %v2715
    %2774 = vmatprep.subr.bf16.mxu0 %v2714
    %2775 = vmatpush2.bf16.msra.mxu0 %v2713
    %2776 = vmatprep.subr.bf16.mxu0 %v2712
    %2777 = vmatpush2.bf16.msra.mxu0 %v2711
    %2778 = vmatprep.mubr.bf16.mxu0 %v2744
    %2779 = vmatmul.mubr.bf16.gmra.mxu0 %v2584
    %v2780 = vpop.f32.mrf.mxu0
    %v2781 = vadd.f32 %v2616, %v2780
    %v2782 = vpop.f32.mrf.mxu0
    %v2783 = vadd.f32 %v2620, %v2782
    %v2784 = vpop.f32.mrf.mxu0
    %v2785 = vpop.f32.mrf.mxu0
    %2786 = vdwg.mxu0
    %v2787 = vmax.f32 %v2781, 0.0
    %v2788 = vmax.f32 %v2783, 0.0
    %v2789 = vpack.c.bf16 %v2787, %v2787
    %v2790 = vpack.c.bf16 %v2788, %v2788
    %v2791 = vld [vmem:[#allocation13] sm:$0xff]
    %v2792 = vld [vmem:[#allocation13 + $0x8] sm:$0xff]
    %v2793 = vld [vmem:[#allocation13 + $0x10] sm:$0xff]
    %v2794 = vld [vmem:[#allocation13 + $0x18] sm:$0xff]
    %v2795 = vld [vmem:[#allocation13 + $0x20] sm:$0xff]
    %v2796 = vld [vmem:[#allocation13 + $0x28] sm:$0xff]
    %v2797 = vld [vmem:[#allocation13 + $0x30] sm:$0xff]
    %v2798 = vld [vmem:[#allocation13 + $0x38] sm:$0xff]
    %v2799 = vld [vmem:[#allocation13 + $0x40] sm:$0xff]
    %v2800 = vld [vmem:[#allocation13 + $0x48] sm:$0xff]
    %v2801 = vld [vmem:[#allocation13 + $0x50] sm:$0xff]
    %v2802 = vld [vmem:[#allocation13 + $0x58] sm:$0xff]
    %v2803 = vld [vmem:[#allocation13 + $0x60] sm:$0xff]
    %v2804 = vld [vmem:[#allocation13 + $0x68] sm:$0xff]
    %v2805 = vld [vmem:[#allocation13 + $0x70] sm:$0xff]
    %v2806 = vld [vmem:[#allocation13 + $0x78] sm:$0xff]
    %v2807 = vld [vmem:[#allocation13 + $0x80] sm:$0xff]
    %v2808 = vld [vmem:[#allocation13 + $0x88] sm:$0xff]
    %v2809 = vld [vmem:[#allocation13 + $0x90] sm:$0xff]
    %v2810 = vld [vmem:[#allocation13 + $0x98] sm:$0xff]
    %v2811 = vld [vmem:[#allocation13 + $0xa0] sm:$0xff]
    %v2812 = vld [vmem:[#allocation13 + $0xa8] sm:$0xff]
    %v2813 = vld [vmem:[#allocation13 + $0xb0] sm:$0xff]
    %v2814 = vld [vmem:[#allocation13 + $0xb8] sm:$0xff]
    %s2815 = scalar_lea.vmem %s15, 65
    %v2816 = vld [vmem:[%s2815] ss:$8 sm:$0x3]
    %v2818 = vlaneseq
    %v2819 = vshrl.u32 %v2818, 7
    %v2820 = vsub.s32 0, %v2819
    %v2821 = vrot.slane %v2816, %v2820
    %v2822 = vlaneseq
    %v2823 = vshrl.u32 %v2822, 7
    %v2824 = vsub.s32 1, %v2823
    %v2825 = vrot.slane %v2816, %v2824
    %v2852 = vunpack.c.l.b16 %v2791
    %v2853 = vunpack.c.h.b16 %v2791
    %v2854 = vunpack.c.l.b16 %v2792
    %v2855 = vunpack.c.h.b16 %v2792
    %v2856 = vunpack.c.l.b16 %v2793
    %v2857 = vunpack.c.h.b16 %v2793
    %v2858 = vunpack.c.l.b16 %v2794
    %v2859 = vunpack.c.h.b16 %v2794
    %v2860 = vunpack.c.l.b16 %v2795
    %v2861 = vunpack.c.h.b16 %v2795
    %v2862 = vunpack.c.l.b16 %v2796
    %v2863 = vunpack.c.h.b16 %v2796
    %v2864 = vunpack.c.l.b16 %v2797
    %v2865 = vunpack.c.h.b16 %v2797
    %v2866 = vunpack.c.l.b16 %v2798
    %v2867 = vunpack.c.h.b16 %v2798
    %v2868 = vunpack.c.l.b16 %v2799
    %v2869 = vunpack.c.h.b16 %v2799
    %v2870 = vunpack.c.l.b16 %v2800
    %v2871 = vunpack.c.h.b16 %v2800
    %v2872 = vunpack.c.l.b16 %v2801
    %v2873 = vunpack.c.h.b16 %v2801
    %v2874 = vunpack.c.l.b16 %v2802
    %v2875 = vunpack.c.h.b16 %v2802
    %v2876 = vunpack.c.l.b16 %v2803
    %v2877 = vunpack.c.h.b16 %v2803
    %v2878 = vunpack.c.l.b16 %v2804
    %v2879 = vunpack.c.h.b16 %v2804
    %v2880 = vunpack.c.l.b16 %v2805
    %v2881 = vunpack.c.h.b16 %v2805
    %v2882 = vunpack.c.l.b16 %v2806
    %v2883 = vunpack.c.h.b16 %v2806
    %v2884 = vunpack.c.l.b16 %v2807
    %v2885 = vunpack.c.h.b16 %v2807
    %v2886 = vunpack.c.l.b16 %v2808
    %v2887 = vunpack.c.h.b16 %v2808
    %v2888 = vunpack.c.l.b16 %v2809
    %v2889 = vunpack.c.h.b16 %v2809
    %v2890 = vunpack.c.l.b16 %v2810
    %v2891 = vunpack.c.h.b16 %v2810
    %v2892 = vunpack.c.l.b16 %v2811
    %v2893 = vunpack.c.h.b16 %v2811
    %v2894 = vunpack.c.l.b16 %v2812
    %v2895 = vunpack.c.h.b16 %v2812
    %v2896 = vunpack.c.l.b16 %v2813
    %v2897 = vunpack.c.h.b16 %v2813
    %v2898 = vunpack.c.l.b16 %v2814
    %v2899 = vunpack.c.h.b16 %v2814
    %v2900 = vpack.c.b16 %v2854, %v2852
    %v2901 = vpack.c.b16 %v2855, %v2853
    %v2902 = vpack.c.b16 %v2858, %v2856
    %v2903 = vpack.c.b16 %v2859, %v2857
    %v2904 = vpack.c.b16 %v2862, %v2860
    %v2905 = vpack.c.b16 %v2863, %v2861
    %v2906 = vpack.c.b16 %v2866, %v2864
    %v2907 = vpack.c.b16 %v2867, %v2865
    %v2908 = vpack.c.b16 %v2870, %v2868
    %v2909 = vpack.c.b16 %v2871, %v2869
    %v2910 = vpack.c.b16 %v2874, %v2872
    %v2911 = vpack.c.b16 %v2875, %v2873
    %v2912 = vpack.c.b16 %v2878, %v2876
    %v2913 = vpack.c.b16 %v2879, %v2877
    %v2914 = vpack.c.b16 %v2882, %v2880
    %v2915 = vpack.c.b16 %v2883, %v2881
    %v2916 = vpack.c.b16 %v2886, %v2884
    %v2917 = vpack.c.b16 %v2887, %v2885
    %v2918 = vpack.c.b16 %v2890, %v2888
    %v2919 = vpack.c.b16 %v2891, %v2889
    %v2920 = vpack.c.b16 %v2894, %v2892
    %v2921 = vpack.c.b16 %v2895, %v2893
    %v2922 = vpack.c.b16 %v2898, %v2896
    %v2923 = vpack.c.b16 %v2899, %v2897
    %v2949 = vsel %vm1579, %v2790, 0
    %2951 = vmatprep.subr.bf16.mxu0 %v2915
    %2952 = vmatpush1.bf16.msra.mxu0 %v2914
    %2953 = vmatprep.subr.bf16.mxu0 %v2913
    %2954 = vmatpush1.bf16.msra.mxu0 %v2912
    %2955 = vmatprep.subr.bf16.mxu0 %v2911
    %2956 = vmatpush1.bf16.msra.mxu0 %v2910
    %2957 = vmatprep.subr.bf16.mxu0 %v2909
    %2958 = vmatpush1.bf16.msra.mxu0 %v2908
    %2959 = vmatprep.subr.bf16.mxu0 %v2907
    %2960 = vmatpush1.bf16.msra.mxu0 %v2906
    %2961 = vmatprep.subr.bf16.mxu0 %v2905
    %2962 = vmatpush1.bf16.msra.mxu0 %v2904
    %2963 = vmatprep.subr.bf16.mxu0 %v2903
    %2964 = vmatpush1.bf16.msra.mxu0 %v2902
    %2965 = vmatprep.subr.bf16.mxu0 %v2901
    %2966 = vmatpush1.bf16.msra.mxu0 %v2900
    %2967 = vmatprep.subr.bf16.mxu0 0
    %2968 = vmatpush2.bf16.msra.mxu0 0
    %2969 = vmatprep.subr.bf16.mxu0 0
    %2970 = vmatpush2.bf16.msra.mxu0 0
    %2971 = vmatprep.subr.bf16.mxu0 0
    %2972 = vmatpush2.bf16.msra.mxu0 0
    %2973 = vmatprep.subr.bf16.mxu0 0
    %2974 = vmatpush2.bf16.msra.mxu0 0
    %2975 = vmatprep.subr.bf16.mxu0 %v2923
    %2976 = vmatpush2.bf16.msra.mxu0 %v2922
    %2977 = vmatprep.subr.bf16.mxu0 %v2921
    %2978 = vmatpush2.bf16.msra.mxu0 %v2920
    %2979 = vmatprep.subr.bf16.mxu0 %v2919
    %2980 = vmatpush2.bf16.msra.mxu0 %v2918
    %2981 = vmatprep.subr.bf16.mxu0 %v2917
    %2982 = vmatpush2.bf16.msra.mxu0 %v2916
    %2983 = vmatprep.mubr.bf16.mxu0 %v2949
    %2984 = vmatmul.mubr.bf16.gmra.mxu0 %v2789
    %v2985 = vpop.f32.mrf.mxu0
    %v2986 = vadd.f32 %v2821, %v2985
    %v2987 = vpop.f32.mrf.mxu0
    %v2988 = vadd.f32 %v2825, %v2987
    %v2989 = vpop.f32.mrf.mxu0
    %v2990 = vpop.f32.mrf.mxu0
    %2991 = vdwg.mxu0
    %v2992 = vmax.f32 %v2986, 0.0
    %v2993 = vmax.f32 %v2988, 0.0
    %v2994 = vpack.c.bf16 %v2992, %v2992
    %v2995 = vpack.c.bf16 %v2993, %v2993
    %v2996 = vld [vmem:[#allocation14] sm:$0xff]
    %v2997 = vld [vmem:[#allocation14 + $0x8] sm:$0xff]
    %v2998 = vld [vmem:[#allocation14 + $0x10] sm:$0xff]
    %v2999 = vld [vmem:[#allocation14 + $0x18] sm:$0xff]
    %v3000 = vld [vmem:[#allocation14 + $0x20] sm:$0xff]
    %v3001 = vld [vmem:[#allocation14 + $0x28] sm:$0xff]
    %v3002 = vld [vmem:[#allocation14 + $0x30] sm:$0xff]
    %v3003 = vld [vmem:[#allocation14 + $0x38] sm:$0xff]
    %v3004 = vld [vmem:[#allocation14 + $0x40] sm:$0xff]
    %v3005 = vld [vmem:[#allocation14 + $0x48] sm:$0xff]
    %v3006 = vld [vmem:[#allocation14 + $0x50] sm:$0xff]
    %v3007 = vld [vmem:[#allocation14 + $0x58] sm:$0xff]
    %v3008 = vld [vmem:[#allocation14 + $0x60] sm:$0xff]
    %v3009 = vld [vmem:[#allocation14 + $0x68] sm:$0xff]
    %v3010 = vld [vmem:[#allocation14 + $0x70] sm:$0xff]
    %v3011 = vld [vmem:[#allocation14 + $0x78] sm:$0xff]
    %v3012 = vld [vmem:[#allocation14 + $0x80] sm:$0xff]
    %v3013 = vld [vmem:[#allocation14 + $0x88] sm:$0xff]
    %v3014 = vld [vmem:[#allocation14 + $0x90] sm:$0xff]
    %v3015 = vld [vmem:[#allocation14 + $0x98] sm:$0xff]
    %v3016 = vld [vmem:[#allocation14 + $0xa0] sm:$0xff]
    %v3017 = vld [vmem:[#allocation14 + $0xa8] sm:$0xff]
    %v3018 = vld [vmem:[#allocation14 + $0xb0] sm:$0xff]
    %v3019 = vld [vmem:[#allocation14 + $0xb8] sm:$0xff]
    %v3020 = vld [vmem:[#allocation14 + $0xc0] sm:$0xff]
    %v3021 = vld [vmem:[#allocation14 + $0xc8] sm:$0xff]
    %v3022 = vld [vmem:[#allocation14 + $0xd0] sm:$0xff]
    %v3023 = vld [vmem:[#allocation14 + $0xd8] sm:$0xff]
    %v3024 = vld [vmem:[#allocation14 + $0xe0] sm:$0xff]
    %v3025 = vld [vmem:[#allocation14 + $0xe8] sm:$0xff]
    %v3026 = vld [vmem:[#allocation14 + $0xf0] sm:$0xff]
    %v3027 = vld [vmem:[#allocation14 + $0xf8] sm:$0xff]
    %v3028 = vld [vmem:[#allocation14 + $0x100] sm:$0xff]
    %v3029 = vld [vmem:[#allocation14 + $0x108] sm:$0xff]
    %v3030 = vld [vmem:[#allocation14 + $0x110] sm:$0xff]
    %v3031 = vld [vmem:[#allocation14 + $0x118] sm:$0xff]
    %v3032 = vld [vmem:[#allocation14 + $0x120] sm:$0xff]
    %v3033 = vld [vmem:[#allocation14 + $0x128] sm:$0xff]
    %v3034 = vld [vmem:[#allocation14 + $0x130] sm:$0xff]
    %v3035 = vld [vmem:[#allocation14 + $0x138] sm:$0xff]
    %v3036 = vld [vmem:[#allocation14 + $0x140] sm:$0xff]
    %v3037 = vld [vmem:[#allocation14 + $0x148] sm:$0xff]
    %v3038 = vld [vmem:[#allocation14 + $0x150] sm:$0xff]
    %v3039 = vld [vmem:[#allocation14 + $0x158] sm:$0xff]
    %v3040 = vld [vmem:[#allocation14 + $0x160] sm:$0xff]
    %v3041 = vld [vmem:[#allocation14 + $0x168] sm:$0xff]
    %v3042 = vld [vmem:[#allocation14 + $0x170] sm:$0xff]
    %v3043 = vld [vmem:[#allocation14 + $0x178] sm:$0xff]
    %v3044 = vld [vmem:[#allocation14 + $0x180] sm:$0xff]
    %v3045 = vld [vmem:[#allocation14 + $0x188] sm:$0xff]
    %v3046 = vld [vmem:[#allocation14 + $0x190] sm:$0xff]
    %v3047 = vld [vmem:[#allocation14 + $0x198] sm:$0xff]
    %v3048 = vld [vmem:[#allocation14 + $0x1a0] sm:$0xff]
    %v3049 = vld [vmem:[#allocation14 + $0x1a8] sm:$0xff]
    %v3050 = vld [vmem:[#allocation14 + $0x1b0] sm:$0xff]
    %v3051 = vld [vmem:[#allocation14 + $0x1b8] sm:$0xff]
    %v3052 = vld [vmem:[#allocation14 + $0x1c0] sm:$0xff]
    %v3053 = vld [vmem:[#allocation14 + $0x1c8] sm:$0xff]
    %v3054 = vld [vmem:[#allocation14 + $0x1d0] sm:$0xff]
    %v3055 = vld [vmem:[#allocation14 + $0x1d8] sm:$0xff]
    %v3056 = vld [vmem:[#allocation14 + $0x1e0] sm:$0xff]
    %v3057 = vld [vmem:[#allocation14 + $0x1e8] sm:$0xff]
    %v3058 = vld [vmem:[#allocation14 + $0x1f0] sm:$0xff]
    %v3059 = vld [vmem:[#allocation14 + $0x1f8] sm:$0xff]
    %v3060 = vld [vmem:[#allocation14 + $0x200] sm:$0xff]
    %v3061 = vld [vmem:[#allocation14 + $0x208] sm:$0xff]
    %v3062 = vld [vmem:[#allocation14 + $0x210] sm:$0xff]
    %v3063 = vld [vmem:[#allocation14 + $0x218] sm:$0xff]
    %v3064 = vld [vmem:[#allocation14 + $0x220] sm:$0xff]
    %v3065 = vld [vmem:[#allocation14 + $0x228] sm:$0xff]
    %v3066 = vld [vmem:[#allocation14 + $0x230] sm:$0xff]
    %v3067 = vld [vmem:[#allocation14 + $0x238] sm:$0xff]
    %v3068 = vld [vmem:[#allocation14 + $0x240] sm:$0xff]
    %v3069 = vld [vmem:[#allocation14 + $0x248] sm:$0xff]
    %v3070 = vld [vmem:[#allocation14 + $0x250] sm:$0xff]
    %v3071 = vld [vmem:[#allocation14 + $0x258] sm:$0xff]
    %v3072 = vld [vmem:[#allocation14 + $0x260] sm:$0xff]
    %v3073 = vld [vmem:[#allocation14 + $0x268] sm:$0xff]
    %v3074 = vld [vmem:[#allocation14 + $0x270] sm:$0xff]
    %v3075 = vld [vmem:[#allocation14 + $0x278] sm:$0xff]
    %v3076 = vld [vmem:[#allocation14 + $0x280] sm:$0xff]
    %v3077 = vld [vmem:[#allocation14 + $0x288] sm:$0xff]
    %v3078 = vld [vmem:[#allocation14 + $0x290] sm:$0xff]
    %v3079 = vld [vmem:[#allocation14 + $0x298] sm:$0xff]
    %v3080 = vld [vmem:[#allocation14 + $0x2a0] sm:$0xff]
    %v3081 = vld [vmem:[#allocation14 + $0x2a8] sm:$0xff]
    %v3082 = vld [vmem:[#allocation14 + $0x2b0] sm:$0xff]
    %v3083 = vld [vmem:[#allocation14 + $0x2b8] sm:$0xff]
    %v3084 = vld [vmem:[#allocation14 + $0x2c0] sm:$0xff]
    %v3085 = vld [vmem:[#allocation14 + $0x2c8] sm:$0xff]
    %v3086 = vld [vmem:[#allocation14 + $0x2d0] sm:$0xff]
    %v3087 = vld [vmem:[#allocation14 + $0x2d8] sm:$0xff]
    %v3088 = vld [vmem:[#allocation14 + $0x2e0] sm:$0xff]
    %v3089 = vld [vmem:[#allocation14 + $0x2e8] sm:$0xff]
    %v3090 = vld [vmem:[#allocation14 + $0x2f0] sm:$0xff]
    %v3091 = vld [vmem:[#allocation14 + $0x2f8] sm:$0xff]
    %s3092 = scalar_lea.vmem %s15, 66
    %v3093 = vld [vmem:[%s3092] ss:$8 sm:$0xf]
    %v3094 = vld [vmem:[%s3092] ss:$8 sm:$0xf0]
    %v3095 = vor.u32 %v3093, %v3094
    %v3097 = vlaneseq
    %v3098 = vshrl.u32 %v3097, 7
    %v3099 = vsub.s32 0, %v3098
    %v3100 = vrot.slane %v3095, %v3099
    %v3101 = vlaneseq
    %v3102 = vshrl.u32 %v3101, 7
    %v3103 = vsub.s32 1, %v3102
    %v3104 = vrot.slane %v3095, %v3103
    %v3105 = vlaneseq
    %v3106 = vshrl.u32 %v3105, 7
    %v3107 = vsub.s32 2, %v3106
    %v3108 = vrot.slane %v3095, %v3107
    %v3109 = vlaneseq
    %v3110 = vshrl.u32 %v3109, 7
    %v3111 = vsub.s32 3, %v3110
    %v3112 = vrot.slane %v3095, %v3111
    %v3113 = vlaneseq
    %v3114 = vshrl.u32 %v3113, 7
    %v3115 = vsub.s32 4, %v3114
    %v3116 = vrot.slane %v3095, %v3115
    %v3117 = vlaneseq
    %v3118 = vshrl.u32 %v3117, 7
    %v3119 = vsub.s32 5, %v3118
    %v3120 = vrot.slane %v3095, %v3119
    %v3121 = vlaneseq
    %v3122 = vshrl.u32 %v3121, 7
    %v3123 = vsub.s32 6, %v3122
    %v3124 = vrot.slane %v3095, %v3123
    %v3125 = vlaneseq
    %v3126 = vshrl.u32 %v3125, 7
    %v3127 = vsub.s32 7, %v3126
    %v3128 = vrot.slane %v3095, %v3127
    %v3233 = vunpack.c.l.b16 %v2996
    %v3234 = vunpack.c.h.b16 %v2996
    %v3235 = vunpack.c.l.b16 %v2997
    %v3236 = vunpack.c.h.b16 %v2997
    %v3237 = vunpack.c.l.b16 %v2998
    %v3238 = vunpack.c.h.b16 %v2998
    %v3239 = vunpack.c.l.b16 %v2999
    %v3240 = vunpack.c.h.b16 %v2999
    %v3241 = vunpack.c.l.b16 %v3000
    %v3242 = vunpack.c.h.b16 %v3000
    %v3243 = vunpack.c.l.b16 %v3001
    %v3244 = vunpack.c.h.b16 %v3001
    %v3245 = vunpack.c.l.b16 %v3002
    %v3246 = vunpack.c.h.b16 %v3002
    %v3247 = vunpack.c.l.b16 %v3003
    %v3248 = vunpack.c.h.b16 %v3003
    %v3249 = vunpack.c.l.b16 %v3004
    %v3250 = vunpack.c.h.b16 %v3004
    %v3251 = vunpack.c.l.b16 %v3005
    %v3252 = vunpack.c.h.b16 %v3005
    %v3253 = vunpack.c.l.b16 %v3006
    %v3254 = vunpack.c.h.b16 %v3006
    %v3255 = vunpack.c.l.b16 %v3007
    %v3256 = vunpack.c.h.b16 %v3007
    %v3257 = vunpack.c.l.b16 %v3008
    %v3258 = vunpack.c.h.b16 %v3008
    %v3259 = vunpack.c.l.b16 %v3009
    %v3260 = vunpack.c.h.b16 %v3009
    %v3261 = vunpack.c.l.b16 %v3010
    %v3262 = vunpack.c.h.b16 %v3010
    %v3263 = vunpack.c.l.b16 %v3011
    %v3264 = vunpack.c.h.b16 %v3011
    %v3265 = vunpack.c.l.b16 %v3012
    %v3266 = vunpack.c.h.b16 %v3012
    %v3267 = vunpack.c.l.b16 %v3013
    %v3268 = vunpack.c.h.b16 %v3013
    %v3269 = vunpack.c.l.b16 %v3014
    %v3270 = vunpack.c.h.b16 %v3014
    %v3271 = vunpack.c.l.b16 %v3015
    %v3272 = vunpack.c.h.b16 %v3015
    %v3273 = vunpack.c.l.b16 %v3016
    %v3274 = vunpack.c.h.b16 %v3016
    %v3275 = vunpack.c.l.b16 %v3017
    %v3276 = vunpack.c.h.b16 %v3017
    %v3277 = vunpack.c.l.b16 %v3018
    %v3278 = vunpack.c.h.b16 %v3018
    %v3279 = vunpack.c.l.b16 %v3019
    %v3280 = vunpack.c.h.b16 %v3019
    %v3281 = vunpack.c.l.b16 %v3020
    %v3282 = vunpack.c.h.b16 %v3020
    %v3283 = vunpack.c.l.b16 %v3021
    %v3284 = vunpack.c.h.b16 %v3021
    %v3285 = vunpack.c.l.b16 %v3022
    %v3286 = vunpack.c.h.b16 %v3022
    %v3287 = vunpack.c.l.b16 %v3023
    %v3288 = vunpack.c.h.b16 %v3023
    %v3289 = vunpack.c.l.b16 %v3024
    %v3290 = vunpack.c.h.b16 %v3024
    %v3291 = vunpack.c.l.b16 %v3025
    %v3292 = vunpack.c.h.b16 %v3025
    %v3293 = vunpack.c.l.b16 %v3026
    %v3294 = vunpack.c.h.b16 %v3026
    %v3295 = vunpack.c.l.b16 %v3027
    %v3296 = vunpack.c.h.b16 %v3027
    %v3297 = vunpack.c.l.b16 %v3028
    %v3298 = vunpack.c.h.b16 %v3028
    %v3299 = vunpack.c.l.b16 %v3029
    %v3300 = vunpack.c.h.b16 %v3029
    %v3301 = vunpack.c.l.b16 %v3030
    %v3302 = vunpack.c.h.b16 %v3030
    %v3303 = vunpack.c.l.b16 %v3031
    %v3304 = vunpack.c.h.b16 %v3031
    %v3305 = vunpack.c.l.b16 %v3032
    %v3306 = vunpack.c.h.b16 %v3032
    %v3307 = vunpack.c.l.b16 %v3033
    %v3308 = vunpack.c.h.b16 %v3033
    %v3309 = vunpack.c.l.b16 %v3034
    %v3310 = vunpack.c.h.b16 %v3034
    %v3311 = vunpack.c.l.b16 %v3035
    %v3312 = vunpack.c.h.b16 %v3035
    %v3313 = vunpack.c.l.b16 %v3036
    %v3314 = vunpack.c.h.b16 %v3036
    %v3315 = vunpack.c.l.b16 %v3037
    %v3316 = vunpack.c.h.b16 %v3037
    %v3317 = vunpack.c.l.b16 %v3038
    %v3318 = vunpack.c.h.b16 %v3038
    %v3319 = vunpack.c.l.b16 %v3039
    %v3320 = vunpack.c.h.b16 %v3039
    %v3321 = vunpack.c.l.b16 %v3040
    %v3322 = vunpack.c.h.b16 %v3040
    %v3323 = vunpack.c.l.b16 %v3041
    %v3324 = vunpack.c.h.b16 %v3041
    %v3325 = vunpack.c.l.b16 %v3042
    %v3326 = vunpack.c.h.b16 %v3042
    %v3327 = vunpack.c.l.b16 %v3043
    %v3328 = vunpack.c.h.b16 %v3043
    %v3329 = vunpack.c.l.b16 %v3044
    %v3330 = vunpack.c.h.b16 %v3044
    %v3331 = vunpack.c.l.b16 %v3045
    %v3332 = vunpack.c.h.b16 %v3045
    %v3333 = vunpack.c.l.b16 %v3046
    %v3334 = vunpack.c.h.b16 %v3046
    %v3335 = vunpack.c.l.b16 %v3047
    %v3336 = vunpack.c.h.b16 %v3047
    %v3337 = vunpack.c.l.b16 %v3048
    %v3338 = vunpack.c.h.b16 %v3048
    %v3339 = vunpack.c.l.b16 %v3049
    %v3340 = vunpack.c.h.b16 %v3049
    %v3341 = vunpack.c.l.b16 %v3050
    %v3342 = vunpack.c.h.b16 %v3050
    %v3343 = vunpack.c.l.b16 %v3051
    %v3344 = vunpack.c.h.b16 %v3051
    %v3345 = vunpack.c.l.b16 %v3052
    %v3346 = vunpack.c.h.b16 %v3052
    %v3347 = vunpack.c.l.b16 %v3053
    %v3348 = vunpack.c.h.b16 %v3053
    %v3349 = vunpack.c.l.b16 %v3054
    %v3350 = vunpack.c.h.b16 %v3054
    %v3351 = vunpack.c.l.b16 %v3055
    %v3352 = vunpack.c.h.b16 %v3055
    %v3353 = vunpack.c.l.b16 %v3056
    %v3354 = vunpack.c.h.b16 %v3056
    %v3355 = vunpack.c.l.b16 %v3057
    %v3356 = vunpack.c.h.b16 %v3057
    %v3357 = vunpack.c.l.b16 %v3058
    %v3358 = vunpack.c.h.b16 %v3058
    %v3359 = vunpack.c.l.b16 %v3059
    %v3360 = vunpack.c.h.b16 %v3059
    %v3361 = vunpack.c.l.b16 %v3060
    %v3362 = vunpack.c.h.b16 %v3060
    %v3363 = vunpack.c.l.b16 %v3061
    %v3364 = vunpack.c.h.b16 %v3061
    %v3365 = vunpack.c.l.b16 %v3062
    %v3366 = vunpack.c.h.b16 %v3062
    %v3367 = vunpack.c.l.b16 %v3063
    %v3368 = vunpack.c.h.b16 %v3063
    %v3369 = vunpack.c.l.b16 %v3064
    %v3370 = vunpack.c.h.b16 %v3064
    %v3371 = vunpack.c.l.b16 %v3065
    %v3372 = vunpack.c.h.b16 %v3065
    %v3373 = vunpack.c.l.b16 %v3066
    %v3374 = vunpack.c.h.b16 %v3066
    %v3375 = vunpack.c.l.b16 %v3067
    %v3376 = vunpack.c.h.b16 %v3067
    %v3377 = vunpack.c.l.b16 %v3068
    %v3378 = vunpack.c.h.b16 %v3068
    %v3379 = vunpack.c.l.b16 %v3069
    %v3380 = vunpack.c.h.b16 %v3069
    %v3381 = vunpack.c.l.b16 %v3070
    %v3382 = vunpack.c.h.b16 %v3070
    %v3383 = vunpack.c.l.b16 %v3071
    %v3384 = vunpack.c.h.b16 %v3071
    %v3385 = vunpack.c.l.b16 %v3072
    %v3386 = vunpack.c.h.b16 %v3072
    %v3387 = vunpack.c.l.b16 %v3073
    %v3388 = vunpack.c.h.b16 %v3073
    %v3389 = vunpack.c.l.b16 %v3074
    %v3390 = vunpack.c.h.b16 %v3074
    %v3391 = vunpack.c.l.b16 %v3075
    %v3392 = vunpack.c.h.b16 %v3075
    %v3393 = vunpack.c.l.b16 %v3076
    %v3394 = vunpack.c.h.b16 %v3076
    %v3395 = vunpack.c.l.b16 %v3077
    %v3396 = vunpack.c.h.b16 %v3077
    %v3397 = vunpack.c.l.b16 %v3078
    %v3398 = vunpack.c.h.b16 %v3078
    %v3399 = vunpack.c.l.b16 %v3079
    %v3400 = vunpack.c.h.b16 %v3079
    %v3401 = vunpack.c.l.b16 %v3080
    %v3402 = vunpack.c.h.b16 %v3080
    %v3403 = vunpack.c.l.b16 %v3081
    %v3404 = vunpack.c.h.b16 %v3081
    %v3405 = vunpack.c.l.b16 %v3082
    %v3406 = vunpack.c.h.b16 %v3082
    %v3407 = vunpack.c.l.b16 %v3083
    %v3408 = vunpack.c.h.b16 %v3083
    %v3409 = vunpack.c.l.b16 %v3084
    %v3410 = vunpack.c.h.b16 %v3084
    %v3411 = vunpack.c.l.b16 %v3085
    %v3412 = vunpack.c.h.b16 %v3085
    %v3413 = vunpack.c.l.b16 %v3086
    %v3414 = vunpack.c.h.b16 %v3086
    %v3415 = vunpack.c.l.b16 %v3087
    %v3416 = vunpack.c.h.b16 %v3087
    %v3417 = vunpack.c.l.b16 %v3088
    %v3418 = vunpack.c.h.b16 %v3088
    %v3419 = vunpack.c.l.b16 %v3089
    %v3420 = vunpack.c.h.b16 %v3089
    %v3421 = vunpack.c.l.b16 %v3090
    %v3422 = vunpack.c.h.b16 %v3090
    %v3423 = vunpack.c.l.b16 %v3091
    %v3424 = vunpack.c.h.b16 %v3091
    %v3425 = vpack.c.b16 %v3241, %v3233
    %v3426 = vpack.c.b16 %v3242, %v3234
    %v3427 = vpack.c.b16 %v3243, %v3235
    %v3428 = vpack.c.b16 %v3244, %v3236
    %v3429 = vpack.c.b16 %v3245, %v3237
    %v3430 = vpack.c.b16 %v3246, %v3238
    %v3431 = vpack.c.b16 %v3247, %v3239
    %v3432 = vpack.c.b16 %v3248, %v3240
    %v3433 = vpack.c.b16 %v3257, %v3249
    %v3434 = vpack.c.b16 %v3258, %v3250
    %v3435 = vpack.c.b16 %v3259, %v3251
    %v3436 = vpack.c.b16 %v3260, %v3252
    %v3437 = vpack.c.b16 %v3261, %v3253
    %v3438 = vpack.c.b16 %v3262, %v3254
    %v3439 = vpack.c.b16 %v3263, %v3255
    %v3440 = vpack.c.b16 %v3264, %v3256
    %v3441 = vpack.c.b16 %v3273, %v3265
    %v3442 = vpack.c.b16 %v3274, %v3266
    %v3443 = vpack.c.b16 %v3275, %v3267
    %v3444 = vpack.c.b16 %v3276, %v3268
    %v3445 = vpack.c.b16 %v3277, %v3269
    %v3446 = vpack.c.b16 %v3278, %v3270
    %v3447 = vpack.c.b16 %v3279, %v3271
    %v3448 = vpack.c.b16 %v3280, %v3272
    %v3449 = vpack.c.b16 %v3289, %v3281
    %v3450 = vpack.c.b16 %v3290, %v3282
    %v3451 = vpack.c.b16 %v3291, %v3283
    %v3452 = vpack.c.b16 %v3292, %v3284
    %v3453 = vpack.c.b16 %v3293, %v3285
    %v3454 = vpack.c.b16 %v3294, %v3286
    %v3455 = vpack.c.b16 %v3295, %v3287
    %v3456 = vpack.c.b16 %v3296, %v3288
    %v3457 = vpack.c.b16 %v3305, %v3297
    %v3458 = vpack.c.b16 %v3306, %v3298
    %v3459 = vpack.c.b16 %v3307, %v3299
    %v3460 = vpack.c.b16 %v3308, %v3300
    %v3461 = vpack.c.b16 %v3309, %v3301
    %v3462 = vpack.c.b16 %v3310, %v3302
    %v3463 = vpack.c.b16 %v3311, %v3303
    %v3464 = vpack.c.b16 %v3312, %v3304
    %v3465 = vpack.c.b16 %v3321, %v3313
    %v3466 = vpack.c.b16 %v3322, %v3314
    %v3467 = vpack.c.b16 %v3323, %v3315
    %v3468 = vpack.c.b16 %v3324, %v3316
    %v3469 = vpack.c.b16 %v3325, %v3317
    %v3470 = vpack.c.b16 %v3326, %v3318
    %v3471 = vpack.c.b16 %v3327, %v3319
    %v3472 = vpack.c.b16 %v3328, %v3320
    %v3473 = vpack.c.b16 %v3337, %v3329
    %v3474 = vpack.c.b16 %v3338, %v3330
    %v3475 = vpack.c.b16 %v3339, %v3331
    %v3476 = vpack.c.b16 %v3340, %v3332
    %v3477 = vpack.c.b16 %v3341, %v3333
    %v3478 = vpack.c.b16 %v3342, %v3334
    %v3479 = vpack.c.b16 %v3343, %v3335
    %v3480 = vpack.c.b16 %v3344, %v3336
    %v3481 = vpack.c.b16 %v3353, %v3345
    %v3482 = vpack.c.b16 %v3354, %v3346
    %v3483 = vpack.c.b16 %v3355, %v3347
    %v3484 = vpack.c.b16 %v3356, %v3348
    %v3485 = vpack.c.b16 %v3357, %v3349
    %v3486 = vpack.c.b16 %v3358, %v3350
    %v3487 = vpack.c.b16 %v3359, %v3351
    %v3488 = vpack.c.b16 %v3360, %v3352
    %v3489 = vpack.c.b16 %v3369, %v3361
    %v3490 = vpack.c.b16 %v3370, %v3362
    %v3491 = vpack.c.b16 %v3371, %v3363
    %v3492 = vpack.c.b16 %v3372, %v3364
    %v3493 = vpack.c.b16 %v3373, %v3365
    %v3494 = vpack.c.b16 %v3374, %v3366
    %v3495 = vpack.c.b16 %v3375, %v3367
    %v3496 = vpack.c.b16 %v3376, %v3368
    %v3497 = vpack.c.b16 %v3385, %v3377
    %v3498 = vpack.c.b16 %v3386, %v3378
    %v3499 = vpack.c.b16 %v3387, %v3379
    %v3500 = vpack.c.b16 %v3388, %v3380
    %v3501 = vpack.c.b16 %v3389, %v3381
    %v3502 = vpack.c.b16 %v3390, %v3382
    %v3503 = vpack.c.b16 %v3391, %v3383
    %v3504 = vpack.c.b16 %v3392, %v3384
    %v3505 = vpack.c.b16 %v3401, %v3393
    %v3506 = vpack.c.b16 %v3402, %v3394
    %v3507 = vpack.c.b16 %v3403, %v3395
    %v3508 = vpack.c.b16 %v3404, %v3396
    %v3509 = vpack.c.b16 %v3405, %v3397
    %v3510 = vpack.c.b16 %v3406, %v3398
    %v3511 = vpack.c.b16 %v3407, %v3399
    %v3512 = vpack.c.b16 %v3408, %v3400
    %v3513 = vpack.c.b16 %v3417, %v3409
    %v3514 = vpack.c.b16 %v3418, %v3410
    %v3515 = vpack.c.b16 %v3419, %v3411
    %v3516 = vpack.c.b16 %v3420, %v3412
    %v3517 = vpack.c.b16 %v3421, %v3413
    %v3518 = vpack.c.b16 %v3422, %v3414
    %v3519 = vpack.c.b16 %v3423, %v3415
    %v3520 = vpack.c.b16 %v3424, %v3416
    %v3618 = vsel %vm1579, %v2995, 0
    %3620 = vmatprep.subr.bf16.mxu0 %v3482
    %3621 = vmatpush1.bf16.msra.mxu0 %v3481
    %3622 = vmatprep.subr.bf16.mxu0 %v3474
    %3623 = vmatpush1.bf16.msra.mxu0 %v3473
    %3624 = vmatprep.subr.bf16.mxu0 %v3466
    %3625 = vmatpush1.bf16.msra.mxu0 %v3465
    %3626 = vmatprep.subr.bf16.mxu0 %v3458
    %3627 = vmatpush1.bf16.msra.mxu0 %v3457
    %3628 = vmatprep.subr.bf16.mxu0 %v3450
    %3629 = vmatpush1.bf16.msra.mxu0 %v3449
    %3630 = vmatprep.subr.bf16.mxu0 %v3442
    %3631 = vmatpush1.bf16.msra.mxu0 %v3441
    %3632 = vmatprep.subr.bf16.mxu0 %v3434
    %3633 = vmatpush1.bf16.msra.mxu0 %v3433
    %3634 = vmatprep.subr.bf16.mxu0 %v3426
    %3635 = vmatpush1.bf16.msra.mxu0 %v3425
    %3636 = vmatprep.subr.bf16.mxu0 0
    %3637 = vmatpush2.bf16.msra.mxu0 0
    %3638 = vmatprep.subr.bf16.mxu0 0
    %3639 = vmatpush2.bf16.msra.mxu0 0
    %3640 = vmatprep.subr.bf16.mxu0 0
    %3641 = vmatpush2.bf16.msra.mxu0 0
    %3642 = vmatprep.subr.bf16.mxu0 0
    %3643 = vmatpush2.bf16.msra.mxu0 0
    %3644 = vmatprep.subr.bf16.mxu0 %v3514
    %3645 = vmatpush2.bf16.msra.mxu0 %v3513
    %3646 = vmatprep.subr.bf16.mxu0 %v3506
    %3647 = vmatpush2.bf16.msra.mxu0 %v3505
    %3648 = vmatprep.subr.bf16.mxu0 %v3498
    %3649 = vmatpush2.bf16.msra.mxu0 %v3497
    %3650 = vmatprep.subr.bf16.mxu0 %v3490
    %3651 = vmatpush2.bf16.msra.mxu0 %v3489
    %3652 = vmatprep.mubr.bf16.mxu0 %v3618
    %3653 = vmatmul.mubr.bf16.gmra.mxu0 %v2994
    %v3654 = vpop.f32.mrf.mxu0
    %v3655 = vadd.f32 %v3100, %v3654
    %v3656 = vpop.f32.mrf.mxu0
    %v3657 = vadd.f32 %v3104, %v3656
    %v3658 = vpop.f32.mrf.mxu0
    %v3659 = vpop.f32.mrf.mxu0
    %3660 = vdwg.mxu0
    %3661 = vmatprep.subr.bf16.mxu0 %v3484
    %3662 = vmatpush1.bf16.msra.mxu0 %v3483
    %3663 = vmatprep.subr.bf16.mxu0 %v3476
    %3664 = vmatpush1.bf16.msra.mxu0 %v3475
    %3665 = vmatprep.subr.bf16.mxu0 %v3468
    %3666 = vmatpush1.bf16.msra.mxu0 %v3467
    %3667 = vmatprep.subr.bf16.mxu0 %v3460
    %3668 = vmatpush1.bf16.msra.mxu0 %v3459
    %3669 = vmatprep.subr.bf16.mxu0 %v3452
    %3670 = vmatpush1.bf16.msra.mxu0 %v3451
    %3671 = vmatprep.subr.bf16.mxu0 %v3444
    %3672 = vmatpush1.bf16.msra.mxu0 %v3443
    %3673 = vmatprep.subr.bf16.mxu0 %v3436
    %3674 = vmatpush1.bf16.msra.mxu0 %v3435
    %3675 = vmatprep.subr.bf16.mxu0 %v3428
    %3676 = vmatpush1.bf16.msra.mxu0 %v3427
    %3677 = vmatprep.subr.bf16.mxu0 0
    %3678 = vmatpush2.bf16.msra.mxu0 0
    %3679 = vmatprep.subr.bf16.mxu0 0
    %3680 = vmatpush2.bf16.msra.mxu0 0
    %3681 = vmatprep.subr.bf16.mxu0 0
    %3682 = vmatpush2.bf16.msra.mxu0 0
    %3683 = vmatprep.subr.bf16.mxu0 0
    %3684 = vmatpush2.bf16.msra.mxu0 0
    %3685 = vmatprep.subr.bf16.mxu0 %v3516
    %3686 = vmatpush2.bf16.msra.mxu0 %v3515
    %3687 = vmatprep.subr.bf16.mxu0 %v3508
    %3688 = vmatpush2.bf16.msra.mxu0 %v3507
    %3689 = vmatprep.subr.bf16.mxu0 %v3500
    %3690 = vmatpush2.bf16.msra.mxu0 %v3499
    %3691 = vmatprep.subr.bf16.mxu0 %v3492
    %3692 = vmatpush2.bf16.msra.mxu0 %v3491
    %3693 = vmatprep.mubr.bf16.mxu0 %v3618
    %3694 = vmatmul.mubr.bf16.gmra.mxu0 %v2994
    %v3695 = vpop.f32.mrf.mxu0
    %v3696 = vadd.f32 %v3108, %v3695
    %v3697 = vpop.f32.mrf.mxu0
    %v3698 = vadd.f32 %v3112, %v3697
    %v3699 = vpop.f32.mrf.mxu0
    %v3700 = vpop.f32.mrf.mxu0
    %3701 = vdwg.mxu0
    %3702 = vmatprep.subr.bf16.mxu0 %v3486
    %3703 = vmatpush1.bf16.msra.mxu0 %v3485
    %3704 = vmatprep.subr.bf16.mxu0 %v3478
    %3705 = vmatpush1.bf16.msra.mxu0 %v3477
    %3706 = vmatprep.subr.bf16.mxu0 %v3470
    %3707 = vmatpush1.bf16.msra.mxu0 %v3469
    %3708 = vmatprep.subr.bf16.mxu0 %v3462
    %3709 = vmatpush1.bf16.msra.mxu0 %v3461
    %3710 = vmatprep.subr.bf16.mxu0 %v3454
    %3711 = vmatpush1.bf16.msra.mxu0 %v3453
    %3712 = vmatprep.subr.bf16.mxu0 %v3446
    %3713 = vmatpush1.bf16.msra.mxu0 %v3445
    %3714 = vmatprep.subr.bf16.mxu0 %v3438
    %3715 = vmatpush1.bf16.msra.mxu0 %v3437
    %3716 = vmatprep.subr.bf16.mxu0 %v3430
    %3717 = vmatpush1.bf16.msra.mxu0 %v3429
    %3718 = vmatprep.subr.bf16.mxu0 0
    %3719 = vmatpush2.bf16.msra.mxu0 0
    %3720 = vmatprep.subr.bf16.mxu0 0
    %3721 = vmatpush2.bf16.msra.mxu0 0
    %3722 = vmatprep.subr.bf16.mxu0 0
    %3723 = vmatpush2.bf16.msra.mxu0 0
    %3724 = vmatprep.subr.bf16.mxu0 0
    %3725 = vmatpush2.bf16.msra.mxu0 0
    %3726 = vmatprep.subr.bf16.mxu0 %v3518
    %3727 = vmatpush2.bf16.msra.mxu0 %v3517
    %3728 = vmatprep.subr.bf16.mxu0 %v3510
    %3729 = vmatpush2.bf16.msra.mxu0 %v3509
    %3730 = vmatprep.subr.bf16.mxu0 %v3502
    %3731 = vmatpush2.bf16.msra.mxu0 %v3501
    %3732 = vmatprep.subr.bf16.mxu0 %v3494
    %3733 = vmatpush2.bf16.msra.mxu0 %v3493
    %3734 = vmatprep.mubr.bf16.mxu0 %v3618
    %3735 = vmatmul.mubr.bf16.gmra.mxu0 %v2994
    %v3736 = vpop.f32.mrf.mxu0
    %v3737 = vadd.f32 %v3116, %v3736
    %v3738 = vpop.f32.mrf.mxu0
    %v3739 = vadd.f32 %v3120, %v3738
    %v3740 = vpop.f32.mrf.mxu0
    %v3741 = vpop.f32.mrf.mxu0
    %3742 = vdwg.mxu0
    %3743 = vmatprep.subr.bf16.mxu0 %v3488
    %3744 = vmatpush1.bf16.msra.mxu0 %v3487
    %3745 = vmatprep.subr.bf16.mxu0 %v3480
    %3746 = vmatpush1.bf16.msra.mxu0 %v3479
    %3747 = vmatprep.subr.bf16.mxu0 %v3472
    %3748 = vmatpush1.bf16.msra.mxu0 %v3471
    %3749 = vmatprep.subr.bf16.mxu0 %v3464
    %3750 = vmatpush1.bf16.msra.mxu0 %v3463
    %3751 = vmatprep.subr.bf16.mxu0 %v3456
    %3752 = vmatpush1.bf16.msra.mxu0 %v3455
    %3753 = vmatprep.subr.bf16.mxu0 %v3448
    %3754 = vmatpush1.bf16.msra.mxu0 %v3447
    %3755 = vmatprep.subr.bf16.mxu0 %v3440
    %3756 = vmatpush1.bf16.msra.mxu0 %v3439
    %3757 = vmatprep.subr.bf16.mxu0 %v3432
    %3758 = vmatpush1.bf16.msra.mxu0 %v3431
    %3759 = vmatprep.subr.bf16.mxu0 0
    %3760 = vmatpush2.bf16.msra.mxu0 0
    %3761 = vmatprep.subr.bf16.mxu0 0
    %3762 = vmatpush2.bf16.msra.mxu0 0
    %3763 = vmatprep.subr.bf16.mxu0 0
    %3764 = vmatpush2.bf16.msra.mxu0 0
    %3765 = vmatprep.subr.bf16.mxu0 0
    %3766 = vmatpush2.bf16.msra.mxu0 0
    %3767 = vmatprep.subr.bf16.mxu0 %v3520
    %3768 = vmatpush2.bf16.msra.mxu0 %v3519
    %3769 = vmatprep.subr.bf16.mxu0 %v3512
    %3770 = vmatpush2.bf16.msra.mxu0 %v3511
    %3771 = vmatprep.subr.bf16.mxu0 %v3504
    %3772 = vmatpush2.bf16.msra.mxu0 %v3503
    %3773 = vmatprep.subr.bf16.mxu0 %v3496
    %3774 = vmatpush2.bf16.msra.mxu0 %v3495
    %3775 = vmatprep.mubr.bf16.mxu0 %v3618
    %3776 = vmatmul.mubr.bf16.gmra.mxu0 %v2994
    %v3777 = vpop.f32.mrf.mxu0
    %v3778 = vadd.f32 %v3124, %v3777
    %v3779 = vpop.f32.mrf.mxu0
    %v3780 = vadd.f32 %v3128, %v3779
    %v3781 = vpop.f32.mrf.mxu0
    %v3782 = vpop.f32.mrf.mxu0
    %3783 = vdwg.mxu0
    %vm3784 = vcmp.gt.f32.partialorder %v3655, 0.0
    %vm3785 = vcmp.gt.f32.partialorder %v3657, 0.0
    %vm3786 = vcmp.gt.f32.partialorder %v3696, 0.0
    %vm3787 = vcmp.gt.f32.partialorder %v3698, 0.0
    %vm3788 = vcmp.gt.f32.partialorder %v3737, 0.0
    %vm3789 = vcmp.gt.f32.partialorder %v3739, 0.0
    %vm3790 = vcmp.gt.f32.partialorder %v3778, 0.0
    %vm3791 = vcmp.gt.f32.partialorder %v3780, 0.0
    %v3792 = vmin.f32 %v3655, 0.0
    %v3793 = vmin.f32 %v3657, 0.0
    %v3794 = vmin.f32 %v3696, 0.0
    %v3795 = vmin.f32 %v3698, 0.0
    %v3796 = vmin.f32 %v3737, 0.0
    %v3797 = vmin.f32 %v3739, 0.0
    %v3798 = vmin.f32 %v3778, 0.0
    %v3799 = vmin.f32 %v3780, 0.0
    %v3800 = vmul.f32 %v3792, 1.442695
    %v3801 = vpow.pop %v3800
    %v3802 = vmul.f32 %v3793, 1.442695
    %v3803 = vpow.pop %v3802
    %v3804 = vmul.f32 %v3794, 1.442695
    %v3805 = vpow.pop %v3804
    %v3806 = vmul.f32 %v3795, 1.442695
    %v3807 = vpow.pop %v3806
    %v3808 = vmul.f32 %v3796, 1.442695
    %v3809 = vpow.pop %v3808
    %v3810 = vmul.f32 %v3797, 1.442695
    %v3811 = vpow.pop %v3810
    %v3812 = vmul.f32 %v3798, 1.442695
    %v3813 = vpow.pop %v3812
    %v3814 = vmul.f32 %v3799, 1.442695
    %v3815 = vpow.pop %v3814
    %v3816 = vsub.f32 %v3801, 1.0
    %v3817 = vsub.f32 %v3803, 1.0
    %v3818 = vsub.f32 %v3805, 1.0
    %v3819 = vsub.f32 %v3807, 1.0
    %v3820 = vsub.f32 %v3809, 1.0
    %v3821 = vsub.f32 %v3811, 1.0
    %v3822 = vsub.f32 %v3813, 1.0
    %v3823 = vsub.f32 %v3815, 1.0
    %v3824 = vmul.f32 %v3816, 1.6732632
    %v3825 = vmul.f32 %v3817, 1.6732632
    %v3826 = vmul.f32 %v3818, 1.6732632
    %v3827 = vmul.f32 %v3819, 1.6732632
    %v3828 = vmul.f32 %v3820, 1.6732632
    %v3829 = vmul.f32 %v3821, 1.6732632
    %v3830 = vmul.f32 %v3822, 1.6732632
    %v3831 = vmul.f32 %v3823, 1.6732632
    %v3832 = vsel %vm3784, %v3655, %v3824
    %v3833 = vsel %vm3785, %v3657, %v3825
    %v3834 = vsel %vm3786, %v3696, %v3826
    %v3835 = vsel %vm3787, %v3698, %v3827
    %v3836 = vsel %vm3788, %v3737, %v3828
    %v3837 = vsel %vm3789, %v3739, %v3829
    %v3838 = vsel %vm3790, %v3778, %v3830
    %v3839 = vsel %vm3791, %v3780, %v3831
    %v3840 = vmul.f32 %v3832, 1.050701
    %v3841 = vmul.f32 %v3833, 1.050701
    %v3842 = vmul.f32 %v3834, 1.050701
    %v3843 = vmul.f32 %v3835, 1.050701
    %v3844 = vmul.f32 %v3836, 1.050701
    %v3845 = vmul.f32 %v3837, 1.050701
    %v3846 = vmul.f32 %v3838, 1.050701
    %v3847 = vmul.f32 %v3839, 1.050701
    %v3848 = vpack.c.bf16 %v3840, %v3840
    %v3849 = vpack.c.bf16 %v3841, %v3841
    %v3850 = vpack.c.bf16 %v3842, %v3842
    %v3851 = vpack.c.bf16 %v3843, %v3843
    %v3852 = vpack.c.bf16 %v3844, %v3844
    %v3853 = vpack.c.bf16 %v3845, %v3845
    %v3854 = vpack.c.bf16 %v3846, %v3846
    %v3855 = vpack.c.bf16 %v3847, %v3847
    %v3856 = vld [vmem:[#allocation16] sm:$0xf]
    %v3857 = vld [vmem:[#allocation16 + $0x4] sm:$0xf]
    %v3858 = vld [vmem:[#allocation16 + $0x8] sm:$0xf]
    %v3859 = vld [vmem:[#allocation16 + $0xc] sm:$0xf]
    %v3860 = vld [vmem:[#allocation16 + $0x10] sm:$0xf]
    %v3861 = vld [vmem:[#allocation16 + $0x14] sm:$0xf]
    %v3862 = vld [vmem:[#allocation16 + $0x18] sm:$0xf]
    %v3863 = vld [vmem:[#allocation16 + $0x1c] sm:$0xf]
    %v3864 = vld [vmem:[#allocation16 + $0x20] sm:$0xf]
    %v3865 = vld [vmem:[#allocation16 + $0x24] sm:$0xf]
    %v3866 = vld [vmem:[#allocation16 + $0x28] sm:$0xf]
    %v3867 = vld [vmem:[#allocation16 + $0x2c] sm:$0xf]
    %v3868 = vld [vmem:[#allocation16 + $0x30] sm:$0xf]
    %v3869 = vld [vmem:[#allocation16 + $0x34] sm:$0xf]
    %v3870 = vld [vmem:[#allocation16 + $0x38] sm:$0xf]
    %v3871 = vld [vmem:[#allocation16 + $0x3c] sm:$0xf]
    %v3872 = vld [vmem:[#allocation16 + $0x40] sm:$0xf]
    %v3873 = vld [vmem:[#allocation16 + $0x44] sm:$0xf]
    %v3874 = vld [vmem:[#allocation16 + $0x48] sm:$0xf]
    %v3875 = vld [vmem:[#allocation16 + $0x4c] sm:$0xf]
    %v3876 = vld [vmem:[#allocation16 + $0x50] sm:$0xf]
    %v3877 = vld [vmem:[#allocation16 + $0x54] sm:$0xf]
    %v3878 = vld [vmem:[#allocation16 + $0x58] sm:$0xf]
    %v3879 = vld [vmem:[#allocation16 + $0x5c] sm:$0xf]
    %v3880 = vld [vmem:[#allocation16 + $0x60] sm:$0xf]
    %v3881 = vld [vmem:[#allocation16 + $0x64] sm:$0xf]
    %v3882 = vld [vmem:[#allocation16 + $0x68] sm:$0xf]
    %v3883 = vld [vmem:[#allocation16 + $0x6c] sm:$0xf]
    %v3884 = vld [vmem:[#allocation16 + $0x70] sm:$0xf]
    %v3885 = vld [vmem:[#allocation16 + $0x74] sm:$0xf]
    %v3886 = vld [vmem:[#allocation16 + $0x78] sm:$0xf]
    %v3887 = vld [vmem:[#allocation16 + $0x7c] sm:$0xf]
    %v3888 = vld [vmem:[#allocation16 + $0x80] sm:$0xf]
    %v3889 = vld [vmem:[#allocation16 + $0x84] sm:$0xf]
    %v3890 = vld [vmem:[#allocation16 + $0x88] sm:$0xf]
    %v3891 = vld [vmem:[#allocation16 + $0x8c] sm:$0xf]
    %v3892 = vld [vmem:[#allocation16 + $0x90] sm:$0xf]
    %v3893 = vld [vmem:[#allocation16 + $0x94] sm:$0xf]
    %v3894 = vld [vmem:[#allocation16 + $0x98] sm:$0xf]
    %v3895 = vld [vmem:[#allocation16 + $0x9c] sm:$0xf]
    %v3896 = vld [vmem:[#allocation16 + $0xa0] sm:$0xf]
    %v3897 = vld [vmem:[#allocation16 + $0xa4] sm:$0xf]
    %v3898 = vld [vmem:[#allocation16 + $0xa8] sm:$0xf]
    %v3899 = vld [vmem:[#allocation16 + $0xac] sm:$0xf]
    %v3900 = vld [vmem:[#allocation16 + $0xb0] sm:$0xf]
    %v3901 = vld [vmem:[#allocation16 + $0xb4] sm:$0xf]
    %v3902 = vld [vmem:[#allocation16 + $0xb8] sm:$0xf]
    %v3903 = vld [vmem:[#allocation16 + $0xbc] sm:$0xf]
    %v3904 = vld [vmem:[#allocation16 + $0xc0] sm:$0xf]
    %v3905 = vld [vmem:[#allocation16 + $0xc4] sm:$0xf]
    %v3906 = vld [vmem:[#allocation16 + $0xc8] sm:$0xf]
    %v3907 = vld [vmem:[#allocation16 + $0xcc] sm:$0xf]
    %v3908 = vld [vmem:[#allocation16 + $0xd0] sm:$0xf]
    %v3909 = vld [vmem:[#allocation16 + $0xd4] sm:$0xf]
    %v3910 = vld [vmem:[#allocation16 + $0xd8] sm:$0xf]
    %v3911 = vld [vmem:[#allocation16 + $0xdc] sm:$0xf]
    %v3912 = vld [vmem:[#allocation16 + $0xe0] sm:$0xf]
    %v3913 = vld [vmem:[#allocation16 + $0xe4] sm:$0xf]
    %v3914 = vld [vmem:[#allocation16 + $0xe8] sm:$0xf]
    %v3915 = vld [vmem:[#allocation16 + $0xec] sm:$0xf]
    %v3916 = vld [vmem:[#allocation16 + $0xf0] sm:$0xf]
    %v3917 = vld [vmem:[#allocation16 + $0xf4] sm:$0xf]
    %v3918 = vld [vmem:[#allocation16 + $0xf8] sm:$0xf]
    %v3919 = vld [vmem:[#allocation16 + $0xfc] sm:$0xf]
    %v3920 = vld [vmem:[#allocation16 + $0x100] sm:$0xf]
    %v3921 = vld [vmem:[#allocation16 + $0x104] sm:$0xf]
    %v3922 = vld [vmem:[#allocation16 + $0x108] sm:$0xf]
    %v3923 = vld [vmem:[#allocation16 + $0x10c] sm:$0xf]
    %v3924 = vld [vmem:[#allocation16 + $0x110] sm:$0xf]
    %v3925 = vld [vmem:[#allocation16 + $0x114] sm:$0xf]
    %v3926 = vld [vmem:[#allocation16 + $0x118] sm:$0xf]
    %v3927 = vld [vmem:[#allocation16 + $0x11c] sm:$0xf]
    %v3928 = vld [vmem:[#allocation16 + $0x120] sm:$0xf]
    %v3929 = vld [vmem:[#allocation16 + $0x124] sm:$0xf]
    %v3930 = vld [vmem:[#allocation16 + $0x128] sm:$0xf]
    %v3931 = vld [vmem:[#allocation16 + $0x12c] sm:$0xf]
    %v3932 = vld [vmem:[#allocation16 + $0x130] sm:$0xf]
    %v3933 = vld [vmem:[#allocation16 + $0x134] sm:$0xf]
    %v3934 = vld [vmem:[#allocation16 + $0x138] sm:$0xf]
    %v3935 = vld [vmem:[#allocation16 + $0x13c] sm:$0xf]
    %v3936 = vld [vmem:[#allocation16 + $0x140] sm:$0xf]
    %v3937 = vld [vmem:[#allocation16 + $0x144] sm:$0xf]
    %v3938 = vld [vmem:[#allocation16 + $0x148] sm:$0xf]
    %v3939 = vld [vmem:[#allocation16 + $0x14c] sm:$0xf]
    %v3940 = vld [vmem:[#allocation16 + $0x150] sm:$0xf]
    %v3941 = vld [vmem:[#allocation16 + $0x154] sm:$0xf]
    %v3942 = vld [vmem:[#allocation16 + $0x158] sm:$0xf]
    %v3943 = vld [vmem:[#allocation16 + $0x15c] sm:$0xf]
    %v3944 = vld [vmem:[#allocation16 + $0x160] sm:$0xf]
    %v3945 = vld [vmem:[#allocation16 + $0x164] sm:$0xf]
    %v3946 = vld [vmem:[#allocation16 + $0x168] sm:$0xf]
    %v3947 = vld [vmem:[#allocation16 + $0x16c] sm:$0xf]
    %v3948 = vld [vmem:[#allocation16 + $0x170] sm:$0xf]
    %v3949 = vld [vmem:[#allocation16 + $0x174] sm:$0xf]
    %v3950 = vld [vmem:[#allocation16 + $0x178] sm:$0xf]
    %v3951 = vld [vmem:[#allocation16 + $0x17c] sm:$0xf]
    %v3952 = vld [vmem:[#allocation16 + $0x180] sm:$0xf]
    %v3953 = vld [vmem:[#allocation16 + $0x184] sm:$0xf]
    %v3954 = vld [vmem:[#allocation16 + $0x188] sm:$0xf]
    %v3955 = vld [vmem:[#allocation16 + $0x18c] sm:$0xf]
    %v3956 = vld [vmem:[#allocation16 + $0x190] sm:$0xf]
    %v3957 = vld [vmem:[#allocation16 + $0x194] sm:$0xf]
    %v3958 = vld [vmem:[#allocation16 + $0x198] sm:$0xf]
    %v3959 = vld [vmem:[#allocation16 + $0x19c] sm:$0xf]
    %v3960 = vld [vmem:[#allocation16 + $0x1a0] sm:$0xf]
    %v3961 = vld [vmem:[#allocation16 + $0x1a4] sm:$0xf]
    %v3962 = vld [vmem:[#allocation16 + $0x1a8] sm:$0xf]
    %v3963 = vld [vmem:[#allocation16 + $0x1ac] sm:$0xf]
    %v3964 = vld [vmem:[#allocation16 + $0x1b0] sm:$0xf]
    %v3965 = vld [vmem:[#allocation16 + $0x1b4] sm:$0xf]
    %v3966 = vld [vmem:[#allocation16 + $0x1b8] sm:$0xf]
    %v3967 = vld [vmem:[#allocation16 + $0x1bc] sm:$0xf]
    %v3968 = vld [vmem:[#allocation16 + $0x1c0] sm:$0xf]
    %v3969 = vld [vmem:[#allocation16 + $0x1c4] sm:$0xf]
    %v3970 = vld [vmem:[#allocation16 + $0x1c8] sm:$0xf]
    %v3971 = vld [vmem:[#allocation16 + $0x1cc] sm:$0xf]
    %v3972 = vld [vmem:[#allocation16 + $0x1d0] sm:$0xf]
    %v3973 = vld [vmem:[#allocation16 + $0x1d4] sm:$0xf]
    %v3974 = vld [vmem:[#allocation16 + $0x1d8] sm:$0xf]
    %v3975 = vld [vmem:[#allocation16 + $0x1dc] sm:$0xf]
    %v3976 = vld [vmem:[#allocation16 + $0x1e0] sm:$0xf]
    %v3977 = vld [vmem:[#allocation16 + $0x1e4] sm:$0xf]
    %v3978 = vld [vmem:[#allocation16 + $0x1e8] sm:$0xf]
    %v3979 = vld [vmem:[#allocation16 + $0x1ec] sm:$0xf]
    %v3980 = vld [vmem:[#allocation16 + $0x1f0] sm:$0xf]
    %v3981 = vld [vmem:[#allocation16 + $0x1f4] sm:$0xf]
    %v3982 = vld [vmem:[#allocation16 + $0x1f8] sm:$0xf]
    %v3983 = vld [vmem:[#allocation16 + $0x1fc] sm:$0xf]
    %v3984 = vld [vmem:[%s15 + $0x43] ss:$0 sm:$0xff]
    %v4113 = vunpack.c.l.b16 %v3856
    %v4114 = vunpack.c.l.b16 %v3857
    %v4115 = vunpack.c.l.b16 %v3858
    %v4116 = vunpack.c.l.b16 %v3859
    %v4117 = vunpack.c.l.b16 %v3860
    %v4118 = vunpack.c.l.b16 %v3861
    %v4119 = vunpack.c.l.b16 %v3862
    %v4120 = vunpack.c.l.b16 %v3863
    %v4121 = vunpack.c.l.b16 %v3864
    %v4122 = vunpack.c.l.b16 %v3865
    %v4123 = vunpack.c.l.b16 %v3866
    %v4124 = vunpack.c.l.b16 %v3867
    %v4125 = vunpack.c.l.b16 %v3868
    %v4126 = vunpack.c.l.b16 %v3869
    %v4127 = vunpack.c.l.b16 %v3870
    %v4128 = vunpack.c.l.b16 %v3871
    %v4129 = vunpack.c.l.b16 %v3872
    %v4130 = vunpack.c.l.b16 %v3873
    %v4131 = vunpack.c.l.b16 %v3874
    %v4132 = vunpack.c.l.b16 %v3875
    %v4133 = vunpack.c.l.b16 %v3876
    %v4134 = vunpack.c.l.b16 %v3877
    %v4135 = vunpack.c.l.b16 %v3878
    %v4136 = vunpack.c.l.b16 %v3879
    %v4137 = vunpack.c.l.b16 %v3880
    %v4138 = vunpack.c.l.b16 %v3881
    %v4139 = vunpack.c.l.b16 %v3882
    %v4140 = vunpack.c.l.b16 %v3883
    %v4141 = vunpack.c.l.b16 %v3884
    %v4142 = vunpack.c.l.b16 %v3885
    %v4143 = vunpack.c.l.b16 %v3886
    %v4144 = vunpack.c.l.b16 %v3887
    %v4145 = vunpack.c.l.b16 %v3888
    %v4146 = vunpack.c.l.b16 %v3889
    %v4147 = vunpack.c.l.b16 %v3890
    %v4148 = vunpack.c.l.b16 %v3891
    %v4149 = vunpack.c.l.b16 %v3892
    %v4150 = vunpack.c.l.b16 %v3893
    %v4151 = vunpack.c.l.b16 %v3894
    %v4152 = vunpack.c.l.b16 %v3895
    %v4153 = vunpack.c.l.b16 %v3896
    %v4154 = vunpack.c.l.b16 %v3897
    %v4155 = vunpack.c.l.b16 %v3898
    %v4156 = vunpack.c.l.b16 %v3899
    %v4157 = vunpack.c.l.b16 %v3900
    %v4158 = vunpack.c.l.b16 %v3901
    %v4159 = vunpack.c.l.b16 %v3902
    %v4160 = vunpack.c.l.b16 %v3903
    %v4161 = vunpack.c.l.b16 %v3904
    %v4162 = vunpack.c.l.b16 %v3905
    %v4163 = vunpack.c.l.b16 %v3906
    %v4164 = vunpack.c.l.b16 %v3907
    %v4165 = vunpack.c.l.b16 %v3908
    %v4166 = vunpack.c.l.b16 %v3909
    %v4167 = vunpack.c.l.b16 %v3910
    %v4168 = vunpack.c.l.b16 %v3911
    %v4169 = vunpack.c.l.b16 %v3912
    %v4170 = vunpack.c.l.b16 %v3913
    %v4171 = vunpack.c.l.b16 %v3914
    %v4172 = vunpack.c.l.b16 %v3915
    %v4173 = vunpack.c.l.b16 %v3916
    %v4174 = vunpack.c.l.b16 %v3917
    %v4175 = vunpack.c.l.b16 %v3918
    %v4176 = vunpack.c.l.b16 %v3919
    %v4177 = vunpack.c.l.b16 %v3920
    %v4178 = vunpack.c.l.b16 %v3921
    %v4179 = vunpack.c.l.b16 %v3922
    %v4180 = vunpack.c.l.b16 %v3923
    %v4181 = vunpack.c.l.b16 %v3924
    %v4182 = vunpack.c.l.b16 %v3925
    %v4183 = vunpack.c.l.b16 %v3926
    %v4184 = vunpack.c.l.b16 %v3927
    %v4185 = vunpack.c.l.b16 %v3928
    %v4186 = vunpack.c.l.b16 %v3929
    %v4187 = vunpack.c.l.b16 %v3930
    %v4188 = vunpack.c.l.b16 %v3931
    %v4189 = vunpack.c.l.b16 %v3932
    %v4190 = vunpack.c.l.b16 %v3933
    %v4191 = vunpack.c.l.b16 %v3934
    %v4192 = vunpack.c.l.b16 %v3935
    %v4193 = vunpack.c.l.b16 %v3936
    %v4194 = vunpack.c.l.b16 %v3937
    %v4195 = vunpack.c.l.b16 %v3938
    %v4196 = vunpack.c.l.b16 %v3939
    %v4197 = vunpack.c.l.b16 %v3940
    %v4198 = vunpack.c.l.b16 %v3941
    %v4199 = vunpack.c.l.b16 %v3942
    %v4200 = vunpack.c.l.b16 %v3943
    %v4201 = vunpack.c.l.b16 %v3944
    %v4202 = vunpack.c.l.b16 %v3945
    %v4203 = vunpack.c.l.b16 %v3946
    %v4204 = vunpack.c.l.b16 %v3947
    %v4205 = vunpack.c.l.b16 %v3948
    %v4206 = vunpack.c.l.b16 %v3949
    %v4207 = vunpack.c.l.b16 %v3950
    %v4208 = vunpack.c.l.b16 %v3951
    %v4209 = vunpack.c.l.b16 %v3952
    %v4210 = vunpack.c.l.b16 %v3953
    %v4211 = vunpack.c.l.b16 %v3954
    %v4212 = vunpack.c.l.b16 %v3955
    %v4213 = vunpack.c.l.b16 %v3956
    %v4214 = vunpack.c.l.b16 %v3957
    %v4215 = vunpack.c.l.b16 %v3958
    %v4216 = vunpack.c.l.b16 %v3959
    %v4217 = vunpack.c.l.b16 %v3960
    %v4218 = vunpack.c.l.b16 %v3961
    %v4219 = vunpack.c.l.b16 %v3962
    %v4220 = vunpack.c.l.b16 %v3963
    %v4221 = vunpack.c.l.b16 %v3964
    %v4222 = vunpack.c.l.b16 %v3965
    %v4223 = vunpack.c.l.b16 %v3966
    %v4224 = vunpack.c.l.b16 %v3967
    %v4225 = vunpack.c.l.b16 %v3968
    %v4226 = vunpack.c.l.b16 %v3969
    %v4227 = vunpack.c.l.b16 %v3970
    %v4228 = vunpack.c.l.b16 %v3971
    %v4229 = vunpack.c.l.b16 %v3972
    %v4230 = vunpack.c.l.b16 %v3973
    %v4231 = vunpack.c.l.b16 %v3974
    %v4232 = vunpack.c.l.b16 %v3975
    %v4233 = vunpack.c.l.b16 %v3976
    %v4234 = vunpack.c.l.b16 %v3977
    %v4235 = vunpack.c.l.b16 %v3978
    %v4236 = vunpack.c.l.b16 %v3979
    %v4237 = vunpack.c.l.b16 %v3980
    %v4238 = vunpack.c.l.b16 %v3981
    %v4239 = vunpack.c.l.b16 %v3982
    %v4240 = vunpack.c.l.b16 %v3983
    %v4241 = vpack.c.b16 %v4114, %v4113
    %v4242 = vpack.c.b16 %v4116, %v4115
    %v4243 = vpack.c.b16 %v4118, %v4117
    %v4244 = vpack.c.b16 %v4120, %v4119
    %v4245 = vpack.c.b16 %v4122, %v4121
    %v4246 = vpack.c.b16 %v4124, %v4123
    %v4247 = vpack.c.b16 %v4126, %v4125
    %v4248 = vpack.c.b16 %v4128, %v4127
    %v4249 = vpack.c.b16 %v4130, %v4129
    %v4250 = vpack.c.b16 %v4132, %v4131
    %v4251 = vpack.c.b16 %v4134, %v4133
    %v4252 = vpack.c.b16 %v4136, %v4135
    %v4253 = vpack.c.b16 %v4138, %v4137
    %v4254 = vpack.c.b16 %v4140, %v4139
    %v4255 = vpack.c.b16 %v4142, %v4141
    %v4256 = vpack.c.b16 %v4144, %v4143
    %v4257 = vpack.c.b16 %v4146, %v4145
    %v4258 = vpack.c.b16 %v4148, %v4147
    %v4259 = vpack.c.b16 %v4150, %v4149
    %v4260 = vpack.c.b16 %v4152, %v4151
    %v4261 = vpack.c.b16 %v4154, %v4153
    %v4262 = vpack.c.b16 %v4156, %v4155
    %v4263 = vpack.c.b16 %v4158, %v4157
    %v4264 = vpack.c.b16 %v4160, %v4159
    %v4265 = vpack.c.b16 %v4162, %v4161
    %v4266 = vpack.c.b16 %v4164, %v4163
    %v4267 = vpack.c.b16 %v4166, %v4165
    %v4268 = vpack.c.b16 %v4168, %v4167
    %v4269 = vpack.c.b16 %v4170, %v4169
    %v4270 = vpack.c.b16 %v4172, %v4171
    %v4271 = vpack.c.b16 %v4174, %v4173
    %v4272 = vpack.c.b16 %v4176, %v4175
    %v4273 = vpack.c.b16 %v4178, %v4177
    %v4274 = vpack.c.b16 %v4180, %v4179
    %v4275 = vpack.c.b16 %v4182, %v4181
    %v4276 = vpack.c.b16 %v4184, %v4183
    %v4277 = vpack.c.b16 %v4186, %v4185
    %v4278 = vpack.c.b16 %v4188, %v4187
    %v4279 = vpack.c.b16 %v4190, %v4189
    %v4280 = vpack.c.b16 %v4192, %v4191
    %v4281 = vpack.c.b16 %v4194, %v4193
    %v4282 = vpack.c.b16 %v4196, %v4195
    %v4283 = vpack.c.b16 %v4198, %v4197
    %v4284 = vpack.c.b16 %v4200, %v4199
    %v4285 = vpack.c.b16 %v4202, %v4201
    %v4286 = vpack.c.b16 %v4204, %v4203
    %v4287 = vpack.c.b16 %v4206, %v4205
    %v4288 = vpack.c.b16 %v4208, %v4207
    %v4289 = vpack.c.b16 %v4210, %v4209
    %v4290 = vpack.c.b16 %v4212, %v4211
    %v4291 = vpack.c.b16 %v4214, %v4213
    %v4292 = vpack.c.b16 %v4216, %v4215
    %v4293 = vpack.c.b16 %v4218, %v4217
    %v4294 = vpack.c.b16 %v4220, %v4219
    %v4295 = vpack.c.b16 %v4222, %v4221
    %v4296 = vpack.c.b16 %v4224, %v4223
    %v4297 = vpack.c.b16 %v4226, %v4225
    %v4298 = vpack.c.b16 %v4228, %v4227
    %v4299 = vpack.c.b16 %v4230, %v4229
    %v4300 = vpack.c.b16 %v4232, %v4231
    %v4301 = vpack.c.b16 %v4234, %v4233
    %v4302 = vpack.c.b16 %v4236, %v4235
    %v4303 = vpack.c.b16 %v4238, %v4237
    %v4304 = vpack.c.b16 %v4240, %v4239
    %4369 = vmatprep.subr.bf16.mxu0 0
    %4370 = vmatpush1.bf16.msra.mxu0 %v4248
    %4371 = vmatprep.subr.bf16.mxu0 0
    %4372 = vmatpush1.bf16.msra.mxu0 %v4247
    %4373 = vmatprep.subr.bf16.mxu0 0
    %4374 = vmatpush1.bf16.msra.mxu0 %v4246
    %4375 = vmatprep.subr.bf16.mxu0 0
    %4376 = vmatpush1.bf16.msra.mxu0 %v4245
    %4377 = vmatprep.subr.bf16.mxu0 0
    %4378 = vmatpush1.bf16.msra.mxu0 %v4244
    %4379 = vmatprep.subr.bf16.mxu0 0
    %4380 = vmatpush1.bf16.msra.mxu0 %v4243
    %4381 = vmatprep.subr.bf16.mxu0 0
    %4382 = vmatpush1.bf16.msra.mxu0 %v4242
    %4383 = vmatprep.subr.bf16.mxu0 0
    %4384 = vmatpush1.bf16.msra.mxu0 %v4241
    %4385 = vmatprep.subr.bf16.mxu0 0
    %4386 = vmatpush2.bf16.msra.mxu0 %v4256
    %4387 = vmatprep.subr.bf16.mxu0 0
    %4388 = vmatpush2.bf16.msra.mxu0 %v4255
    %4389 = vmatprep.subr.bf16.mxu0 0
    %4390 = vmatpush2.bf16.msra.mxu0 %v4254
    %4391 = vmatprep.subr.bf16.mxu0 0
    %4392 = vmatpush2.bf16.msra.mxu0 %v4253
    %4393 = vmatprep.subr.bf16.mxu0 0
    %4394 = vmatpush2.bf16.msra.mxu0 %v4252
    %4395 = vmatprep.subr.bf16.mxu0 0
    %4396 = vmatpush2.bf16.msra.mxu0 %v4251
    %4397 = vmatprep.subr.bf16.mxu0 0
    %4398 = vmatpush2.bf16.msra.mxu0 %v4250
    %4399 = vmatprep.subr.bf16.mxu0 0
    %4400 = vmatpush2.bf16.msra.mxu0 %v4249
    %4401 = vmatprep.mubr.bf16.mxu0 %v3849
    %4402 = vmatmul.mubr.bf16.gmra.mxu0 %v3848
    %v4403 = vpop.f32.mrf.mxu0
    %v4404 = vadd.f32 %v3984, %v4403
    %v4405 = vpop.f32.mrf.mxu0
    %v4406 = vpop.f32.mrf.mxu0
    %v4407 = vpop.f32.mrf.mxu0
    %4408 = vdwg.mxu0
    %4409 = vmatprep.subr.bf16.mxu0 0
    %4410 = vmatpush1.bf16.msra.mxu0 %v4264
    %4411 = vmatprep.subr.bf16.mxu0 0
    %4412 = vmatpush1.bf16.msra.mxu0 %v4263
    %4413 = vmatprep.subr.bf16.mxu0 0
    %4414 = vmatpush1.bf16.msra.mxu0 %v4262
    %4415 = vmatprep.subr.bf16.mxu0 0
    %4416 = vmatpush1.bf16.msra.mxu0 %v4261
    %4417 = vmatprep.subr.bf16.mxu0 0
    %4418 = vmatpush1.bf16.msra.mxu0 %v4260
    %4419 = vmatprep.subr.bf16.mxu0 0
    %4420 = vmatpush1.bf16.msra.mxu0 %v4259
    %4421 = vmatprep.subr.bf16.mxu0 0
    %4422 = vmatpush1.bf16.msra.mxu0 %v4258
    %4423 = vmatprep.subr.bf16.mxu0 0
    %4424 = vmatpush1.bf16.msra.mxu0 %v4257
    %4425 = vmatprep.subr.bf16.mxu0 0
    %4426 = vmatpush2.bf16.msra.mxu0 %v4272
    %4427 = vmatprep.subr.bf16.mxu0 0
    %4428 = vmatpush2.bf16.msra.mxu0 %v4271
    %4429 = vmatprep.subr.bf16.mxu0 0
    %4430 = vmatpush2.bf16.msra.mxu0 %v4270
    %4431 = vmatprep.subr.bf16.mxu0 0
    %4432 = vmatpush2.bf16.msra.mxu0 %v4269
    %4433 = vmatprep.subr.bf16.mxu0 0
    %4434 = vmatpush2.bf16.msra.mxu0 %v4268
    %4435 = vmatprep.subr.bf16.mxu0 0
    %4436 = vmatpush2.bf16.msra.mxu0 %v4267
    %4437 = vmatprep.subr.bf16.mxu0 0
    %4438 = vmatpush2.bf16.msra.mxu0 %v4266
    %4439 = vmatprep.subr.bf16.mxu0 0
    %4440 = vmatpush2.bf16.msra.mxu0 %v4265
    %4441 = vmatprep.mubr.bf16.mxu0 %v3851
    %4442 = vmatmul.mubr.bf16.gmra.mxu0 %v3850
    %v4443 = vpop.f32.mrf.mxu0
    %v4444 = vadd.f32 %v4404, %v4443
    %v4445 = vpop.f32.mrf.mxu0
    %v4446 = vpop.f32.mrf.mxu0
    %v4447 = vpop.f32.mrf.mxu0
    %4448 = vdwg.mxu0
    %4449 = vmatprep.subr.bf16.mxu0 0
    %4450 = vmatpush1.bf16.msra.mxu0 %v4280
    %4451 = vmatprep.subr.bf16.mxu0 0
    %4452 = vmatpush1.bf16.msra.mxu0 %v4279
    %4453 = vmatprep.subr.bf16.mxu0 0
    %4454 = vmatpush1.bf16.msra.mxu0 %v4278
    %4455 = vmatprep.subr.bf16.mxu0 0
    %4456 = vmatpush1.bf16.msra.mxu0 %v4277
    %4457 = vmatprep.subr.bf16.mxu0 0
    %4458 = vmatpush1.bf16.msra.mxu0 %v4276
    %4459 = vmatprep.subr.bf16.mxu0 0
    %4460 = vmatpush1.bf16.msra.mxu0 %v4275
    %4461 = vmatprep.subr.bf16.mxu0 0
    %4462 = vmatpush1.bf16.msra.mxu0 %v4274
    %4463 = vmatprep.subr.bf16.mxu0 0
    %4464 = vmatpush1.bf16.msra.mxu0 %v4273
    %4465 = vmatprep.subr.bf16.mxu0 0
    %4466 = vmatpush2.bf16.msra.mxu0 %v4288
    %4467 = vmatprep.subr.bf16.mxu0 0
    %4468 = vmatpush2.bf16.msra.mxu0 %v4287
    %4469 = vmatprep.subr.bf16.mxu0 0
    %4470 = vmatpush2.bf16.msra.mxu0 %v4286
    %4471 = vmatprep.subr.bf16.mxu0 0
    %4472 = vmatpush2.bf16.msra.mxu0 %v4285
    %4473 = vmatprep.subr.bf16.mxu0 0
    %4474 = vmatpush2.bf16.msra.mxu0 %v4284
    %4475 = vmatprep.subr.bf16.mxu0 0
    %4476 = vmatpush2.bf16.msra.mxu0 %v4283
    %4477 = vmatprep.subr.bf16.mxu0 0
    %4478 = vmatpush2.bf16.msra.mxu0 %v4282
    %4479 = vmatprep.subr.bf16.mxu0 0
    %4480 = vmatpush2.bf16.msra.mxu0 %v4281
    %4481 = vmatprep.mubr.bf16.mxu0 %v3853
    %4482 = vmatmul.mubr.bf16.gmra.mxu0 %v3852
    %v4483 = vpop.f32.mrf.mxu0
    %v4484 = vadd.f32 %v4444, %v4483
    %v4485 = vpop.f32.mrf.mxu0
    %v4486 = vpop.f32.mrf.mxu0
    %v4487 = vpop.f32.mrf.mxu0
    %4488 = vdwg.mxu0
    %4489 = vmatprep.subr.bf16.mxu0 0
    %4490 = vmatpush1.bf16.msra.mxu0 %v4296
    %4491 = vmatprep.subr.bf16.mxu0 0
    %4492 = vmatpush1.bf16.msra.mxu0 %v4295
    %4493 = vmatprep.subr.bf16.mxu0 0
    %4494 = vmatpush1.bf16.msra.mxu0 %v4294
    %4495 = vmatprep.subr.bf16.mxu0 0
    %4496 = vmatpush1.bf16.msra.mxu0 %v4293
    %4497 = vmatprep.subr.bf16.mxu0 0
    %4498 = vmatpush1.bf16.msra.mxu0 %v4292
    %4499 = vmatprep.subr.bf16.mxu0 0
    %4500 = vmatpush1.bf16.msra.mxu0 %v4291
    %4501 = vmatprep.subr.bf16.mxu0 0
    %4502 = vmatpush1.bf16.msra.mxu0 %v4290
    %4503 = vmatprep.subr.bf16.mxu0 0
    %4504 = vmatpush1.bf16.msra.mxu0 %v4289
    %4505 = vmatprep.subr.bf16.mxu0 0
    %4506 = vmatpush2.bf16.msra.mxu0 %v4304
    %4507 = vmatprep.subr.bf16.mxu0 0
    %4508 = vmatpush2.bf16.msra.mxu0 %v4303
    %4509 = vmatprep.subr.bf16.mxu0 0
    %4510 = vmatpush2.bf16.msra.mxu0 %v4302
    %4511 = vmatprep.subr.bf16.mxu0 0
    %4512 = vmatpush2.bf16.msra.mxu0 %v4301
    %4513 = vmatprep.subr.bf16.mxu0 0
    %4514 = vmatpush2.bf16.msra.mxu0 %v4300
    %4515 = vmatprep.subr.bf16.mxu0 0
    %4516 = vmatpush2.bf16.msra.mxu0 %v4299
    %4517 = vmatprep.subr.bf16.mxu0 0
    %4518 = vmatpush2.bf16.msra.mxu0 %v4298
    %4519 = vmatprep.subr.bf16.mxu0 0
    %4520 = vmatpush2.bf16.msra.mxu0 %v4297
    %4521 = vmatprep.mubr.bf16.mxu0 %v3855
    %4522 = vmatmul.mubr.bf16.gmra.mxu0 %v3854
    %v4523 = vpop.f32.mrf.mxu0
    %v4524 = vadd.f32 %v4484, %v4523
    %v4525 = vpop.f32.mrf.mxu0
    %v4526 = vpop.f32.mrf.mxu0
    %v4527 = vpop.f32.mrf.mxu0
    %4528 = vdwg.mxu0
    %vm4529 = vcmp.gt.f32.partialorder %v4524, 0.0
    %v4530 = vmin.f32 %v4524, 0.0
    %v4531 = vmul.f32 %v4530, 1.442695
    %v4532 = vpow.pop %v4531
    %v4533 = vsub.f32 %v4532, 1.0
    %v4534 = vmul.f32 %v4533, 1.6732632
    %v4535 = vsel %vm4529, %v4524, %v4534
    %v4536 = vmul.f32 %v4535, 1.050701
    %v4537 = vpack.c.bf16 %v4536, %v4536
    %v4538 = vld [vmem:[%s14] sm:$0xf]
    %v4539 = vld [vmem:[%s14 + $0x4] sm:$0xf]
    %v4540 = vld [vmem:[%s14 + $0x8] sm:$0xf]
    %v4541 = vld [vmem:[%s14 + $0xc] sm:$0xf]
    %v4542 = vld [vmem:[%s14 + $0x10] sm:$0xf]
    %v4543 = vld [vmem:[%s14 + $0x14] sm:$0xf]
    %v4544 = vld [vmem:[%s14 + $0x18] sm:$0xf]
    %v4545 = vld [vmem:[%s14 + $0x1c] sm:$0xf]
    %v4546 = vld [vmem:[%s14 + $0x20] sm:$0xf]
    %v4547 = vld [vmem:[%s14 + $0x24] sm:$0xf]
    %v4548 = vld [vmem:[%s14 + $0x28] sm:$0xf]
    %v4549 = vld [vmem:[%s14 + $0x2c] sm:$0xf]
    %v4550 = vld [vmem:[%s14 + $0x30] sm:$0xf]
    %v4551 = vld [vmem:[%s14 + $0x34] sm:$0xf]
    %v4552 = vld [vmem:[%s14 + $0x38] sm:$0xf]
    %v4553 = vld [vmem:[%s14 + $0x3c] sm:$0xf]
    %v4554 = vld [vmem:[%s15 + $0x44] ss:$0 sm:$0xff]
    %v4571 = vunpack.c.l.b16 %v4538
    %v4572 = vunpack.c.l.b16 %v4539
    %v4573 = vunpack.c.l.b16 %v4540
    %v4574 = vunpack.c.l.b16 %v4541
    %v4575 = vunpack.c.l.b16 %v4542
    %v4576 = vunpack.c.l.b16 %v4543
    %v4577 = vunpack.c.l.b16 %v4544
    %v4578 = vunpack.c.l.b16 %v4545
    %v4579 = vunpack.c.l.b16 %v4546
    %v4580 = vunpack.c.l.b16 %v4547
    %v4581 = vunpack.c.l.b16 %v4548
    %v4582 = vunpack.c.l.b16 %v4549
    %v4583 = vunpack.c.l.b16 %v4550
    %v4584 = vunpack.c.l.b16 %v4551
    %v4585 = vunpack.c.l.b16 %v4552
    %v4586 = vunpack.c.l.b16 %v4553
    %v4587 = vpack.c.b16 %v4572, %v4571
    %v4588 = vpack.c.b16 %v4574, %v4573
    %v4589 = vpack.c.b16 %v4576, %v4575
    %v4590 = vpack.c.b16 %v4578, %v4577
    %v4591 = vpack.c.b16 %v4580, %v4579
    %v4592 = vpack.c.b16 %v4582, %v4581
    %v4593 = vpack.c.b16 %v4584, %v4583
    %v4594 = vpack.c.b16 %v4586, %v4585
    %4603 = vmatprep.subr.bf16.mxu0 0
    %4604 = vmatpush1.bf16.msra.mxu0 %v4594
    %4605 = vmatprep.subr.bf16.mxu0 0
    %4606 = vmatpush1.bf16.msra.mxu0 %v4593
    %4607 = vmatprep.subr.bf16.mxu0 0
    %4608 = vmatpush1.bf16.msra.mxu0 %v4592
    %4609 = vmatprep.subr.bf16.mxu0 0
    %4610 = vmatpush1.bf16.msra.mxu0 %v4591
    %4611 = vmatprep.subr.bf16.mxu0 0
    %4612 = vmatpush1.bf16.msra.mxu0 %v4590
    %4613 = vmatprep.subr.bf16.mxu0 0
    %4614 = vmatpush1.bf16.msra.mxu0 %v4589
    %4615 = vmatprep.subr.bf16.mxu0 0
    %4616 = vmatpush1.bf16.msra.mxu0 %v4588
    %4617 = vmatprep.subr.bf16.mxu0 0
    %4618 = vmatpush1.bf16.msra.mxu0 %v4587
    %4619 = vmatprep.subr.bf16.mxu0 0
    %4620 = vmatpush2.bf16.msra.mxu0 0
    %4621 = vmatprep.subr.bf16.mxu0 0
    %4622 = vmatpush2.bf16.msra.mxu0 0
    %4623 = vmatprep.subr.bf16.mxu0 0
    %4624 = vmatpush2.bf16.msra.mxu0 0
    %4625 = vmatprep.subr.bf16.mxu0 0
    %4626 = vmatpush2.bf16.msra.mxu0 0
    %4627 = vmatprep.subr.bf16.mxu0 0
    %4628 = vmatpush2.bf16.msra.mxu0 0
    %4629 = vmatprep.subr.bf16.mxu0 0
    %4630 = vmatpush2.bf16.msra.mxu0 0
    %4631 = vmatprep.subr.bf16.mxu0 0
    %4632 = vmatpush2.bf16.msra.mxu0 0
    %4633 = vmatprep.subr.bf16.mxu0 0
    %4634 = vmatpush2.bf16.msra.mxu0 0
    %4635 = vmatprep.mubr.bf16.mxu0 0
    %4636 = vmatmul.mubr.bf16.gmra.mxu0 %v4537
    %v4637 = vpop.f32.mrf.mxu0
    %v4638 = vadd.f32 %v4554, %v4637
    %v4639 = vpop.f32.mrf.mxu0
    %v4640 = vpop.f32.mrf.mxu0
    %v4641 = vpop.f32.mrf.mxu0
    %4642 = vdwg.mxu0
    %vm4643 = vcmask 9216
    %v4644 = vsel %vm4643, %v4638, -inf
    %4645 = vmax.xlane.f32.xlu0 %v4644
    %v4646 = vpop.xlane.xlu0 %4645
    %v4647 = vsub.f32 %v4638, %v4646
    %v4648 = vmul.f32 %v4647, 1.442695
    %v4649 = vpow.pop %v4648
    %v4650 = vsel %vm4643, %v4649, 0.0
    %4651 = vadd.xlane.f32.xlu0 %v4650
    %v4652 = vpop.xlane.xlu0 %4651
    %v4653 = vrcp.pop %v4652
    %v4654 = vmul.f32 %v4649, %v4653
    %4655 = vst.msk [vmem:[#allocation17] sm:$0x3] %vm4643, %v4654
    // Predicated region
    $region102: #{build_model_forward.1} parent=1 // pred_check
      _
    $region103: #{build_model_forward.1} parent=1 // pred_check_branch
      %4657 = sbr.rel (0) target = $region105
    $region104: #{build_model_forward.1} parent=1 // pred_region
      %s4659 = ssub.s32 32, 32
      %4660 = vsyncadd [#allocation4], %s4659
      %s4662 = sshll.u32 [#allocation17], 4
      %s4663 = int_to_ptr.vmem [resolvable:$true] %s4662
      %4665 = dma.vmem_to_hbm [thread:$0]  %s4663, 32, %s16, [#allocation4]
    $region105: #{build_model_forward.1} parent=1 // pred_fallthru
      _
    // Predicated region
    $region106: #{build_model_forward.1} parent=1 // pred_check
      _
    $region107: #{build_model_forward.1} parent=1 // pred_check_branch
      %4667 = sbr.rel (0) target = $region109
    $region108: #{build_model_forward.1} parent=1 // pred_region
      %4668 = dma.done [#allocation4], 32
    $region109: #{build_model_forward.1} parent=1 // pred_fallthru
      _
    %4669 = vsyncpa [#allocation3], 1
    %4670 = vsyncpa [#allocation6], 1
    %4671 = vsyncpa [#allocation9], 1
    %4672 = vsyncpa [#allocation12], 1
    %4673 = vsyncpa [#allocation15], 1
    %4674 = vsyncpa [#allocation4], 1

</llo_original>
